<compile_context>
chip_gen: v5e
topology: v5e:2x2
jax: 0.10.0
libtpu: 0.0.40
codegen_flags: <defaults>
</compile_context>

<pallas_src>
import functools

import jax
import jax.numpy as jnp
from jax.experimental import pallas as pl
from jax.experimental.pallas import tpu as pltpu


# ---------------------------------------------------------------------------
# In-kernel helpers
# ---------------------------------------------------------------------------
def _shift_rows(v, k):
    """result[l, :] = v[l + k, :] for l < R - k, zeros for the tail (static k)."""
    if k == 0:
        return v
    tail = jnp.zeros((k, v.shape[1]), v.dtype)
    return jnp.concatenate([v[k:, :], tail], axis=0)


def _fe_kernel(L, pool_bounds,
               x_ref, w1_ref, ss1_ref, w2_ref, ss2_ref, w3_ref, ss3_ref,
               w4_ref, ss4_ref, w5_ref, ss5_ref, o_ref):
    f32 = jnp.float32

    # ---- layer 1: Conv1d(1, 32, k=7) + BN + ReLU --- pure VPU (Cin = 1) ----
    x = x_ref[0]                                        # (L, 1) f32
    acc = jnp.zeros((L, w1_ref.shape[1]), f32)          # (L, 128)
    for k in range(7):
        acc = acc + _shift_rows(x, k) * w1_ref[k:k + 1, :]
    a1 = jnp.maximum(acc * ss1_ref[0:1, :] + ss1_ref[1:2, :], 0.0)   # (L, 128)

    # ---- fused MaxPool1d(2, 2): exact 0/1 row-selection matmuls (MXU) ----
    rp = L // 2
    row = jax.lax.broadcasted_iota(jnp.int32, (rp, L), 0)
    col = jax.lax.broadcasted_iota(jnp.int32, (rp, L), 1)
    p_even = (col == 2 * row).astype(f32)
    p_odd = (col == 2 * row + 1).astype(f32)
    act = jnp.maximum(
        jnp.dot(p_even, a1, preferred_element_type=f32),
        jnp.dot(p_odd, a1, preferred_element_type=f32))              # (rp, 128)

    # ---- layers 2..5: Conv1d(k=3) + BN + ReLU; bf16 MXU inputs, f32 accum ----
    def conv3_bn_relu(act_in, w_ref, ss_ref):
        rows = act_in.shape[0]
        cout = w_ref.shape[2]
        a = jnp.zeros((rows, cout), f32)
        for k in range(3):
            xs = _shift_rows(act_in, k).astype(jnp.bfloat16)
            a = a + jnp.dot(xs, w_ref[k], preferred_element_type=f32)
        return jnp.maximum(a * ss_ref[0:1, :] + ss_ref[1:2, :], 0.0)

    act = conv3_bn_relu(act, w2_ref, ss2_ref)            # (rp, 128)
    act = conv3_bn_relu(act, w3_ref, ss3_ref)            # (rp, 128)
    act = conv3_bn_relu(act, w4_ref, ss4_ref)            # (rp, 256)
    act = conv3_bn_relu(act, w5_ref, ss5_ref)            # (rp, 512)

    # ---- fused AdaptiveMaxPool1d(4): masked max over the valid rows ----
    ridx = jax.lax.broadcasted_iota(jnp.int32, act.shape, 0)
    pooled = []
    for (s, e) in pool_bounds:
        m = (ridx >= s) & (ridx < e)
        pooled.append(jnp.max(jnp.where(m, act, -jnp.inf), axis=0, keepdims=True))
    o_ref[0] = jnp.concatenate(pooled, axis=0)           # (4, 512) lane-dense


# ---------------------------------------------------------------------------
# Host-side parameter folding / padding (tiny, once per call under jit)
# ---------------------------------------------------------------------------
def _fold_bn_affine(b, gamma, beta, rmean, rvar, eps):
    s = gamma / jnp.sqrt(rvar + eps)
    return s, s * b + (beta - s * rmean)


def _pad_ss(scale, shift, cpad):
    ss = jnp.zeros((2, cpad), jnp.float32)
    ss = ss.at[0, :scale.shape[0]].set(scale.astype(jnp.float32))
    ss = ss.at[1, :shift.shape[0]].set(shift.astype(jnp.float32))
    return ss


def _pad_w3(w, cinp, coutp):
    # (Cout, Cin, K) -> (K, Cin_pad, Cout_pad), zero-padded, bf16 for the MXU.
    cout, cin, k = w.shape
    wt = jnp.transpose(w, (2, 1, 0))                     # (K, Cin, Cout)
    out = jnp.zeros((k, cinp, coutp), jnp.float32)
    out = out.at[:, :cin, :cout].set(wt)
    return out.astype(jnp.bfloat16)


def feature_extractor_forward(x_ncl, params, eps=1e-5):
    """x_ncl: (N, 1, L) like the PyTorch module.  Returns (N, 2048)."""
    N, cin, L = x_ncl.shape
    assert cin == 1, "FeatureExtractor is defined for in_channel=1"
    assert L % 8 == 0 and L >= 24, "demo wrapper expects L % 8 == 0 and L >= 24"

    # static valid-length bookkeeping (buffers stay at L and L // 2 rows)
    l1 = L - 6                 # after Conv1d(k=7)
    lp = l1 // 2               # after MaxPool1d(2, 2)
    l5 = lp - 2 * 4            # after four Conv1d(k=3)
    assert l5 >= 4
    # PyTorch AdaptiveMaxPool1d(4) window bounds: floor(i*l/4) .. ceil((i+1)*l/4)
    bounds = tuple(((i * l5) // 4, -((-(i + 1) * l5) // 4)) for i in range(4))

    x = jnp.transpose(x_ncl, (0, 2, 1)).astype(jnp.float32)    # (N, L, 1)

    p1, p2, p3, p4, p5 = params
    s1, h1 = _fold_bn_affine(p1["b"], p1["gamma"], p1["beta"], p1["rmean"], p1["rvar"], eps)
    s2, h2 = _fold_bn_affine(p2["b"], p2["gamma"], p2["beta"], p2["rmean"], p2["rvar"], eps)
    s3, h3 = _fold_bn_affine(p3["b"], p3["gamma"], p3["beta"], p3["rmean"], p3["rvar"], eps)
    s4, h4 = _fold_bn_affine(p4["b"], p4["gamma"], p4["beta"], p4["rmean"], p4["rvar"], eps)
    s5, h5 = _fold_bn_affine(p5["b"], p5["gamma"], p5["beta"], p5["rmean"], p5["rvar"], eps)

    # layer 1 weights: (32, 1, 7) -> (8, 128) f32 (VPU path, kept f32)
    w1m = jnp.transpose(p1["w"][:, 0, :], (1, 0))              # (7, 32)
    w1p = jnp.zeros((8, 128), jnp.float32).at[:7, :32].set(w1m)
    ss1 = _pad_ss(s1, h1, 128)

    w2p = _pad_w3(p2["w"], 128, 128); ss2 = _pad_ss(s2, h2, 128)
    w3p = _pad_w3(p3["w"], 128, 128); ss3 = _pad_ss(s3, h3, 128)
    w4p = _pad_w3(p4["w"], 128, 256); ss4 = _pad_ss(s4, h4, 256)
    w5p = _pad_w3(p5["w"], 256, 512); ss5 = _pad_ss(s5, h5, 512)

    out = pl.pallas_call(
        functools.partial(_fe_kernel, L, bounds),
        out_shape=jax.ShapeDtypeStruct((N, 4, 512), jnp.float32),
        grid=(N,),
        in_specs=[
            pl.BlockSpec((1, L, 1), lambda n: (n, 0, 0)),      # x
            pl.BlockSpec((8, 128), lambda n: (0, 0)),          # w1
            pl.BlockSpec((2, 128), lambda n: (0, 0)),          # scale/shift 1
            pl.BlockSpec((3, 128, 128), lambda n: (0, 0, 0)),  # w2
            pl.BlockSpec((2, 128), lambda n: (0, 0)),
            pl.BlockSpec((3, 128, 128), lambda n: (0, 0, 0)),  # w3
            pl.BlockSpec((2, 128), lambda n: (0, 0)),
            pl.BlockSpec((3, 128, 256), lambda n: (0, 0, 0)),  # w4
            pl.BlockSpec((2, 256), lambda n: (0, 0)),
            pl.BlockSpec((3, 256, 512), lambda n: (0, 0, 0)),  # w5
            pl.BlockSpec((2, 512), lambda n: (0, 0)),
        ],
        out_specs=pl.BlockSpec((1, 4, 512), lambda n: (n, 0, 0)),
        compiler_params=pltpu.CompilerParams(
            dimension_semantics=("parallel",),
            vmem_limit_bytes=32 * 1024 * 1024),
    )(x, w1p, ss1, w2p, ss2, w3p, ss3, w4p, ss4, w5p, ss5)

    # PyTorch Flatten over (N, 512, 4): flat[:, c*4 + i] = pooled[:, i, c]
    return jnp.transpose(out, (0, 2, 1)).reshape(N, 2048)


# ---------------------------------------------------------------------------
# Deterministic synthetic parameters
# ---------------------------------------------------------------------------
def make_params(key, in_channel=1):
    cfg = [(in_channel, 32, 7), (32, 64, 3), (64, 128, 3), (128, 256, 3), (256, 512, 3)]
    params = []
    for i, (cin, cout, k) in enumerate(cfg):
        ks = jax.random.split(jax.random.fold_in(key, i), 6)
        fan_in = cin * k
        params.append(dict(
            w=jax.random.normal(ks[0], (cout, cin, k), jnp.float32) / jnp.sqrt(fan_in),
            b=0.01 * jax.random.normal(ks[1], (cout,), jnp.float32),
            gamma=0.5 + jax.random.uniform(ks[2], (cout,), jnp.float32),
            beta=0.1 * jax.random.normal(ks[3], (cout,), jnp.float32),
            rmean=0.05 * jax.random.normal(ks[4], (cout,), jnp.float32),
            rvar=0.5 + jax.random.uniform(ks[5], (cout,), jnp.float32),
        ))
    return params


if __name__ == "__main__":
    key = jax.random.PRNGKey(0)
    k_x, k_p = jax.random.split(key)

    N, C_in, L = 2, 1, 128          # small but long enough to survive all convs
    x = jax.random.normal(k_x, (N, C_in, L), jnp.float32)
    params = make_params(k_p, in_channel=C_in)

    fwd = jax.jit(feature_extractor_forward)
    out = jax.block_until_ready(fwd(x, params))
    assert out.shape == (N, 2048), out.shape
    assert bool(jnp.all(jnp.isfinite(out)))
    print("KERNEL_OK")
</pallas_src>

<mosaic_0001>
module attributes {stable_mosaic.version = 11 : i64} {
  func.func @_fe_kernel(%arg0: i32, %arg1: memref<1x128x1xf32, #tpu.memory_space<vmem>>, %arg2: memref<8x128xf32, #tpu.memory_space<vmem>>, %arg3: memref<2x128xf32, #tpu.memory_space<vmem>>, %arg4: memref<3x128x128xbf16, #tpu.memory_space<vmem>>, %arg5: memref<2x128xf32, #tpu.memory_space<vmem>>, %arg6: memref<3x128x128xbf16, #tpu.memory_space<vmem>>, %arg7: memref<2x128xf32, #tpu.memory_space<vmem>>, %arg8: memref<3x128x256xbf16, #tpu.memory_space<vmem>>, %arg9: memref<2x256xf32, #tpu.memory_space<vmem>>, %arg10: memref<3x256x512xbf16, #tpu.memory_space<vmem>>, %arg11: memref<2x512xf32, #tpu.memory_space<vmem>>, %arg12: memref<1x4x512xf32, #tpu.memory_space<vmem>>) attributes {dimension_semantics = [#tpu.dimension_semantics<parallel>], iteration_bounds = array<i64: 2>, scalar_prefetch = 0 : i64, scratch_operands = 0 : i64, tpu.core_type = #tpu.core_type<tc>, window_params = [{transform_indices = @transform_0, window_bounds = array<i64: 1, 128, 1>}, {pipeline_mode = #tpu.pipeline_mode<synchronous>, transform_indices = @transform_1, window_bounds = array<i64: 8, 128>}, {pipeline_mode = #tpu.pipeline_mode<synchronous>, transform_indices = @transform_2, window_bounds = array<i64: 2, 128>}, {pipeline_mode = #tpu.pipeline_mode<synchronous>, transform_indices = @transform_3, window_bounds = array<i64: 3, 128, 128>}, {pipeline_mode = #tpu.pipeline_mode<synchronous>, transform_indices = @transform_4, window_bounds = array<i64: 2, 128>}, {pipeline_mode = #tpu.pipeline_mode<synchronous>, transform_indices = @transform_5, window_bounds = array<i64: 3, 128, 128>}, {pipeline_mode = #tpu.pipeline_mode<synchronous>, transform_indices = @transform_6, window_bounds = array<i64: 2, 128>}, {pipeline_mode = #tpu.pipeline_mode<synchronous>, transform_indices = @transform_7, window_bounds = array<i64: 3, 128, 256>}, {pipeline_mode = #tpu.pipeline_mode<synchronous>, transform_indices = @transform_8, window_bounds = array<i64: 2, 256>}, {pipeline_mode = #tpu.pipeline_mode<synchronous>, transform_indices = @transform_9, window_bounds = array<i64: 3, 256, 512>}, {pipeline_mode = #tpu.pipeline_mode<synchronous>, transform_indices = @transform_10, window_bounds = array<i64: 2, 512>}, {transform_indices = @transform_11, window_bounds = array<i64: 1, 4, 512>}]} {
    %c0 = arith.constant 0 : index
    %c0_0 = arith.constant 0 : index
    %c0_1 = arith.constant 0 : index
    %0 = vector.load %arg1[%c0, %c0_0, %c0_1] : memref<1x128x1xf32, #tpu.memory_space<vmem>>, vector<1x128x1xf32>
    %1 = vector.shape_cast %0 : vector<1x128x1xf32> to vector<128x1xf32>
    %cst = arith.constant 0.000000e+00 : f32
    %2 = vector.broadcast %cst : f32 to vector<128x128xf32>
    %c0_2 = arith.constant 0 : index
    %c0_3 = arith.constant 0 : index
    %3 = vector.load %arg2[%c0_2, %c0_3] : memref<8x128xf32, #tpu.memory_space<vmem>>, vector<1x128xf32>
    %4 = vector.broadcast %1 : vector<128x1xf32> to vector<128x128xf32>
    %5 = vector.broadcast %3 : vector<1x128xf32> to vector<128x128xf32>
    %6 = arith.mulf %4, %5 : vector<128x128xf32>
    %7 = arith.addf %2, %6 : vector<128x128xf32>
    %cst_4 = arith.constant 0.000000e+00 : f32
    %8 = vector.broadcast %cst_4 : f32 to vector<1x1xf32>
    %9 = vector.extract_strided_slice %1 {offsets = [1, 0], sizes = [127, 1], strides = [1, 1]} : vector<128x1xf32> to vector<127x1xf32>
    %10 = tpu.concatenate %9, %8 in 0 : vector<127x1xf32>, vector<1x1xf32> -> vector<128x1xf32>
    %c1 = arith.constant 1 : index
    %c0_5 = arith.constant 0 : index
    %11 = vector.load %arg2[%c1, %c0_5] : memref<8x128xf32, #tpu.memory_space<vmem>>, vector<1x128xf32>
    %12 = vector.broadcast %10 : vector<128x1xf32> to vector<128x128xf32>
    %13 = vector.broadcast %11 : vector<1x128xf32> to vector<128x128xf32>
    %14 = arith.mulf %12, %13 : vector<128x128xf32>
    %15 = arith.addf %7, %14 : vector<128x128xf32>
    %cst_6 = arith.constant 0.000000e+00 : f32
    %16 = vector.broadcast %cst_6 : f32 to vector<2x1xf32>
    %17 = vector.extract_strided_slice %1 {offsets = [2, 0], sizes = [126, 1], strides = [1, 1]} : vector<128x1xf32> to vector<126x1xf32>
    %18 = tpu.concatenate %17, %16 in 0 : vector<126x1xf32>, vector<2x1xf32> -> vector<128x1xf32>
    %c2 = arith.constant 2 : index
    %c0_7 = arith.constant 0 : index
    %19 = vector.load %arg2[%c2, %c0_7] : memref<8x128xf32, #tpu.memory_space<vmem>>, vector<1x128xf32>
    %20 = vector.broadcast %18 : vector<128x1xf32> to vector<128x128xf32>
    %21 = vector.broadcast %19 : vector<1x128xf32> to vector<128x128xf32>
    %22 = arith.mulf %20, %21 : vector<128x128xf32>
    %23 = arith.addf %15, %22 : vector<128x128xf32>
    %cst_8 = arith.constant 0.000000e+00 : f32
    %24 = vector.broadcast %cst_8 : f32 to vector<3x1xf32>
    %25 = vector.extract_strided_slice %1 {offsets = [3, 0], sizes = [125, 1], strides = [1, 1]} : vector<128x1xf32> to vector<125x1xf32>
    %26 = tpu.concatenate %25, %24 in 0 : vector<125x1xf32>, vector<3x1xf32> -> vector<128x1xf32>
    %c3 = arith.constant 3 : index
    %c0_9 = arith.constant 0 : index
    %27 = vector.load %arg2[%c3, %c0_9] : memref<8x128xf32, #tpu.memory_space<vmem>>, vector<1x128xf32>
    %28 = vector.broadcast %26 : vector<128x1xf32> to vector<128x128xf32>
    %29 = vector.broadcast %27 : vector<1x128xf32> to vector<128x128xf32>
    %30 = arith.mulf %28, %29 : vector<128x128xf32>
    %31 = arith.addf %23, %30 : vector<128x128xf32>
    %cst_10 = arith.constant 0.000000e+00 : f32
    %32 = vector.broadcast %cst_10 : f32 to vector<4x1xf32>
    %33 = vector.extract_strided_slice %1 {offsets = [4, 0], sizes = [124, 1], strides = [1, 1]} : vector<128x1xf32> to vector<124x1xf32>
    %34 = tpu.concatenate %33, %32 in 0 : vector<124x1xf32>, vector<4x1xf32> -> vector<128x1xf32>
    %c4 = arith.constant 4 : index
    %c0_11 = arith.constant 0 : index
    %35 = vector.load %arg2[%c4, %c0_11] : memref<8x128xf32, #tpu.memory_space<vmem>>, vector<1x128xf32>
    %36 = vector.broadcast %34 : vector<128x1xf32> to vector<128x128xf32>
    %37 = vector.broadcast %35 : vector<1x128xf32> to vector<128x128xf32>
    %38 = arith.mulf %36, %37 : vector<128x128xf32>
    %39 = arith.addf %31, %38 : vector<128x128xf32>
    %cst_12 = arith.constant 0.000000e+00 : f32
    %40 = vector.broadcast %cst_12 : f32 to vector<5x1xf32>
    %41 = vector.extract_strided_slice %1 {offsets = [5, 0], sizes = [123, 1], strides = [1, 1]} : vector<128x1xf32> to vector<123x1xf32>
    %42 = tpu.concatenate %41, %40 in 0 : vector<123x1xf32>, vector<5x1xf32> -> vector<128x1xf32>
    %c5 = arith.constant 5 : index
    %c0_13 = arith.constant 0 : index
    %43 = vector.load %arg2[%c5, %c0_13] : memref<8x128xf32, #tpu.memory_space<vmem>>, vector<1x128xf32>
    %44 = vector.broadcast %42 : vector<128x1xf32> to vector<128x128xf32>
    %45 = vector.broadcast %43 : vector<1x128xf32> to vector<128x128xf32>
    %46 = arith.mulf %44, %45 : vector<128x128xf32>
    %47 = arith.addf %39, %46 : vector<128x128xf32>
    %cst_14 = arith.constant 0.000000e+00 : f32
    %48 = vector.broadcast %cst_14 : f32 to vector<6x1xf32>
    %49 = vector.extract_strided_slice %1 {offsets = [6, 0], sizes = [122, 1], strides = [1, 1]} : vector<128x1xf32> to vector<122x1xf32>
    %50 = tpu.concatenate %49, %48 in 0 : vector<122x1xf32>, vector<6x1xf32> -> vector<128x1xf32>
    %c6 = arith.constant 6 : index
    %c0_15 = arith.constant 0 : index
    %51 = vector.load %arg2[%c6, %c0_15] : memref<8x128xf32, #tpu.memory_space<vmem>>, vector<1x128xf32>
    %52 = vector.broadcast %50 : vector<128x1xf32> to vector<128x128xf32>
    %53 = vector.broadcast %51 : vector<1x128xf32> to vector<128x128xf32>
    %54 = arith.mulf %52, %53 : vector<128x128xf32>
    %55 = arith.addf %47, %54 : vector<128x128xf32>
    %c0_16 = arith.constant 0 : index
    %c0_17 = arith.constant 0 : index
    %56 = vector.load %arg3[%c0_16, %c0_17] : memref<2x128xf32, #tpu.memory_space<vmem>>, vector<1x128xf32>
    %57 = vector.broadcast %56 : vector<1x128xf32> to vector<128x128xf32>
    %58 = arith.mulf %55, %57 : vector<128x128xf32>
    %c1_18 = arith.constant 1 : index
    %c0_19 = arith.constant 0 : index
    %59 = vector.load %arg3[%c1_18, %c0_19] : memref<2x128xf32, #tpu.memory_space<vmem>>, vector<1x128xf32>
    %60 = vector.broadcast %59 : vector<1x128xf32> to vector<128x128xf32>
    %61 = arith.addf %58, %60 : vector<128x128xf32>
    %cst_20 = arith.constant 0.000000e+00 : f32
    %62 = vector.broadcast %cst_20 : f32 to vector<128x128xf32>
    %63 = arith.maximumf %61, %62 : vector<128x128xf32>
    %64 = tpu.iota {dimensions = array<i32: 0>} : vector<64x128xi32>
    %65 = tpu.iota {dimensions = array<i32: 1>} : vector<64x128xi32>
    %c2_i32 = arith.constant 2 : i32
    %66 = vector.broadcast %c2_i32 : i32 to vector<64x128xi32>
    %67 = arith.muli %66, %64 : vector<64x128xi32>
    %68 = arith.cmpi eq, %65, %67 : vector<64x128xi32>
    %69 = arith.extui %68 : vector<64x128xi1> to vector<64x128xi32>
    %70 = arith.sitofp %69 : vector<64x128xi32> to vector<64x128xf32>
    %c2_i32_21 = arith.constant 2 : i32
    %71 = vector.broadcast %c2_i32_21 : i32 to vector<64x128xi32>
    %72 = arith.muli %71, %64 : vector<64x128xi32>
    %c1_i32 = arith.constant 1 : i32
    %73 = vector.broadcast %c1_i32 : i32 to vector<64x128xi32>
    %74 = arith.addi %72, %73 : vector<64x128xi32>
    %75 = arith.cmpi eq, %65, %74 : vector<64x128xi32>
    %76 = arith.extui %75 : vector<64x128xi1> to vector<64x128xi32>
    %77 = arith.sitofp %76 : vector<64x128xi32> to vector<64x128xf32>
    %cst_22 = arith.constant dense<0.000000e+00> : vector<64x128xf32>
    %78 = tpu.matmul %70, %63, %cst_22 {dimension_numbers = #tpu.dot_dimension_numbers<[1], [0], [0], [1], [0, 0, 1, 1], [], []>} : vector<64x128xf32>, vector<128x128xf32>, vector<64x128xf32> -> vector<64x128xf32>
    %cst_23 = arith.constant dense<0.000000e+00> : vector<64x128xf32>
    %79 = tpu.matmul %77, %63, %cst_23 {dimension_numbers = #tpu.dot_dimension_numbers<[1], [0], [0], [1], [0, 0, 1, 1], [], []>} : vector<64x128xf32>, vector<128x128xf32>, vector<64x128xf32> -> vector<64x128xf32>
    %80 = arith.maximumf %78, %79 : vector<64x128xf32>
    %cst_24 = arith.constant 0.000000e+00 : f32
    %81 = vector.broadcast %cst_24 : f32 to vector<64x128xf32>
    %82 = arith.truncf %80 : vector<64x128xf32> to vector<64x128xbf16>
    %c0_25 = arith.constant 0 : index
    %c0_26 = arith.constant 0 : index
    %c0_27 = arith.constant 0 : index
    %83 = vector.load %arg4[%c0_25, %c0_26, %c0_27] : memref<3x128x128xbf16, #tpu.memory_space<vmem>>, vector<1x128x128xbf16>
    %84 = vector.shape_cast %83 : vector<1x128x128xbf16> to vector<128x128xbf16>
    %cst_28 = arith.constant dense<0.000000e+00> : vector<64x128xf32>
    %85 = tpu.matmul %82, %84, %cst_28 {dimension_numbers = #tpu.dot_dimension_numbers<[1], [0], [0], [1], [0, 0, 1, 1], [], []>} : vector<64x128xbf16>, vector<128x128xbf16>, vector<64x128xf32> -> vector<64x128xf32>
    %86 = arith.addf %81, %85 : vector<64x128xf32>
    %cst_29 = arith.constant 0.000000e+00 : f32
    %87 = vector.broadcast %cst_29 : f32 to vector<1x128xf32>
    %88 = vector.extract_strided_slice %80 {offsets = [1, 0], sizes = [63, 128], strides = [1, 1]} : vector<64x128xf32> to vector<63x128xf32>
    %89 = tpu.concatenate %88, %87 in 0 : vector<63x128xf32>, vector<1x128xf32> -> vector<64x128xf32>
    %90 = arith.truncf %89 : vector<64x128xf32> to vector<64x128xbf16>
    %c1_30 = arith.constant 1 : index
    %c0_31 = arith.constant 0 : index
    %c0_32 = arith.constant 0 : index
    %91 = vector.load %arg4[%c1_30, %c0_31, %c0_32] : memref<3x128x128xbf16, #tpu.memory_space<vmem>>, vector<1x128x128xbf16>
    %92 = vector.shape_cast %91 : vector<1x128x128xbf16> to vector<128x128xbf16>
    %cst_33 = arith.constant dense<0.000000e+00> : vector<64x128xf32>
    %93 = tpu.matmul %90, %92, %cst_33 {dimension_numbers = #tpu.dot_dimension_numbers<[1], [0], [0], [1], [0, 0, 1, 1], [], []>} : vector<64x128xbf16>, vector<128x128xbf16>, vector<64x128xf32> -> vector<64x128xf32>
    %94 = arith.addf %86, %93 : vector<64x128xf32>
    %cst_34 = arith.constant 0.000000e+00 : f32
    %95 = vector.broadcast %cst_34 : f32 to vector<2x128xf32>
    %96 = vector.extract_strided_slice %80 {offsets = [2, 0], sizes = [62, 128], strides = [1, 1]} : vector<64x128xf32> to vector<62x128xf32>
    %97 = tpu.concatenate %96, %95 in 0 : vector<62x128xf32>, vector<2x128xf32> -> vector<64x128xf32>
    %98 = arith.truncf %97 : vector<64x128xf32> to vector<64x128xbf16>
    %c2_35 = arith.constant 2 : index
    %c0_36 = arith.constant 0 : index
    %c0_37 = arith.constant 0 : index
    %99 = vector.load %arg4[%c2_35, %c0_36, %c0_37] : memref<3x128x128xbf16, #tpu.memory_space<vmem>>, vector<1x128x128xbf16>
    %100 = vector.shape_cast %99 : vector<1x128x128xbf16> to vector<128x128xbf16>
    %cst_38 = arith.constant dense<0.000000e+00> : vector<64x128xf32>
    %101 = tpu.matmul %98, %100, %cst_38 {dimension_numbers = #tpu.dot_dimension_numbers<[1], [0], [0], [1], [0, 0, 1, 1], [], []>} : vector<64x128xbf16>, vector<128x128xbf16>, vector<64x128xf32> -> vector<64x128xf32>
    %102 = arith.addf %94, %101 : vector<64x128xf32>
    %c0_39 = arith.constant 0 : index
    %c0_40 = arith.constant 0 : index
    %103 = vector.load %arg5[%c0_39, %c0_40] : memref<2x128xf32, #tpu.memory_space<vmem>>, vector<1x128xf32>
    %104 = vector.broadcast %103 : vector<1x128xf32> to vector<64x128xf32>
    %105 = arith.mulf %102, %104 : vector<64x128xf32>
    %c1_41 = arith.constant 1 : index
    %c0_42 = arith.constant 0 : index
    %106 = vector.load %arg5[%c1_41, %c0_42] : memref<2x128xf32, #tpu.memory_space<vmem>>, vector<1x128xf32>
    %107 = vector.broadcast %106 : vector<1x128xf32> to vector<64x128xf32>
    %108 = arith.addf %105, %107 : vector<64x128xf32>
    %cst_43 = arith.constant 0.000000e+00 : f32
    %109 = vector.broadcast %cst_43 : f32 to vector<64x128xf32>
    %110 = arith.maximumf %108, %109 : vector<64x128xf32>
    %cst_44 = arith.constant 0.000000e+00 : f32
    %111 = vector.broadcast %cst_44 : f32 to vector<64x128xf32>
    %112 = arith.truncf %110 : vector<64x128xf32> to vector<64x128xbf16>
    %c0_45 = arith.constant 0 : index
    %c0_46 = arith.constant 0 : index
    %c0_47 = arith.constant 0 : index
    %113 = vector.load %arg6[%c0_45, %c0_46, %c0_47] : memref<3x128x128xbf16, #tpu.memory_space<vmem>>, vector<1x128x128xbf16>
    %114 = vector.shape_cast %113 : vector<1x128x128xbf16> to vector<128x128xbf16>
    %cst_48 = arith.constant dense<0.000000e+00> : vector<64x128xf32>
    %115 = tpu.matmul %112, %114, %cst_48 {dimension_numbers = #tpu.dot_dimension_numbers<[1], [0], [0], [1], [0, 0, 1, 1], [], []>} : vector<64x128xbf16>, vector<128x128xbf16>, vector<64x128xf32> -> vector<64x128xf32>
    %116 = arith.addf %111, %115 : vector<64x128xf32>
    %cst_49 = arith.constant 0.000000e+00 : f32
    %117 = vector.broadcast %cst_49 : f32 to vector<1x128xf32>
    %118 = vector.extract_strided_slice %110 {offsets = [1, 0], sizes = [63, 128], strides = [1, 1]} : vector<64x128xf32> to vector<63x128xf32>
    %119 = tpu.concatenate %118, %117 in 0 : vector<63x128xf32>, vector<1x128xf32> -> vector<64x128xf32>
    %120 = arith.truncf %119 : vector<64x128xf32> to vector<64x128xbf16>
    %c1_50 = arith.constant 1 : index
    %c0_51 = arith.constant 0 : index
    %c0_52 = arith.constant 0 : index
    %121 = vector.load %arg6[%c1_50, %c0_51, %c0_52] : memref<3x128x128xbf16, #tpu.memory_space<vmem>>, vector<1x128x128xbf16>
    %122 = vector.shape_cast %121 : vector<1x128x128xbf16> to vector<128x128xbf16>
    %cst_53 = arith.constant dense<0.000000e+00> : vector<64x128xf32>
    %123 = tpu.matmul %120, %122, %cst_53 {dimension_numbers = #tpu.dot_dimension_numbers<[1], [0], [0], [1], [0, 0, 1, 1], [], []>} : vector<64x128xbf16>, vector<128x128xbf16>, vector<64x128xf32> -> vector<64x128xf32>
    %124 = arith.addf %116, %123 : vector<64x128xf32>
    %cst_54 = arith.constant 0.000000e+00 : f32
    %125 = vector.broadcast %cst_54 : f32 to vector<2x128xf32>
    %126 = vector.extract_strided_slice %110 {offsets = [2, 0], sizes = [62, 128], strides = [1, 1]} : vector<64x128xf32> to vector<62x128xf32>
    %127 = tpu.concatenate %126, %125 in 0 : vector<62x128xf32>, vector<2x128xf32> -> vector<64x128xf32>
    %128 = arith.truncf %127 : vector<64x128xf32> to vector<64x128xbf16>
    %c2_55 = arith.constant 2 : index
    %c0_56 = arith.constant 0 : index
    %c0_57 = arith.constant 0 : index
    %129 = vector.load %arg6[%c2_55, %c0_56, %c0_57] : memref<3x128x128xbf16, #tpu.memory_space<vmem>>, vector<1x128x128xbf16>
    %130 = vector.shape_cast %129 : vector<1x128x128xbf16> to vector<128x128xbf16>
    %cst_58 = arith.constant dense<0.000000e+00> : vector<64x128xf32>
    %131 = tpu.matmul %128, %130, %cst_58 {dimension_numbers = #tpu.dot_dimension_numbers<[1], [0], [0], [1], [0, 0, 1, 1], [], []>} : vector<64x128xbf16>, vector<128x128xbf16>, vector<64x128xf32> -> vector<64x128xf32>
    %132 = arith.addf %124, %131 : vector<64x128xf32>
    %c0_59 = arith.constant 0 : index
    %c0_60 = arith.constant 0 : index
    %133 = vector.load %arg7[%c0_59, %c0_60] : memref<2x128xf32, #tpu.memory_space<vmem>>, vector<1x128xf32>
    %134 = vector.broadcast %133 : vector<1x128xf32> to vector<64x128xf32>
    %135 = arith.mulf %132, %134 : vector<64x128xf32>
    %c1_61 = arith.constant 1 : index
    %c0_62 = arith.constant 0 : index
    %136 = vector.load %arg7[%c1_61, %c0_62] : memref<2x128xf32, #tpu.memory_space<vmem>>, vector<1x128xf32>
    %137 = vector.broadcast %136 : vector<1x128xf32> to vector<64x128xf32>
    %138 = arith.addf %135, %137 : vector<64x128xf32>
    %cst_63 = arith.constant 0.000000e+00 : f32
    %139 = vector.broadcast %cst_63 : f32 to vector<64x128xf32>
    %140 = arith.maximumf %138, %139 : vector<64x128xf32>
    %cst_64 = arith.constant 0.000000e+00 : f32
    %141 = vector.broadcast %cst_64 : f32 to vector<64x256xf32>
    %142 = arith.truncf %140 : vector<64x128xf32> to vector<64x128xbf16>
    %c0_65 = arith.constant 0 : index
    %c0_66 = arith.constant 0 : index
    %c0_67 = arith.constant 0 : index
    %143 = vector.load %arg8[%c0_65, %c0_66, %c0_67] : memref<3x128x256xbf16, #tpu.memory_space<vmem>>, vector<1x128x256xbf16>
    %144 = vector.shape_cast %143 : vector<1x128x256xbf16> to vector<128x256xbf16>
    %cst_68 = arith.constant dense<0.000000e+00> : vector<64x256xf32>
    %145 = tpu.matmul %142, %144, %cst_68 {dimension_numbers = #tpu.dot_dimension_numbers<[1], [0], [0], [1], [0, 0, 1, 1], [], []>} : vector<64x128xbf16>, vector<128x256xbf16>, vector<64x256xf32> -> vector<64x256xf32>
    %146 = arith.addf %141, %145 : vector<64x256xf32>
    %cst_69 = arith.constant 0.000000e+00 : f32
    %147 = vector.broadcast %cst_69 : f32 to vector<1x128xf32>
    %148 = vector.extract_strided_slice %140 {offsets = [1, 0], sizes = [63, 128], strides = [1, 1]} : vector<64x128xf32> to vector<63x128xf32>
    %149 = tpu.concatenate %148, %147 in 0 : vector<63x128xf32>, vector<1x128xf32> -> vector<64x128xf32>
    %150 = arith.truncf %149 : vector<64x128xf32> to vector<64x128xbf16>
    %c1_70 = arith.constant 1 : index
    %c0_71 = arith.constant 0 : index
    %c0_72 = arith.constant 0 : index
    %151 = vector.load %arg8[%c1_70, %c0_71, %c0_72] : memref<3x128x256xbf16, #tpu.memory_space<vmem>>, vector<1x128x256xbf16>
    %152 = vector.shape_cast %151 : vector<1x128x256xbf16> to vector<128x256xbf16>
    %cst_73 = arith.constant dense<0.000000e+00> : vector<64x256xf32>
    %153 = tpu.matmul %150, %152, %cst_73 {dimension_numbers = #tpu.dot_dimension_numbers<[1], [0], [0], [1], [0, 0, 1, 1], [], []>} : vector<64x128xbf16>, vector<128x256xbf16>, vector<64x256xf32> -> vector<64x256xf32>
    %154 = arith.addf %146, %153 : vector<64x256xf32>
    %cst_74 = arith.constant 0.000000e+00 : f32
    %155 = vector.broadcast %cst_74 : f32 to vector<2x128xf32>
    %156 = vector.extract_strided_slice %140 {offsets = [2, 0], sizes = [62, 128], strides = [1, 1]} : vector<64x128xf32> to vector<62x128xf32>
    %157 = tpu.concatenate %156, %155 in 0 : vector<62x128xf32>, vector<2x128xf32> -> vector<64x128xf32>
    %158 = arith.truncf %157 : vector<64x128xf32> to vector<64x128xbf16>
    %c2_75 = arith.constant 2 : index
    %c0_76 = arith.constant 0 : index
    %c0_77 = arith.constant 0 : index
    %159 = vector.load %arg8[%c2_75, %c0_76, %c0_77] : memref<3x128x256xbf16, #tpu.memory_space<vmem>>, vector<1x128x256xbf16>
    %160 = vector.shape_cast %159 : vector<1x128x256xbf16> to vector<128x256xbf16>
    %cst_78 = arith.constant dense<0.000000e+00> : vector<64x256xf32>
    %161 = tpu.matmul %158, %160, %cst_78 {dimension_numbers = #tpu.dot_dimension_numbers<[1], [0], [0], [1], [0, 0, 1, 1], [], []>} : vector<64x128xbf16>, vector<128x256xbf16>, vector<64x256xf32> -> vector<64x256xf32>
    %162 = arith.addf %154, %161 : vector<64x256xf32>
    %c0_79 = arith.constant 0 : index
    %c0_80 = arith.constant 0 : index
    %163 = vector.load %arg9[%c0_79, %c0_80] : memref<2x256xf32, #tpu.memory_space<vmem>>, vector<1x256xf32>
    %164 = vector.broadcast %163 : vector<1x256xf32> to vector<64x256xf32>
    %165 = arith.mulf %162, %164 : vector<64x256xf32>
    %c1_81 = arith.constant 1 : index
    %c0_82 = arith.constant 0 : index
    %166 = vector.load %arg9[%c1_81, %c0_82] : memref<2x256xf32, #tpu.memory_space<vmem>>, vector<1x256xf32>
    %167 = vector.broadcast %166 : vector<1x256xf32> to vector<64x256xf32>
    %168 = arith.addf %165, %167 : vector<64x256xf32>
    %cst_83 = arith.constant 0.000000e+00 : f32
    %169 = vector.broadcast %cst_83 : f32 to vector<64x256xf32>
    %170 = arith.maximumf %168, %169 : vector<64x256xf32>
    %cst_84 = arith.constant 0.000000e+00 : f32
    %171 = vector.broadcast %cst_84 : f32 to vector<64x512xf32>
    %172 = arith.truncf %170 : vector<64x256xf32> to vector<64x256xbf16>
    %c0_85 = arith.constant 0 : index
    %c0_86 = arith.constant 0 : index
    %c0_87 = arith.constant 0 : index
    %173 = vector.load %arg10[%c0_85, %c0_86, %c0_87] : memref<3x256x512xbf16, #tpu.memory_space<vmem>>, vector<1x256x512xbf16>
    %174 = vector.shape_cast %173 : vector<1x256x512xbf16> to vector<256x512xbf16>
    %cst_88 = arith.constant dense<0.000000e+00> : vector<64x512xf32>
    %175 = tpu.matmul %172, %174, %cst_88 {dimension_numbers = #tpu.dot_dimension_numbers<[1], [0], [0], [1], [0, 0, 1, 1], [], []>} : vector<64x256xbf16>, vector<256x512xbf16>, vector<64x512xf32> -> vector<64x512xf32>
    %176 = arith.addf %171, %175 : vector<64x512xf32>
    %cst_89 = arith.constant 0.000000e+00 : f32
    %177 = vector.broadcast %cst_89 : f32 to vector<1x256xf32>
    %178 = vector.extract_strided_slice %170 {offsets = [1, 0], sizes = [63, 256], strides = [1, 1]} : vector<64x256xf32> to vector<63x256xf32>
    %179 = tpu.concatenate %178, %177 in 0 : vector<63x256xf32>, vector<1x256xf32> -> vector<64x256xf32>
    %180 = arith.truncf %179 : vector<64x256xf32> to vector<64x256xbf16>
    %c1_90 = arith.constant 1 : index
    %c0_91 = arith.constant 0 : index
    %c0_92 = arith.constant 0 : index
    %181 = vector.load %arg10[%c1_90, %c0_91, %c0_92] : memref<3x256x512xbf16, #tpu.memory_space<vmem>>, vector<1x256x512xbf16>
    %182 = vector.shape_cast %181 : vector<1x256x512xbf16> to vector<256x512xbf16>
    %cst_93 = arith.constant dense<0.000000e+00> : vector<64x512xf32>
    %183 = tpu.matmul %180, %182, %cst_93 {dimension_numbers = #tpu.dot_dimension_numbers<[1], [0], [0], [1], [0, 0, 1, 1], [], []>} : vector<64x256xbf16>, vector<256x512xbf16>, vector<64x512xf32> -> vector<64x512xf32>
    %184 = arith.addf %176, %183 : vector<64x512xf32>
    %cst_94 = arith.constant 0.000000e+00 : f32
    %185 = vector.broadcast %cst_94 : f32 to vector<2x256xf32>
    %186 = vector.extract_strided_slice %170 {offsets = [2, 0], sizes = [62, 256], strides = [1, 1]} : vector<64x256xf32> to vector<62x256xf32>
    %187 = tpu.concatenate %186, %185 in 0 : vector<62x256xf32>, vector<2x256xf32> -> vector<64x256xf32>
    %188 = arith.truncf %187 : vector<64x256xf32> to vector<64x256xbf16>
    %c2_95 = arith.constant 2 : index
    %c0_96 = arith.constant 0 : index
    %c0_97 = arith.constant 0 : index
    %189 = vector.load %arg10[%c2_95, %c0_96, %c0_97] : memref<3x256x512xbf16, #tpu.memory_space<vmem>>, vector<1x256x512xbf16>
    %190 = vector.shape_cast %189 : vector<1x256x512xbf16> to vector<256x512xbf16>
    %cst_98 = arith.constant dense<0.000000e+00> : vector<64x512xf32>
    %191 = tpu.matmul %188, %190, %cst_98 {dimension_numbers = #tpu.dot_dimension_numbers<[1], [0], [0], [1], [0, 0, 1, 1], [], []>} : vector<64x256xbf16>, vector<256x512xbf16>, vector<64x512xf32> -> vector<64x512xf32>
    %192 = arith.addf %184, %191 : vector<64x512xf32>
    %c0_99 = arith.constant 0 : index
    %c0_100 = arith.constant 0 : index
    %193 = vector.load %arg11[%c0_99, %c0_100] : memref<2x512xf32, #tpu.memory_space<vmem>>, vector<1x512xf32>
    %194 = vector.broadcast %193 : vector<1x512xf32> to vector<64x512xf32>
    %195 = arith.mulf %192, %194 : vector<64x512xf32>
    %c1_101 = arith.constant 1 : index
    %c0_102 = arith.constant 0 : index
    %196 = vector.load %arg11[%c1_101, %c0_102] : memref<2x512xf32, #tpu.memory_space<vmem>>, vector<1x512xf32>
    %197 = vector.broadcast %196 : vector<1x512xf32> to vector<64x512xf32>
    %198 = arith.addf %195, %197 : vector<64x512xf32>
    %cst_103 = arith.constant 0.000000e+00 : f32
    %199 = vector.broadcast %cst_103 : f32 to vector<64x512xf32>
    %200 = arith.maximumf %198, %199 : vector<64x512xf32>
    %201 = tpu.iota {dimensions = array<i32: 0>} : vector<64x512xi32>
    %c0_i32 = arith.constant 0 : i32
    %202 = vector.broadcast %c0_i32 : i32 to vector<64x512xi32>
    %203 = arith.cmpi sge, %201, %202 : vector<64x512xi32>
    %c14_i32 = arith.constant 14 : i32
    %204 = vector.broadcast %c14_i32 : i32 to vector<64x512xi32>
    %205 = arith.cmpi slt, %201, %204 : vector<64x512xi32>
    %206 = arith.andi %203, %205 : vector<64x512xi1>
    %cst_104 = arith.constant 0xFF800000 : f32
    %207 = vector.broadcast %cst_104 : f32 to vector<64x512xf32>
    %208 = arith.select %206, %200, %207 : vector<64x512xi1>, vector<64x512xf32>
    %cst_105 = arith.constant dense<0xFF800000> : vector<512xf32>
    %209 = vector.multi_reduction <maximumf>, %208, %cst_105 [0] : vector<64x512xf32> to vector<512xf32>
    %210 = vector.shape_cast %209 : vector<512xf32> to vector<1x512xf32>
    %c13_i32 = arith.constant 13 : i32
    %211 = vector.broadcast %c13_i32 : i32 to vector<64x512xi32>
    %212 = arith.cmpi sge, %201, %211 : vector<64x512xi32>
    %c27_i32 = arith.constant 27 : i32
    %213 = vector.broadcast %c27_i32 : i32 to vector<64x512xi32>
    %214 = arith.cmpi slt, %201, %213 : vector<64x512xi32>
    %215 = arith.andi %212, %214 : vector<64x512xi1>
    %cst_106 = arith.constant 0xFF800000 : f32
    %216 = vector.broadcast %cst_106 : f32 to vector<64x512xf32>
    %217 = arith.select %215, %200, %216 : vector<64x512xi1>, vector<64x512xf32>
    %cst_107 = arith.constant dense<0xFF800000> : vector<512xf32>
    %218 = vector.multi_reduction <maximumf>, %217, %cst_107 [0] : vector<64x512xf32> to vector<512xf32>
    %219 = vector.shape_cast %218 : vector<512xf32> to vector<1x512xf32>
    %c26_i32 = arith.constant 26 : i32
    %220 = vector.broadcast %c26_i32 : i32 to vector<64x512xi32>
    %221 = arith.cmpi sge, %201, %220 : vector<64x512xi32>
    %c40_i32 = arith.constant 40 : i32
    %222 = vector.broadcast %c40_i32 : i32 to vector<64x512xi32>
    %223 = arith.cmpi slt, %201, %222 : vector<64x512xi32>
    %224 = arith.andi %221, %223 : vector<64x512xi1>
    %cst_108 = arith.constant 0xFF800000 : f32
    %225 = vector.broadcast %cst_108 : f32 to vector<64x512xf32>
    %226 = arith.select %224, %200, %225 : vector<64x512xi1>, vector<64x512xf32>
    %cst_109 = arith.constant dense<0xFF800000> : vector<512xf32>
    %227 = vector.multi_reduction <maximumf>, %226, %cst_109 [0] : vector<64x512xf32> to vector<512xf32>
    %228 = vector.shape_cast %227 : vector<512xf32> to vector<1x512xf32>
    %c39_i32 = arith.constant 39 : i32
    %229 = vector.broadcast %c39_i32 : i32 to vector<64x512xi32>
    %230 = arith.cmpi sge, %201, %229 : vector<64x512xi32>
    %c53_i32 = arith.constant 53 : i32
    %231 = vector.broadcast %c53_i32 : i32 to vector<64x512xi32>
    %232 = arith.cmpi slt, %201, %231 : vector<64x512xi32>
    %233 = arith.andi %230, %232 : vector<64x512xi1>
    %cst_110 = arith.constant 0xFF800000 : f32
    %234 = vector.broadcast %cst_110 : f32 to vector<64x512xf32>
    %235 = arith.select %233, %200, %234 : vector<64x512xi1>, vector<64x512xf32>
    %cst_111 = arith.constant dense<0xFF800000> : vector<512xf32>
    %236 = vector.multi_reduction <maximumf>, %235, %cst_111 [0] : vector<64x512xf32> to vector<512xf32>
    %237 = vector.shape_cast %236 : vector<512xf32> to vector<1x512xf32>
    %238 = tpu.concatenate %210, %219, %228, %237 in 0 : vector<1x512xf32>, vector<1x512xf32>, vector<1x512xf32>, vector<1x512xf32> -> vector<4x512xf32>
    %c0_112 = arith.constant 0 : index
    %c0_113 = arith.constant 0 : index
    %c0_114 = arith.constant 0 : index
    %239 = vector.load %arg12[%c0_112, %c0_113, %c0_114] : memref<1x4x512xf32, #tpu.memory_space<vmem>>, vector<1x4x512xf32>
    %240 = vector.shape_cast %239 : vector<1x4x512xf32> to vector<4x512xf32>
    %241 = vector.shape_cast %238 : vector<4x512xf32> to vector<1x4x512xf32>
    tpu.vector_store %arg12[%c0_112, %c0_113, %c0_114], %241 {strides = array<i32>} : memref<1x4x512xf32, #tpu.memory_space<vmem>>, vector<1x4x512xf32>,
    return
  }
  func.func @transform_0(%arg0: i32) -> (i32, i32, i32) {
    %c0_i32 = arith.constant 0 : i32
    %c0_i32_0 = arith.constant 0 : i32
    %c0_i32_1 = arith.constant 0 : i32
    return %arg0, %c0_i32, %c0_i32_0 : i32, i32, i32
  }
  func.func @transform_1(%arg0: i32) -> (i32, i32) {
    %c0_i32 = arith.constant 0 : i32
    %c0_i32_0 = arith.constant 0 : i32
    %c0_i32_1 = arith.constant 0 : i32
    return %c0_i32, %c0_i32_0 : i32, i32
  }
  func.func @transform_2(%arg0: i32) -> (i32, i32) {
    %c0_i32 = arith.constant 0 : i32
    %c0_i32_0 = arith.constant 0 : i32
    %c0_i32_1 = arith.constant 0 : i32
    return %c0_i32, %c0_i32_0 : i32, i32
  }
  func.func @transform_3(%arg0: i32) -> (i32, i32, i32) {
    %c0_i32 = arith.constant 0 : i32
    %c0_i32_0 = arith.constant 0 : i32
    %c0_i32_1 = arith.constant 0 : i32
    %c0_i32_2 = arith.constant 0 : i32
    return %c0_i32, %c0_i32_0, %c0_i32_1 : i32, i32, i32
  }
  func.func @transform_4(%arg0: i32) -> (i32, i32) {
    %c0_i32 = arith.constant 0 : i32
    %c0_i32_0 = arith.constant 0 : i32
    %c0_i32_1 = arith.constant 0 : i32
    return %c0_i32, %c0_i32_0 : i32, i32
  }
  func.func @transform_5(%arg0: i32) -> (i32, i32, i32) {
    %c0_i32 = arith.constant 0 : i32
    %c0_i32_0 = arith.constant 0 : i32
    %c0_i32_1 = arith.constant 0 : i32
    %c0_i32_2 = arith.constant 0 : i32
    return %c0_i32, %c0_i32_0, %c0_i32_1 : i32, i32, i32
  }
  func.func @transform_6(%arg0: i32) -> (i32, i32) {
    %c0_i32 = arith.constant 0 : i32
    %c0_i32_0 = arith.constant 0 : i32
    %c0_i32_1 = arith.constant 0 : i32
    return %c0_i32, %c0_i32_0 : i32, i32
  }
  func.func @transform_7(%arg0: i32) -> (i32, i32, i32) {
    %c0_i32 = arith.constant 0 : i32
    %c0_i32_0 = arith.constant 0 : i32
    %c0_i32_1 = arith.constant 0 : i32
    %c0_i32_2 = arith.constant 0 : i32
    return %c0_i32, %c0_i32_0, %c0_i32_1 : i32, i32, i32
  }
  func.func @transform_8(%arg0: i32) -> (i32, i32) {
    %c0_i32 = arith.constant 0 : i32
    %c0_i32_0 = arith.constant 0 : i32
    %c0_i32_1 = arith.constant 0 : i32
    return %c0_i32, %c0_i32_0 : i32, i32
  }
  func.func @transform_9(%arg0: i32) -> (i32, i32, i32) {
    %c0_i32 = arith.constant 0 : i32
    %c0_i32_0 = arith.constant 0 : i32
    %c0_i32_1 = arith.constant 0 : i32
    %c0_i32_2 = arith.constant 0 : i32
    return %c0_i32, %c0_i32_0, %c0_i32_1 : i32, i32, i32
  }
  func.func @transform_10(%arg0: i32) -> (i32, i32) {
    %c0_i32 = arith.constant 0 : i32
    %c0_i32_0 = arith.constant 0 : i32
    %c0_i32_1 = arith.constant 0 : i32
    return %c0_i32, %c0_i32_0 : i32, i32
  }
  func.func @transform_11(%arg0: i32) -> (i32, i32, i32) {
    %c0_i32 = arith.constant 0 : i32
    %c0_i32_0 = arith.constant 0 : i32
    %c0_i32_1 = arith.constant 0 : i32
    return %arg0, %c0_i32, %c0_i32_0 : i32, i32, i32
  }
}

</mosaic_0001>

<llo_original>
// kernel: feature_extractor_forward.1
$region0: #{feature_extractor_forward.1}
  #allocation0 [shape = 'u32[]', space=smem, size = 0x4, offset = 0x4, fixed_abs, tag = 'smem constant byte address 0x4 - core index']
  #allocation1 [shape = 'u32[72,128]{1,0:T(1,128)}', space=vmem, size = 0x9000, scoped, tag = 'internal scratch']
  %s0 = inlined_call_operand.vmem [shape: f32[2,128,1], index: 0, kind: input, shape index: {}]
  %s1 = inlined_call_operand.vmem [shape: f32[8,128], index: 1, kind: input, shape index: {}]
  %s2 = inlined_call_operand.vmem [shape: f32[2,128], index: 2, kind: input, shape index: {}]
  %s3 = inlined_call_operand.vmem [shape: bf16[3,128,128], index: 3, kind: input, shape index: {}]
  %s4 = inlined_call_operand.vmem [shape: f32[2,128], index: 4, kind: input, shape index: {}]
  %s5 = inlined_call_operand.vmem [shape: bf16[3,128,128], index: 5, kind: input, shape index: {}]
  %s6 = inlined_call_operand.vmem [shape: f32[2,128], index: 6, kind: input, shape index: {}]
  %s7 = inlined_call_operand.vmem [shape: bf16[3,128,256], index: 7, kind: input, shape index: {}]
  %s8 = inlined_call_operand.vmem [shape: f32[2,256], index: 8, kind: input, shape index: {}]
  %s9 = inlined_call_operand.vmem [shape: bf16[3,256,512], index: 9, kind: input, shape index: {}]
  %s10 = inlined_call_operand.vmem [shape: f32[2,512], index: 10, kind: input, shape index: {}]
  %s11 = inlined_call_operand.vmem [shape: f32[2,4,512], index: 11, kind: output, shape index: {}]
  %s12 = sld [smem:[#allocation0]]
  $region77: #{feature_extractor_forward.1} parent=0
    _
  %s14 = ssub.s32 1, %s12
  %s15 = scalar_select 0, %s14, %s12
  loop: start=0, step=1, limit=4
  $region2: #{feature_extractor_forward.1} parent=0 // loop_pre_header
    _
  $region3: #{feature_extractor_forward.1} parent=0 // loop_header
    %s17 = sphi 0, %s21
    %p18 = scmp.ge.s32.totalorder %s17, 4
    %s27 = sphi 0, %s29
    %s30 = sphi 0, %s27
    %s31 = sphi 0, %s30
    %s47 = sphi 0, %s31
    %s51 = sphi 0, %s51
    %s53 = sphi 0, %s51
    %s54 = sphi 0, %s53
    %s68 = sphi 0, %s54
    %s72 = sphi 0, %s72
    %s74 = sphi 0, %s72
    %s75 = sphi 0, %s74
    %s89 = sphi 0, %s75
    %s93 = sphi 0, %s93
    %s95 = sphi 0, %s93
    %s96 = sphi 0, %s95
    %s110 = sphi 0, %s96
    %s114 = sphi 0, %s114
    %s116 = sphi 0, %s114
    %s117 = sphi 0, %s116
    %s131 = sphi 0, %s117
    %s135 = sphi 0, %s135
    %s137 = sphi 0, %s135
    %s138 = sphi 0, %s137
    %s152 = sphi 0, %s138
    %s156 = sphi 0, %s156
    %s158 = sphi 0, %s156
    %s159 = sphi 0, %s158
    %s173 = sphi 0, %s159
    %s177 = sphi 0, %s177
    %s179 = sphi 0, %s177
    %s180 = sphi 0, %s179
    %s194 = sphi 0, %s180
    %s198 = sphi 0, %s198
    %s200 = sphi 0, %s198
    %s201 = sphi 0, %s200
    %s215 = sphi 0, %s201
    %s219 = sphi 0, %s219
    %s221 = sphi 0, %s219
    %s222 = sphi 0, %s221
    %s236 = sphi 0, %s222
    %s240 = sphi 0, %s240
    %s242 = sphi 0, %s240
    %s243 = sphi 0, %s242
    %s257 = sphi 0, %s243
    %s263 = sphi 0, %s265
    %s266 = sphi 0, %s263
    %s267 = sphi 0, %s266
    %s283 = sphi 0, %s267
  $region4: #{feature_extractor_forward.1} parent=0 // loop_header_branch
    %20 = sbr.rel (%p18) target = $region8
  $region5: #{feature_extractor_forward.1} parent=0 // loop_body
    %s22 = ssub.s32 %s17, 1
    %s23 = ssub.s32 %s17, 2
    %s24 = sadd.s32 %s17, 1
    %s25 = ssub.s32 %s17, %s24
    %p26 = scmp.eq.s32.totalorder %s25, 0
    %s28 = sadd.s32 %s27, 1
    %s29 = scalar_select %p26, %s27, %s28
    %p32 = pneg %p26
    %p33 = scmp.eq.s32.totalorder %s17, 1
    %p34 = por %p32, %p33
    %p35 = scmp.ne.s32.totalorder %s27, %s30
    %p36 = scmp.eq.s32.totalorder %s17, 0
    %p37 = por %p35, %p36
    %p38 = scmp.ne.s32.totalorder %s27, %s30
    %p39 = scmp.eq.s32.totalorder %s22, 1
    %p40 = por %p38, %p39
    %p41 = scmp.ne.s32.totalorder %s30, %s31
    %p42 = scmp.eq.s32.totalorder %s22, 0
    %p43 = por %p41, %p42
    %p44 = scmp.ne.s32.totalorder %s30, %s31
    %p45 = scmp.eq.s32.totalorder %s23, 1
    %p46 = por %p44, %p45
    %p48 = scmp.ne.s32.totalorder %s31, %s47
    %p49 = scmp.eq.s32.totalorder %s23, 0
    %p50 = por %p48, %p49
    %s52 = sadd.s32 %s51, 1
    %p55 = scmp.eq.s32.totalorder %s17, 1
    %p56 = scmp.ne.s32.totalorder %s51, %s53
    %p57 = scmp.eq.s32.totalorder %s17, 0
    %p58 = por %p56, %p57
    %p59 = scmp.ne.s32.totalorder %s51, %s53
    %p60 = scmp.eq.s32.totalorder %s22, 1
    %p61 = por %p59, %p60
    %p62 = scmp.ne.s32.totalorder %s53, %s54
    %p63 = scmp.eq.s32.totalorder %s22, 0
    %p64 = por %p62, %p63
    %p65 = scmp.ne.s32.totalorder %s53, %s54
    %p66 = scmp.eq.s32.totalorder %s23, 1
    %p67 = por %p65, %p66
    %p69 = scmp.ne.s32.totalorder %s54, %s68
    %p70 = scmp.eq.s32.totalorder %s23, 0
    %p71 = por %p69, %p70
    %s73 = sadd.s32 %s72, 1
    %p76 = scmp.eq.s32.totalorder %s17, 1
    %p77 = scmp.ne.s32.totalorder %s72, %s74
    %p78 = scmp.eq.s32.totalorder %s17, 0
    %p79 = por %p77, %p78
    %p80 = scmp.ne.s32.totalorder %s72, %s74
    %p81 = scmp.eq.s32.totalorder %s22, 1
    %p82 = por %p80, %p81
    %p83 = scmp.ne.s32.totalorder %s74, %s75
    %p84 = scmp.eq.s32.totalorder %s22, 0
    %p85 = por %p83, %p84
    %p86 = scmp.ne.s32.totalorder %s74, %s75
    %p87 = scmp.eq.s32.totalorder %s23, 1
    %p88 = por %p86, %p87
    %p90 = scmp.ne.s32.totalorder %s75, %s89
    %p91 = scmp.eq.s32.totalorder %s23, 0
    %p92 = por %p90, %p91
    %s94 = sadd.s32 %s93, 1
    %p97 = scmp.eq.s32.totalorder %s17, 1
    %p98 = scmp.ne.s32.totalorder %s93, %s95
    %p99 = scmp.eq.s32.totalorder %s17, 0
    %p100 = por %p98, %p99
    %p101 = scmp.ne.s32.totalorder %s93, %s95
    %p102 = scmp.eq.s32.totalorder %s22, 1
    %p103 = por %p101, %p102
    %p104 = scmp.ne.s32.totalorder %s95, %s96
    %p105 = scmp.eq.s32.totalorder %s22, 0
    %p106 = por %p104, %p105
    %p107 = scmp.ne.s32.totalorder %s95, %s96
    %p108 = scmp.eq.s32.totalorder %s23, 1
    %p109 = por %p107, %p108
    %p111 = scmp.ne.s32.totalorder %s96, %s110
    %p112 = scmp.eq.s32.totalorder %s23, 0
    %p113 = por %p111, %p112
    %s115 = sadd.s32 %s114, 1
    %p118 = scmp.eq.s32.totalorder %s17, 1
    %p119 = scmp.ne.s32.totalorder %s114, %s116
    %p120 = scmp.eq.s32.totalorder %s17, 0
    %p121 = por %p119, %p120
    %p122 = scmp.ne.s32.totalorder %s114, %s116
    %p123 = scmp.eq.s32.totalorder %s22, 1
    %p124 = por %p122, %p123
    %p125 = scmp.ne.s32.totalorder %s116, %s117
    %p126 = scmp.eq.s32.totalorder %s22, 0
    %p127 = por %p125, %p126
    %p128 = scmp.ne.s32.totalorder %s116, %s117
    %p129 = scmp.eq.s32.totalorder %s23, 1
    %p130 = por %p128, %p129
    %p132 = scmp.ne.s32.totalorder %s117, %s131
    %p133 = scmp.eq.s32.totalorder %s23, 0
    %p134 = por %p132, %p133
    %s136 = sadd.s32 %s135, 1
    %p139 = scmp.eq.s32.totalorder %s17, 1
    %p140 = scmp.ne.s32.totalorder %s135, %s137
    %p141 = scmp.eq.s32.totalorder %s17, 0
    %p142 = por %p140, %p141
    %p143 = scmp.ne.s32.totalorder %s135, %s137
    %p144 = scmp.eq.s32.totalorder %s22, 1
    %p145 = por %p143, %p144
    %p146 = scmp.ne.s32.totalorder %s137, %s138
    %p147 = scmp.eq.s32.totalorder %s22, 0
    %p148 = por %p146, %p147
    %p149 = scmp.ne.s32.totalorder %s137, %s138
    %p150 = scmp.eq.s32.totalorder %s23, 1
    %p151 = por %p149, %p150
    %p153 = scmp.ne.s32.totalorder %s138, %s152
    %p154 = scmp.eq.s32.totalorder %s23, 0
    %p155 = por %p153, %p154
    %s157 = sadd.s32 %s156, 1
    %p160 = scmp.eq.s32.totalorder %s17, 1
    %p161 = scmp.ne.s32.totalorder %s156, %s158
    %p162 = scmp.eq.s32.totalorder %s17, 0
    %p163 = por %p161, %p162
    %p164 = scmp.ne.s32.totalorder %s156, %s158
    %p165 = scmp.eq.s32.totalorder %s22, 1
    %p166 = por %p164, %p165
    %p167 = scmp.ne.s32.totalorder %s158, %s159
    %p168 = scmp.eq.s32.totalorder %s22, 0
    %p169 = por %p167, %p168
    %p170 = scmp.ne.s32.totalorder %s158, %s159
    %p171 = scmp.eq.s32.totalorder %s23, 1
    %p172 = por %p170, %p171
    %p174 = scmp.ne.s32.totalorder %s159, %s173
    %p175 = scmp.eq.s32.totalorder %s23, 0
    %p176 = por %p174, %p175
    %s178 = sadd.s32 %s177, 1
    %p181 = scmp.eq.s32.totalorder %s17, 1
    %p182 = scmp.ne.s32.totalorder %s177, %s179
    %p183 = scmp.eq.s32.totalorder %s17, 0
    %p184 = por %p182, %p183
    %p185 = scmp.ne.s32.totalorder %s177, %s179
    %p186 = scmp.eq.s32.totalorder %s22, 1
    %p187 = por %p185, %p186
    %p188 = scmp.ne.s32.totalorder %s179, %s180
    %p189 = scmp.eq.s32.totalorder %s22, 0
    %p190 = por %p188, %p189
    %p191 = scmp.ne.s32.totalorder %s179, %s180
    %p192 = scmp.eq.s32.totalorder %s23, 1
    %p193 = por %p191, %p192
    %p195 = scmp.ne.s32.totalorder %s180, %s194
    %p196 = scmp.eq.s32.totalorder %s23, 0
    %p197 = por %p195, %p196
    %s199 = sadd.s32 %s198, 1
    %p202 = scmp.eq.s32.totalorder %s17, 1
    %p203 = scmp.ne.s32.totalorder %s198, %s200
    %p204 = scmp.eq.s32.totalorder %s17, 0
    %p205 = por %p203, %p204
    %p206 = scmp.ne.s32.totalorder %s198, %s200
    %p207 = scmp.eq.s32.totalorder %s22, 1
    %p208 = por %p206, %p207
    %p209 = scmp.ne.s32.totalorder %s200, %s201
    %p210 = scmp.eq.s32.totalorder %s22, 0
    %p211 = por %p209, %p210
    %p212 = scmp.ne.s32.totalorder %s200, %s201
    %p213 = scmp.eq.s32.totalorder %s23, 1
    %p214 = por %p212, %p213
    %p216 = scmp.ne.s32.totalorder %s201, %s215
    %p217 = scmp.eq.s32.totalorder %s23, 0
    %p218 = por %p216, %p217
    %s220 = sadd.s32 %s219, 1
    %p223 = scmp.eq.s32.totalorder %s17, 1
    %p224 = scmp.ne.s32.totalorder %s219, %s221
    %p225 = scmp.eq.s32.totalorder %s17, 0
    %p226 = por %p224, %p225
    %p227 = scmp.ne.s32.totalorder %s219, %s221
    %p228 = scmp.eq.s32.totalorder %s22, 1
    %p229 = por %p227, %p228
    %p230 = scmp.ne.s32.totalorder %s221, %s222
    %p231 = scmp.eq.s32.totalorder %s22, 0
    %p232 = por %p230, %p231
    %p233 = scmp.ne.s32.totalorder %s221, %s222
    %p234 = scmp.eq.s32.totalorder %s23, 1
    %p235 = por %p233, %p234
    %p237 = scmp.ne.s32.totalorder %s222, %s236
    %p238 = scmp.eq.s32.totalorder %s23, 0
    %p239 = por %p237, %p238
    %s241 = sadd.s32 %s240, 1
    %p244 = scmp.eq.s32.totalorder %s17, 1
    %p245 = scmp.ne.s32.totalorder %s240, %s242
    %p246 = scmp.eq.s32.totalorder %s17, 0
    %p247 = por %p245, %p246
    %p248 = scmp.ne.s32.totalorder %s240, %s242
    %p249 = scmp.eq.s32.totalorder %s22, 1
    %p250 = por %p248, %p249
    %p251 = scmp.ne.s32.totalorder %s242, %s243
    %p252 = scmp.eq.s32.totalorder %s22, 0
    %p253 = por %p251, %p252
    %p254 = scmp.ne.s32.totalorder %s242, %s243
    %p255 = scmp.eq.s32.totalorder %s23, 1
    %p256 = por %p254, %p255
    %p258 = scmp.ne.s32.totalorder %s243, %s257
    %p259 = scmp.eq.s32.totalorder %s23, 0
    %p260 = por %p258, %p259
    %s261 = ssub.s32 %s17, %s24
    %p262 = scmp.eq.s32.totalorder %s261, 0
    %s264 = sadd.s32 %s263, 1
    %s265 = scalar_select %p262, %s263, %s264
    %p268 = pneg %p262
    %p269 = scmp.eq.s32.totalorder %s17, 1
    %p270 = por %p268, %p269
    %p271 = scmp.ne.s32.totalorder %s263, %s266
    %p272 = scmp.eq.s32.totalorder %s17, 0
    %p273 = por %p271, %p272
    %p274 = scmp.ne.s32.totalorder %s263, %s266
    %p275 = scmp.eq.s32.totalorder %s22, 1
    %p276 = por %p274, %p275
    %p277 = scmp.ne.s32.totalorder %s266, %s267
    %p278 = scmp.eq.s32.totalorder %s22, 0
    %p279 = por %p277, %p278
    %p280 = scmp.ne.s32.totalorder %s266, %s267
    %p281 = scmp.eq.s32.totalorder %s23, 1
    %p282 = por %p280, %p281
    %p284 = scmp.ne.s32.totalorder %s267, %s283
    %p285 = scmp.eq.s32.totalorder %s23, 0
    %p286 = por %p284, %p285
    %p287 = scmp.le.s32.totalorder 1, %s17
    %p288 = scmp.lt.s32.totalorder %s17, 3
    %p289 = pnand %p287, %p288
    %p290 = pneg %p289
    // Predicated region
    $region9: #{feature_extractor_forward.1} parent=5 // pred_check
      _
    $region10: #{feature_extractor_forward.1} parent=5 // pred_check_branch
      %292 = sbr.rel (%p289) target = $region12
    $region11: #{feature_extractor_forward.1} parent=5 // pred_region
      %s293 = ssub.s32 %s17, 1
      // Predicated region
      $region13: #{feature_extractor_forward.1} parent=11 // pred_check
        %p294 = pneg %p64
      $region14: #{feature_extractor_forward.1} parent=11 // pred_check_branch
        %296 = sbr.rel (%p294) target = $region16
      $region15: #{feature_extractor_forward.1} parent=11 // pred_region
        _
      $region16: #{feature_extractor_forward.1} parent=11 // pred_fallthru
        _
      // Predicated region
      $region17: #{feature_extractor_forward.1} parent=11 // pred_check
        %p297 = pneg %p85
      $region18: #{feature_extractor_forward.1} parent=11 // pred_check_branch
        %299 = sbr.rel (%p297) target = $region20
      $region19: #{feature_extractor_forward.1} parent=11 // pred_region
        _
      $region20: #{feature_extractor_forward.1} parent=11 // pred_fallthru
        _
      // Predicated region
      $region21: #{feature_extractor_forward.1} parent=11 // pred_check
        %p300 = pneg %p106
      $region22: #{feature_extractor_forward.1} parent=11 // pred_check_branch
        %302 = sbr.rel (%p300) target = $region24
      $region23: #{feature_extractor_forward.1} parent=11 // pred_region
        _
      $region24: #{feature_extractor_forward.1} parent=11 // pred_fallthru
        _
      // Predicated region
      $region25: #{feature_extractor_forward.1} parent=11 // pred_check
        %p303 = pneg %p127
      $region26: #{feature_extractor_forward.1} parent=11 // pred_check_branch
        %305 = sbr.rel (%p303) target = $region28
      $region27: #{feature_extractor_forward.1} parent=11 // pred_region
        _
      $region28: #{feature_extractor_forward.1} parent=11 // pred_fallthru
        _
      // Predicated region
      $region29: #{feature_extractor_forward.1} parent=11 // pred_check
        %p306 = pneg %p148
      $region30: #{feature_extractor_forward.1} parent=11 // pred_check_branch
        %308 = sbr.rel (%p306) target = $region32
      $region31: #{feature_extractor_forward.1} parent=11 // pred_region
        _
      $region32: #{feature_extractor_forward.1} parent=11 // pred_fallthru
        _
      // Predicated region
      $region33: #{feature_extractor_forward.1} parent=11 // pred_check
        %p309 = pneg %p169
      $region34: #{feature_extractor_forward.1} parent=11 // pred_check_branch
        %311 = sbr.rel (%p309) target = $region36
      $region35: #{feature_extractor_forward.1} parent=11 // pred_region
        _
      $region36: #{feature_extractor_forward.1} parent=11 // pred_fallthru
        _
      // Predicated region
      $region37: #{feature_extractor_forward.1} parent=11 // pred_check
        %p312 = pneg %p190
      $region38: #{feature_extractor_forward.1} parent=11 // pred_check_branch
        %314 = sbr.rel (%p312) target = $region40
      $region39: #{feature_extractor_forward.1} parent=11 // pred_region
        _
      $region40: #{feature_extractor_forward.1} parent=11 // pred_fallthru
        _
      // Predicated region
      $region41: #{feature_extractor_forward.1} parent=11 // pred_check
        %p315 = pneg %p211
      $region42: #{feature_extractor_forward.1} parent=11 // pred_check_branch
        %317 = sbr.rel (%p315) target = $region44
      $region43: #{feature_extractor_forward.1} parent=11 // pred_region
        _
      $region44: #{feature_extractor_forward.1} parent=11 // pred_fallthru
        _
      // Predicated region
      $region45: #{feature_extractor_forward.1} parent=11 // pred_check
        %p318 = pneg %p232
      $region46: #{feature_extractor_forward.1} parent=11 // pred_check_branch
        %320 = sbr.rel (%p318) target = $region48
      $region47: #{feature_extractor_forward.1} parent=11 // pred_region
        _
      $region48: #{feature_extractor_forward.1} parent=11 // pred_fallthru
        _
      // Predicated region
      $region49: #{feature_extractor_forward.1} parent=11 // pred_check
        %p321 = pneg %p253
      $region50: #{feature_extractor_forward.1} parent=11 // pred_check_branch
        %323 = sbr.rel (%p321) target = $region52
      $region51: #{feature_extractor_forward.1} parent=11 // pred_region
        _
      $region52: #{feature_extractor_forward.1} parent=11 // pred_fallthru
        _
    $region12: #{feature_extractor_forward.1} parent=5 // pred_fallthru
      _
    %p324 = scmp.lt.s32.totalorder %s17, 2
    // Predicated region
    $region53: #{feature_extractor_forward.1} parent=5 // pred_check
      %p325 = pneg %p324
    $region54: #{feature_extractor_forward.1} parent=5 // pred_check_branch
      %327 = sbr.rel (%p325) target = $region56
    $region55: #{feature_extractor_forward.1} parent=5 // pred_region
      // Predicated region
      $region57: #{feature_extractor_forward.1} parent=55 // pred_check
        %p328 = pneg %p37
      $region58: #{feature_extractor_forward.1} parent=55 // pred_check_branch
        %330 = sbr.rel (%p328) target = $region60
      $region59: #{feature_extractor_forward.1} parent=55 // pred_region
        %p331 = scmp.lt.s32.totalorder %s17, 1
        %s332 = scalar_select %p331, %s17, 1
        %s333 = smul.addr %s332, 16
        %s334 = smul.addr %s333, 8
        %s335 = scalar_lea.vmem %s0, %s334
      $region60: #{feature_extractor_forward.1} parent=55 // pred_fallthru
        _
    $region56: #{feature_extractor_forward.1} parent=5 // pred_fallthru
      _
    %p336 = scmp.le.s32.totalorder 1, %s17
    %p337 = scmp.lt.s32.totalorder %s17, 3
    %p338 = pnand %p336, %p337
    %p339 = pneg %p338
    // Predicated region
    $region61: #{feature_extractor_forward.1} parent=5 // pred_check
      _
    $region62: #{feature_extractor_forward.1} parent=5 // pred_check_branch
      %341 = sbr.rel (%p338) target = $region64
    $region63: #{feature_extractor_forward.1} parent=5 // pred_region
      %s342 = ssub.s32 %s17, 1
      %p343 = scmp.lt.s32.totalorder %s22, 1
      %s344 = scalar_select %p343, %s22, 1
      %s345 = smul.addr %s344, 16
      %s346 = smul.addr %s345, 8
      %s347 = scalar_lea.vmem %s0, %s346
      %p348 = pneg %p43
      %p349 = pneg %p40
      %p350 = pneg %p64
      %p351 = pneg %p61
      %p352 = pneg %p85
      %p353 = pneg %p82
      %p354 = pneg %p106
      %p355 = pneg %p103
      %p356 = pneg %p127
      %p357 = pneg %p124
      %p358 = pneg %p148
      %p359 = pneg %p145
      %p360 = pneg %p169
      %p361 = pneg %p166
      %p362 = pneg %p190
      %p363 = pneg %p187
      %p364 = pneg %p211
      %p365 = pneg %p208
      %p366 = pneg %p232
      %p367 = pneg %p229
      %p368 = pneg %p253
      %p369 = pneg %p250
      %p370 = pneg %p279
      %p371 = pneg %p276
      %p372 = scmp.lt.s32.totalorder %s22, 1
      %s373 = scalar_select %p372, %s22, 1
      %s374 = smul.addr %s373, 4
      %s375 = smul.addr %s374, 4
      %s376 = scalar_lea.vmem %s11, %s375
      %p377 = scmp.lt.s32.totalorder %s22, 1
      %s378 = scalar_select %p377, %s22, 1
      %s379 = smul.addr %s378, 16
      %s380 = smul.addr %s379, 8
      %s381 = scalar_lea.vmem %s0, %s380
      %p382 = scmp.lt.s32.totalorder %s22, 1
      %s383 = scalar_select %p382, %s22, 1
      %s384 = smul.addr %s383, 4
      %s385 = smul.addr %s384, 4
      %s386 = scalar_lea.vmem %s11, %s385
      %v387 = vld [vmem:[%s381] sm:$0xff]
      %v388 = vld [vmem:[%s381 + $0x8] sm:$0xff]
      %v389 = vld [vmem:[%s381 + $0x10] sm:$0xff]
      %v390 = vld [vmem:[%s381 + $0x18] sm:$0xff]
      %v391 = vld [vmem:[%s381 + $0x20] sm:$0xff]
      %v392 = vld [vmem:[%s381 + $0x28] sm:$0xff]
      %v393 = vld [vmem:[%s381 + $0x30] sm:$0xff]
      %v394 = vld [vmem:[%s381 + $0x38] sm:$0xff]
      %v395 = vld [vmem:[%s381 + $0x40] sm:$0xff]
      %v396 = vld [vmem:[%s381 + $0x48] sm:$0xff]
      %v397 = vld [vmem:[%s381 + $0x50] sm:$0xff]
      %v398 = vld [vmem:[%s381 + $0x58] sm:$0xff]
      %v399 = vld [vmem:[%s381 + $0x60] sm:$0xff]
      %v400 = vld [vmem:[%s381 + $0x68] sm:$0xff]
      %v401 = vld [vmem:[%s381 + $0x70] sm:$0xff]
      %v402 = vld [vmem:[%s381 + $0x78] sm:$0xff]
      %v403 = vld [vmem:[%s1] sm:$0x1]
      %405 = vset.pattern.permute.xlu0 0
      %406 = vperm.xlu0 %405, %v387
      %v407 = vpop.permute.xlu0 %406
      %410 = vset.pattern.permute.xlu0 0
      %411 = vperm.xlu0 %410, %v388
      %v412 = vpop.permute.xlu0 %411
      %415 = vset.pattern.permute.xlu0 0
      %416 = vperm.xlu0 %415, %v389
      %v417 = vpop.permute.xlu0 %416
      %420 = vset.pattern.permute.xlu0 0
      %421 = vperm.xlu0 %420, %v390
      %v422 = vpop.permute.xlu0 %421
      %425 = vset.pattern.permute.xlu0 0
      %426 = vperm.xlu0 %425, %v391
      %v427 = vpop.permute.xlu0 %426
      %430 = vset.pattern.permute.xlu0 0
      %431 = vperm.xlu0 %430, %v392
      %v432 = vpop.permute.xlu0 %431
      %435 = vset.pattern.permute.xlu0 0
      %436 = vperm.xlu0 %435, %v393
      %v437 = vpop.permute.xlu0 %436
      %440 = vset.pattern.permute.xlu0 0
      %441 = vperm.xlu0 %440, %v394
      %v442 = vpop.permute.xlu0 %441
      %445 = vset.pattern.permute.xlu0 0
      %446 = vperm.xlu0 %445, %v395
      %v447 = vpop.permute.xlu0 %446
      %450 = vset.pattern.permute.xlu0 0
      %451 = vperm.xlu0 %450, %v396
      %v452 = vpop.permute.xlu0 %451
      %455 = vset.pattern.permute.xlu0 0
      %456 = vperm.xlu0 %455, %v397
      %v457 = vpop.permute.xlu0 %456
      %460 = vset.pattern.permute.xlu0 0
      %461 = vperm.xlu0 %460, %v398
      %v462 = vpop.permute.xlu0 %461
      %465 = vset.pattern.permute.xlu0 0
      %466 = vperm.xlu0 %465, %v399
      %v467 = vpop.permute.xlu0 %466
      %470 = vset.pattern.permute.xlu0 0
      %471 = vperm.xlu0 %470, %v400
      %v472 = vpop.permute.xlu0 %471
      %475 = vset.pattern.permute.xlu0 0
      %476 = vperm.xlu0 %475, %v401
      %v477 = vpop.permute.xlu0 %476
      %480 = vset.pattern.permute.xlu0 0
      %481 = vperm.xlu0 %480, %v402
      %v482 = vpop.permute.xlu0 %481
      %v484 = vperm.slane %v403, 0
      %v485 = vmul.f32 %v407, %v484
      %v486 = vmul.f32 %v412, %v484
      %v487 = vmul.f32 %v417, %v484
      %v488 = vmul.f32 %v422, %v484
      %v489 = vmul.f32 %v427, %v484
      %v490 = vmul.f32 %v432, %v484
      %v491 = vmul.f32 %v437, %v484
      %v492 = vmul.f32 %v442, %v484
      %v493 = vmul.f32 %v447, %v484
      %v494 = vmul.f32 %v452, %v484
      %v495 = vmul.f32 %v457, %v484
      %v496 = vmul.f32 %v462, %v484
      %v497 = vmul.f32 %v467, %v484
      %v498 = vmul.f32 %v472, %v484
      %v499 = vmul.f32 %v477, %v484
      %v500 = vmul.f32 %v482, %v484
      %v501 = vadd.f32 %v485, 0.0
      %v502 = vadd.f32 %v486, 0.0
      %v503 = vadd.f32 %v487, 0.0
      %v504 = vadd.f32 %v488, 0.0
      %v505 = vadd.f32 %v489, 0.0
      %v506 = vadd.f32 %v490, 0.0
      %v507 = vadd.f32 %v491, 0.0
      %v508 = vadd.f32 %v492, 0.0
      %v509 = vadd.f32 %v493, 0.0
      %v510 = vadd.f32 %v494, 0.0
      %v511 = vadd.f32 %v495, 0.0
      %v512 = vadd.f32 %v496, 0.0
      %v513 = vadd.f32 %v497, 0.0
      %v514 = vadd.f32 %v498, 0.0
      %v515 = vadd.f32 %v499, 0.0
      %v516 = vadd.f32 %v500, 0.0
      %vm517 = vcmask 1046528
      %v518 = vrot.slane %v387, 1
      %v519 = vrot.slane %v388, 1
      %v520 = vsel %vm517, %v518, %v519
      %v521 = vrot.slane %v389, 1
      %v522 = vsel %vm517, %v519, %v521
      %v523 = vrot.slane %v390, 1
      %v524 = vsel %vm517, %v521, %v523
      %v525 = vrot.slane %v391, 1
      %v526 = vsel %vm517, %v523, %v525
      %v527 = vrot.slane %v392, 1
      %v528 = vsel %vm517, %v525, %v527
      %v529 = vrot.slane %v393, 1
      %v530 = vsel %vm517, %v527, %v529
      %v531 = vrot.slane %v394, 1
      %v532 = vsel %vm517, %v529, %v531
      %v533 = vrot.slane %v395, 1
      %v534 = vsel %vm517, %v531, %v533
      %v535 = vrot.slane %v396, 1
      %v536 = vsel %vm517, %v533, %v535
      %v537 = vrot.slane %v397, 1
      %v538 = vsel %vm517, %v535, %v537
      %v539 = vrot.slane %v398, 1
      %v540 = vsel %vm517, %v537, %v539
      %v541 = vrot.slane %v399, 1
      %v542 = vsel %vm517, %v539, %v541
      %v543 = vrot.slane %v400, 1
      %v544 = vsel %vm517, %v541, %v543
      %v545 = vrot.slane %v401, 1
      %v546 = vsel %vm517, %v543, %v545
      %v547 = vrot.slane %v402, 1
      %v548 = vsel %vm517, %v545, %v547
      %v550 = vsel %vm517, %v547, 0.0
      %v551 = vld [vmem:[%s1 + $0x1] sm:$0x1]
      %552 = vset.pattern.permute.xlu0 0
      %553 = vperm.xlu0 %552, %v520
      %v554 = vpop.permute.xlu0 %553
      %556 = vset.pattern.permute.xlu0 0
      %557 = vperm.xlu0 %556, %v522
      %v558 = vpop.permute.xlu0 %557
      %560 = vset.pattern.permute.xlu0 0
      %561 = vperm.xlu0 %560, %v524
      %v562 = vpop.permute.xlu0 %561
      %564 = vset.pattern.permute.xlu0 0
      %565 = vperm.xlu0 %564, %v526
      %v566 = vpop.permute.xlu0 %565
      %568 = vset.pattern.permute.xlu0 0
      %569 = vperm.xlu0 %568, %v528
      %v570 = vpop.permute.xlu0 %569
      %572 = vset.pattern.permute.xlu0 0
      %573 = vperm.xlu0 %572, %v530
      %v574 = vpop.permute.xlu0 %573
      %576 = vset.pattern.permute.xlu0 0
      %577 = vperm.xlu0 %576, %v532
      %v578 = vpop.permute.xlu0 %577
      %580 = vset.pattern.permute.xlu0 0
      %581 = vperm.xlu0 %580, %v534
      %v582 = vpop.permute.xlu0 %581
      %584 = vset.pattern.permute.xlu0 0
      %585 = vperm.xlu0 %584, %v536
      %v586 = vpop.permute.xlu0 %585
      %588 = vset.pattern.permute.xlu0 0
      %589 = vperm.xlu0 %588, %v538
      %v590 = vpop.permute.xlu0 %589
      %592 = vset.pattern.permute.xlu0 0
      %593 = vperm.xlu0 %592, %v540
      %v594 = vpop.permute.xlu0 %593
      %596 = vset.pattern.permute.xlu0 0
      %597 = vperm.xlu0 %596, %v542
      %v598 = vpop.permute.xlu0 %597
      %600 = vset.pattern.permute.xlu0 0
      %601 = vperm.xlu0 %600, %v544
      %v602 = vpop.permute.xlu0 %601
      %604 = vset.pattern.permute.xlu0 0
      %605 = vperm.xlu0 %604, %v546
      %v606 = vpop.permute.xlu0 %605
      %608 = vset.pattern.permute.xlu0 0
      %609 = vperm.xlu0 %608, %v548
      %v610 = vpop.permute.xlu0 %609
      %613 = vset.pattern.permute.xlu0 0
      %614 = vperm.xlu0 %613, %v550
      %v615 = vpop.permute.xlu0 %614
      %v617 = vperm.slane %v551, 0
      %v618 = vmul.f32 %v554, %v617
      %v619 = vmul.f32 %v558, %v617
      %v620 = vmul.f32 %v562, %v617
      %v621 = vmul.f32 %v566, %v617
      %v622 = vmul.f32 %v570, %v617
      %v623 = vmul.f32 %v574, %v617
      %v624 = vmul.f32 %v578, %v617
      %v625 = vmul.f32 %v582, %v617
      %v626 = vmul.f32 %v586, %v617
      %v627 = vmul.f32 %v590, %v617
      %v628 = vmul.f32 %v594, %v617
      %v629 = vmul.f32 %v598, %v617
      %v630 = vmul.f32 %v602, %v617
      %v631 = vmul.f32 %v606, %v617
      %v632 = vmul.f32 %v610, %v617
      %v633 = vmul.f32 %v615, %v617
      %v634 = vadd.f32 %v501, %v618
      %v635 = vadd.f32 %v502, %v619
      %v636 = vadd.f32 %v503, %v620
      %v637 = vadd.f32 %v504, %v621
      %v638 = vadd.f32 %v505, %v622
      %v639 = vadd.f32 %v506, %v623
      %v640 = vadd.f32 %v507, %v624
      %v641 = vadd.f32 %v508, %v625
      %v642 = vadd.f32 %v509, %v626
      %v643 = vadd.f32 %v510, %v627
      %v644 = vadd.f32 %v511, %v628
      %v645 = vadd.f32 %v512, %v629
      %v646 = vadd.f32 %v513, %v630
      %v647 = vadd.f32 %v514, %v631
      %v648 = vadd.f32 %v515, %v632
      %v649 = vadd.f32 %v516, %v633
      %vm650 = vcmask 1045504
      %v651 = vrot.slane %v387, 2
      %v652 = vrot.slane %v388, 2
      %v653 = vsel %vm650, %v651, %v652
      %v654 = vrot.slane %v389, 2
      %v655 = vsel %vm650, %v652, %v654
      %v656 = vrot.slane %v390, 2
      %v657 = vsel %vm650, %v654, %v656
      %v658 = vrot.slane %v391, 2
      %v659 = vsel %vm650, %v656, %v658
      %v660 = vrot.slane %v392, 2
      %v661 = vsel %vm650, %v658, %v660
      %v662 = vrot.slane %v393, 2
      %v663 = vsel %vm650, %v660, %v662
      %v664 = vrot.slane %v394, 2
      %v665 = vsel %vm650, %v662, %v664
      %v666 = vrot.slane %v395, 2
      %v667 = vsel %vm650, %v664, %v666
      %v668 = vrot.slane %v396, 2
      %v669 = vsel %vm650, %v666, %v668
      %v670 = vrot.slane %v397, 2
      %v671 = vsel %vm650, %v668, %v670
      %v672 = vrot.slane %v398, 2
      %v673 = vsel %vm650, %v670, %v672
      %v674 = vrot.slane %v399, 2
      %v675 = vsel %vm650, %v672, %v674
      %v676 = vrot.slane %v400, 2
      %v677 = vsel %vm650, %v674, %v676
      %v678 = vrot.slane %v401, 2
      %v679 = vsel %vm650, %v676, %v678
      %v680 = vrot.slane %v402, 2
      %v681 = vsel %vm650, %v678, %v680
      %v683 = vsel %vm650, %v680, 0.0
      %v684 = vld [vmem:[%s1 + $0x2] sm:$0x1]
      %685 = vset.pattern.permute.xlu0 0
      %686 = vperm.xlu0 %685, %v653
      %v687 = vpop.permute.xlu0 %686
      %689 = vset.pattern.permute.xlu0 0
      %690 = vperm.xlu0 %689, %v655
      %v691 = vpop.permute.xlu0 %690
      %693 = vset.pattern.permute.xlu0 0
      %694 = vperm.xlu0 %693, %v657
      %v695 = vpop.permute.xlu0 %694
      %697 = vset.pattern.permute.xlu0 0
      %698 = vperm.xlu0 %697, %v659
      %v699 = vpop.permute.xlu0 %698
      %701 = vset.pattern.permute.xlu0 0
      %702 = vperm.xlu0 %701, %v661
      %v703 = vpop.permute.xlu0 %702
      %705 = vset.pattern.permute.xlu0 0
      %706 = vperm.xlu0 %705, %v663
      %v707 = vpop.permute.xlu0 %706
      %709 = vset.pattern.permute.xlu0 0
      %710 = vperm.xlu0 %709, %v665
      %v711 = vpop.permute.xlu0 %710
      %713 = vset.pattern.permute.xlu0 0
      %714 = vperm.xlu0 %713, %v667
      %v715 = vpop.permute.xlu0 %714
      %717 = vset.pattern.permute.xlu0 0
      %718 = vperm.xlu0 %717, %v669
      %v719 = vpop.permute.xlu0 %718
      %721 = vset.pattern.permute.xlu0 0
      %722 = vperm.xlu0 %721, %v671
      %v723 = vpop.permute.xlu0 %722
      %725 = vset.pattern.permute.xlu0 0
      %726 = vperm.xlu0 %725, %v673
      %v727 = vpop.permute.xlu0 %726
      %729 = vset.pattern.permute.xlu0 0
      %730 = vperm.xlu0 %729, %v675
      %v731 = vpop.permute.xlu0 %730
      %733 = vset.pattern.permute.xlu0 0
      %734 = vperm.xlu0 %733, %v677
      %v735 = vpop.permute.xlu0 %734
      %737 = vset.pattern.permute.xlu0 0
      %738 = vperm.xlu0 %737, %v679
      %v739 = vpop.permute.xlu0 %738
      %741 = vset.pattern.permute.xlu0 0
      %742 = vperm.xlu0 %741, %v681
      %v743 = vpop.permute.xlu0 %742
      %746 = vset.pattern.permute.xlu0 0
      %747 = vperm.xlu0 %746, %v683
      %v748 = vpop.permute.xlu0 %747
      %v750 = vperm.slane %v684, 0
      %v751 = vmul.f32 %v687, %v750
      %v752 = vmul.f32 %v691, %v750
      %v753 = vmul.f32 %v695, %v750
      %v754 = vmul.f32 %v699, %v750
      %v755 = vmul.f32 %v703, %v750
      %v756 = vmul.f32 %v707, %v750
      %v757 = vmul.f32 %v711, %v750
      %v758 = vmul.f32 %v715, %v750
      %v759 = vmul.f32 %v719, %v750
      %v760 = vmul.f32 %v723, %v750
      %v761 = vmul.f32 %v727, %v750
      %v762 = vmul.f32 %v731, %v750
      %v763 = vmul.f32 %v735, %v750
      %v764 = vmul.f32 %v739, %v750
      %v765 = vmul.f32 %v743, %v750
      %v766 = vmul.f32 %v748, %v750
      %v767 = vadd.f32 %v634, %v751
      %v768 = vadd.f32 %v635, %v752
      %v769 = vadd.f32 %v636, %v753
      %v770 = vadd.f32 %v637, %v754
      %v771 = vadd.f32 %v638, %v755
      %v772 = vadd.f32 %v639, %v756
      %v773 = vadd.f32 %v640, %v757
      %v774 = vadd.f32 %v641, %v758
      %v775 = vadd.f32 %v642, %v759
      %v776 = vadd.f32 %v643, %v760
      %v777 = vadd.f32 %v644, %v761
      %v778 = vadd.f32 %v645, %v762
      %v779 = vadd.f32 %v646, %v763
      %v780 = vadd.f32 %v647, %v764
      %v781 = vadd.f32 %v648, %v765
      %v782 = vadd.f32 %v649, %v766
      %vm783 = vcmask 1044480
      %v784 = vrot.slane %v387, 3
      %v785 = vrot.slane %v388, 3
      %v786 = vsel %vm783, %v784, %v785
      %v787 = vrot.slane %v389, 3
      %v788 = vsel %vm783, %v785, %v787
      %v789 = vrot.slane %v390, 3
      %v790 = vsel %vm783, %v787, %v789
      %v791 = vrot.slane %v391, 3
      %v792 = vsel %vm783, %v789, %v791
      %v793 = vrot.slane %v392, 3
      %v794 = vsel %vm783, %v791, %v793
      %v795 = vrot.slane %v393, 3
      %v796 = vsel %vm783, %v793, %v795
      %v797 = vrot.slane %v394, 3
      %v798 = vsel %vm783, %v795, %v797
      %v799 = vrot.slane %v395, 3
      %v800 = vsel %vm783, %v797, %v799
      %v801 = vrot.slane %v396, 3
      %v802 = vsel %vm783, %v799, %v801
      %v803 = vrot.slane %v397, 3
      %v804 = vsel %vm783, %v801, %v803
      %v805 = vrot.slane %v398, 3
      %v806 = vsel %vm783, %v803, %v805
      %v807 = vrot.slane %v399, 3
      %v808 = vsel %vm783, %v805, %v807
      %v809 = vrot.slane %v400, 3
      %v810 = vsel %vm783, %v807, %v809
      %v811 = vrot.slane %v401, 3
      %v812 = vsel %vm783, %v809, %v811
      %v813 = vrot.slane %v402, 3
      %v814 = vsel %vm783, %v811, %v813
      %v816 = vsel %vm783, %v813, 0.0
      %v817 = vld [vmem:[%s1 + $0x3] sm:$0x1]
      %818 = vset.pattern.permute.xlu0 0
      %819 = vperm.xlu0 %818, %v786
      %v820 = vpop.permute.xlu0 %819
      %822 = vset.pattern.permute.xlu0 0
      %823 = vperm.xlu0 %822, %v788
      %v824 = vpop.permute.xlu0 %823
      %826 = vset.pattern.permute.xlu0 0
      %827 = vperm.xlu0 %826, %v790
      %v828 = vpop.permute.xlu0 %827
      %830 = vset.pattern.permute.xlu0 0
      %831 = vperm.xlu0 %830, %v792
      %v832 = vpop.permute.xlu0 %831
      %834 = vset.pattern.permute.xlu0 0
      %835 = vperm.xlu0 %834, %v794
      %v836 = vpop.permute.xlu0 %835
      %838 = vset.pattern.permute.xlu0 0
      %839 = vperm.xlu0 %838, %v796
      %v840 = vpop.permute.xlu0 %839
      %842 = vset.pattern.permute.xlu0 0
      %843 = vperm.xlu0 %842, %v798
      %v844 = vpop.permute.xlu0 %843
      %846 = vset.pattern.permute.xlu0 0
      %847 = vperm.xlu0 %846, %v800
      %v848 = vpop.permute.xlu0 %847
      %850 = vset.pattern.permute.xlu0 0
      %851 = vperm.xlu0 %850, %v802
      %v852 = vpop.permute.xlu0 %851
      %854 = vset.pattern.permute.xlu0 0
      %855 = vperm.xlu0 %854, %v804
      %v856 = vpop.permute.xlu0 %855
      %858 = vset.pattern.permute.xlu0 0
      %859 = vperm.xlu0 %858, %v806
      %v860 = vpop.permute.xlu0 %859
      %862 = vset.pattern.permute.xlu0 0
      %863 = vperm.xlu0 %862, %v808
      %v864 = vpop.permute.xlu0 %863
      %866 = vset.pattern.permute.xlu0 0
      %867 = vperm.xlu0 %866, %v810
      %v868 = vpop.permute.xlu0 %867
      %870 = vset.pattern.permute.xlu0 0
      %871 = vperm.xlu0 %870, %v812
      %v872 = vpop.permute.xlu0 %871
      %874 = vset.pattern.permute.xlu0 0
      %875 = vperm.xlu0 %874, %v814
      %v876 = vpop.permute.xlu0 %875
      %879 = vset.pattern.permute.xlu0 0
      %880 = vperm.xlu0 %879, %v816
      %v881 = vpop.permute.xlu0 %880
      %v883 = vperm.slane %v817, 0
      %v884 = vmul.f32 %v820, %v883
      %v885 = vmul.f32 %v824, %v883
      %v886 = vmul.f32 %v828, %v883
      %v887 = vmul.f32 %v832, %v883
      %v888 = vmul.f32 %v836, %v883
      %v889 = vmul.f32 %v840, %v883
      %v890 = vmul.f32 %v844, %v883
      %v891 = vmul.f32 %v848, %v883
      %v892 = vmul.f32 %v852, %v883
      %v893 = vmul.f32 %v856, %v883
      %v894 = vmul.f32 %v860, %v883
      %v895 = vmul.f32 %v864, %v883
      %v896 = vmul.f32 %v868, %v883
      %v897 = vmul.f32 %v872, %v883
      %v898 = vmul.f32 %v876, %v883
      %v899 = vmul.f32 %v881, %v883
      %v900 = vadd.f32 %v767, %v884
      %v901 = vadd.f32 %v768, %v885
      %v902 = vadd.f32 %v769, %v886
      %v903 = vadd.f32 %v770, %v887
      %v904 = vadd.f32 %v771, %v888
      %v905 = vadd.f32 %v772, %v889
      %v906 = vadd.f32 %v773, %v890
      %v907 = vadd.f32 %v774, %v891
      %v908 = vadd.f32 %v775, %v892
      %v909 = vadd.f32 %v776, %v893
      %v910 = vadd.f32 %v777, %v894
      %v911 = vadd.f32 %v778, %v895
      %v912 = vadd.f32 %v779, %v896
      %v913 = vadd.f32 %v780, %v897
      %v914 = vadd.f32 %v781, %v898
      %v915 = vadd.f32 %v782, %v899
      %vm916 = vcmask 1043456
      %v917 = vrot.slane %v387, 4
      %v918 = vrot.slane %v388, 4
      %v919 = vsel %vm916, %v917, %v918
      %v920 = vrot.slane %v389, 4
      %v921 = vsel %vm916, %v918, %v920
      %v922 = vrot.slane %v390, 4
      %v923 = vsel %vm916, %v920, %v922
      %v924 = vrot.slane %v391, 4
      %v925 = vsel %vm916, %v922, %v924
      %v926 = vrot.slane %v392, 4
      %v927 = vsel %vm916, %v924, %v926
      %v928 = vrot.slane %v393, 4
      %v929 = vsel %vm916, %v926, %v928
      %v930 = vrot.slane %v394, 4
      %v931 = vsel %vm916, %v928, %v930
      %v932 = vrot.slane %v395, 4
      %v933 = vsel %vm916, %v930, %v932
      %v934 = vrot.slane %v396, 4
      %v935 = vsel %vm916, %v932, %v934
      %v936 = vrot.slane %v397, 4
      %v937 = vsel %vm916, %v934, %v936
      %v938 = vrot.slane %v398, 4
      %v939 = vsel %vm916, %v936, %v938
      %v940 = vrot.slane %v399, 4
      %v941 = vsel %vm916, %v938, %v940
      %v942 = vrot.slane %v400, 4
      %v943 = vsel %vm916, %v940, %v942
      %v944 = vrot.slane %v401, 4
      %v945 = vsel %vm916, %v942, %v944
      %v946 = vrot.slane %v402, 4
      %v947 = vsel %vm916, %v944, %v946
      %v949 = vsel %vm916, %v946, 0.0
      %v950 = vld [vmem:[%s1 + $0x4] sm:$0x1]
      %951 = vset.pattern.permute.xlu0 0
      %952 = vperm.xlu0 %951, %v919
      %v953 = vpop.permute.xlu0 %952
      %955 = vset.pattern.permute.xlu0 0
      %956 = vperm.xlu0 %955, %v921
      %v957 = vpop.permute.xlu0 %956
      %959 = vset.pattern.permute.xlu0 0
      %960 = vperm.xlu0 %959, %v923
      %v961 = vpop.permute.xlu0 %960
      %963 = vset.pattern.permute.xlu0 0
      %964 = vperm.xlu0 %963, %v925
      %v965 = vpop.permute.xlu0 %964
      %967 = vset.pattern.permute.xlu0 0
      %968 = vperm.xlu0 %967, %v927
      %v969 = vpop.permute.xlu0 %968
      %971 = vset.pattern.permute.xlu0 0
      %972 = vperm.xlu0 %971, %v929
      %v973 = vpop.permute.xlu0 %972
      %975 = vset.pattern.permute.xlu0 0
      %976 = vperm.xlu0 %975, %v931
      %v977 = vpop.permute.xlu0 %976
      %979 = vset.pattern.permute.xlu0 0
      %980 = vperm.xlu0 %979, %v933
      %v981 = vpop.permute.xlu0 %980
      %983 = vset.pattern.permute.xlu0 0
      %984 = vperm.xlu0 %983, %v935
      %v985 = vpop.permute.xlu0 %984
      %987 = vset.pattern.permute.xlu0 0
      %988 = vperm.xlu0 %987, %v937
      %v989 = vpop.permute.xlu0 %988
      %991 = vset.pattern.permute.xlu0 0
      %992 = vperm.xlu0 %991, %v939
      %v993 = vpop.permute.xlu0 %992
      %995 = vset.pattern.permute.xlu0 0
      %996 = vperm.xlu0 %995, %v941
      %v997 = vpop.permute.xlu0 %996
      %999 = vset.pattern.permute.xlu0 0
      %1000 = vperm.xlu0 %999, %v943
      %v1001 = vpop.permute.xlu0 %1000
      %1003 = vset.pattern.permute.xlu0 0
      %1004 = vperm.xlu0 %1003, %v945
      %v1005 = vpop.permute.xlu0 %1004
      %1007 = vset.pattern.permute.xlu0 0
      %1008 = vperm.xlu0 %1007, %v947
      %v1009 = vpop.permute.xlu0 %1008
      %1012 = vset.pattern.permute.xlu0 0
      %1013 = vperm.xlu0 %1012, %v949
      %v1014 = vpop.permute.xlu0 %1013
      %v1016 = vperm.slane %v950, 0
      %v1017 = vmul.f32 %v953, %v1016
      %v1018 = vmul.f32 %v957, %v1016
      %v1019 = vmul.f32 %v961, %v1016
      %v1020 = vmul.f32 %v965, %v1016
      %v1021 = vmul.f32 %v969, %v1016
      %v1022 = vmul.f32 %v973, %v1016
      %v1023 = vmul.f32 %v977, %v1016
      %v1024 = vmul.f32 %v981, %v1016
      %v1025 = vmul.f32 %v985, %v1016
      %v1026 = vmul.f32 %v989, %v1016
      %v1027 = vmul.f32 %v993, %v1016
      %v1028 = vmul.f32 %v997, %v1016
      %v1029 = vmul.f32 %v1001, %v1016
      %v1030 = vmul.f32 %v1005, %v1016
      %v1031 = vmul.f32 %v1009, %v1016
      %v1032 = vmul.f32 %v1014, %v1016
      %v1033 = vadd.f32 %v900, %v1017
      %v1034 = vadd.f32 %v901, %v1018
      %v1035 = vadd.f32 %v902, %v1019
      %v1036 = vadd.f32 %v903, %v1020
      %v1037 = vadd.f32 %v904, %v1021
      %v1038 = vadd.f32 %v905, %v1022
      %v1039 = vadd.f32 %v906, %v1023
      %v1040 = vadd.f32 %v907, %v1024
      %v1041 = vadd.f32 %v908, %v1025
      %v1042 = vadd.f32 %v909, %v1026
      %v1043 = vadd.f32 %v910, %v1027
      %v1044 = vadd.f32 %v911, %v1028
      %v1045 = vadd.f32 %v912, %v1029
      %v1046 = vadd.f32 %v913, %v1030
      %v1047 = vadd.f32 %v914, %v1031
      %v1048 = vadd.f32 %v915, %v1032
      %vm1049 = vcmask 1042432
      %v1050 = vrot.slane %v387, 5
      %v1051 = vrot.slane %v388, 5
      %v1052 = vsel %vm1049, %v1050, %v1051
      %v1053 = vrot.slane %v389, 5
      %v1054 = vsel %vm1049, %v1051, %v1053
      %v1055 = vrot.slane %v390, 5
      %v1056 = vsel %vm1049, %v1053, %v1055
      %v1057 = vrot.slane %v391, 5
      %v1058 = vsel %vm1049, %v1055, %v1057
      %v1059 = vrot.slane %v392, 5
      %v1060 = vsel %vm1049, %v1057, %v1059
      %v1061 = vrot.slane %v393, 5
      %v1062 = vsel %vm1049, %v1059, %v1061
      %v1063 = vrot.slane %v394, 5
      %v1064 = vsel %vm1049, %v1061, %v1063
      %v1065 = vrot.slane %v395, 5
      %v1066 = vsel %vm1049, %v1063, %v1065
      %v1067 = vrot.slane %v396, 5
      %v1068 = vsel %vm1049, %v1065, %v1067
      %v1069 = vrot.slane %v397, 5
      %v1070 = vsel %vm1049, %v1067, %v1069
      %v1071 = vrot.slane %v398, 5
      %v1072 = vsel %vm1049, %v1069, %v1071
      %v1073 = vrot.slane %v399, 5
      %v1074 = vsel %vm1049, %v1071, %v1073
      %v1075 = vrot.slane %v400, 5
      %v1076 = vsel %vm1049, %v1073, %v1075
      %v1077 = vrot.slane %v401, 5
      %v1078 = vsel %vm1049, %v1075, %v1077
      %v1079 = vrot.slane %v402, 5
      %v1080 = vsel %vm1049, %v1077, %v1079
      %v1082 = vsel %vm1049, %v1079, 0.0
      %v1083 = vld [vmem:[%s1 + $0x5] sm:$0x1]
      %1084 = vset.pattern.permute.xlu0 0
      %1085 = vperm.xlu0 %1084, %v1052
      %v1086 = vpop.permute.xlu0 %1085
      %1088 = vset.pattern.permute.xlu0 0
      %1089 = vperm.xlu0 %1088, %v1054
      %v1090 = vpop.permute.xlu0 %1089
      %1092 = vset.pattern.permute.xlu0 0
      %1093 = vperm.xlu0 %1092, %v1056
      %v1094 = vpop.permute.xlu0 %1093
      %1096 = vset.pattern.permute.xlu0 0
      %1097 = vperm.xlu0 %1096, %v1058
      %v1098 = vpop.permute.xlu0 %1097
      %1100 = vset.pattern.permute.xlu0 0
      %1101 = vperm.xlu0 %1100, %v1060
      %v1102 = vpop.permute.xlu0 %1101
      %1104 = vset.pattern.permute.xlu0 0
      %1105 = vperm.xlu0 %1104, %v1062
      %v1106 = vpop.permute.xlu0 %1105
      %1108 = vset.pattern.permute.xlu0 0
      %1109 = vperm.xlu0 %1108, %v1064
      %v1110 = vpop.permute.xlu0 %1109
      %1112 = vset.pattern.permute.xlu0 0
      %1113 = vperm.xlu0 %1112, %v1066
      %v1114 = vpop.permute.xlu0 %1113
      %1116 = vset.pattern.permute.xlu0 0
      %1117 = vperm.xlu0 %1116, %v1068
      %v1118 = vpop.permute.xlu0 %1117
      %1120 = vset.pattern.permute.xlu0 0
      %1121 = vperm.xlu0 %1120, %v1070
      %v1122 = vpop.permute.xlu0 %1121
      %1124 = vset.pattern.permute.xlu0 0
      %1125 = vperm.xlu0 %1124, %v1072
      %v1126 = vpop.permute.xlu0 %1125
      %1128 = vset.pattern.permute.xlu0 0
      %1129 = vperm.xlu0 %1128, %v1074
      %v1130 = vpop.permute.xlu0 %1129
      %1132 = vset.pattern.permute.xlu0 0
      %1133 = vperm.xlu0 %1132, %v1076
      %v1134 = vpop.permute.xlu0 %1133
      %1136 = vset.pattern.permute.xlu0 0
      %1137 = vperm.xlu0 %1136, %v1078
      %v1138 = vpop.permute.xlu0 %1137
      %1140 = vset.pattern.permute.xlu0 0
      %1141 = vperm.xlu0 %1140, %v1080
      %v1142 = vpop.permute.xlu0 %1141
      %1145 = vset.pattern.permute.xlu0 0
      %1146 = vperm.xlu0 %1145, %v1082
      %v1147 = vpop.permute.xlu0 %1146
      %v1149 = vperm.slane %v1083, 0
      %v1150 = vmul.f32 %v1086, %v1149
      %v1151 = vmul.f32 %v1090, %v1149
      %v1152 = vmul.f32 %v1094, %v1149
      %v1153 = vmul.f32 %v1098, %v1149
      %v1154 = vmul.f32 %v1102, %v1149
      %v1155 = vmul.f32 %v1106, %v1149
      %v1156 = vmul.f32 %v1110, %v1149
      %v1157 = vmul.f32 %v1114, %v1149
      %v1158 = vmul.f32 %v1118, %v1149
      %v1159 = vmul.f32 %v1122, %v1149
      %v1160 = vmul.f32 %v1126, %v1149
      %v1161 = vmul.f32 %v1130, %v1149
      %v1162 = vmul.f32 %v1134, %v1149
      %v1163 = vmul.f32 %v1138, %v1149
      %v1164 = vmul.f32 %v1142, %v1149
      %v1165 = vmul.f32 %v1147, %v1149
      %v1166 = vadd.f32 %v1033, %v1150
      %v1167 = vadd.f32 %v1034, %v1151
      %v1168 = vadd.f32 %v1035, %v1152
      %v1169 = vadd.f32 %v1036, %v1153
      %v1170 = vadd.f32 %v1037, %v1154
      %v1171 = vadd.f32 %v1038, %v1155
      %v1172 = vadd.f32 %v1039, %v1156
      %v1173 = vadd.f32 %v1040, %v1157
      %v1174 = vadd.f32 %v1041, %v1158
      %v1175 = vadd.f32 %v1042, %v1159
      %v1176 = vadd.f32 %v1043, %v1160
      %v1177 = vadd.f32 %v1044, %v1161
      %v1178 = vadd.f32 %v1045, %v1162
      %v1179 = vadd.f32 %v1046, %v1163
      %v1180 = vadd.f32 %v1047, %v1164
      %v1181 = vadd.f32 %v1048, %v1165
      %vm1182 = vcmask 1041408
      %v1183 = vrot.slane %v387, 6
      %v1184 = vrot.slane %v388, 6
      %v1185 = vsel %vm1182, %v1183, %v1184
      %v1186 = vrot.slane %v389, 6
      %v1187 = vsel %vm1182, %v1184, %v1186
      %v1188 = vrot.slane %v390, 6
      %v1189 = vsel %vm1182, %v1186, %v1188
      %v1190 = vrot.slane %v391, 6
      %v1191 = vsel %vm1182, %v1188, %v1190
      %v1192 = vrot.slane %v392, 6
      %v1193 = vsel %vm1182, %v1190, %v1192
      %v1194 = vrot.slane %v393, 6
      %v1195 = vsel %vm1182, %v1192, %v1194
      %v1196 = vrot.slane %v394, 6
      %v1197 = vsel %vm1182, %v1194, %v1196
      %v1198 = vrot.slane %v395, 6
      %v1199 = vsel %vm1182, %v1196, %v1198
      %v1200 = vrot.slane %v396, 6
      %v1201 = vsel %vm1182, %v1198, %v1200
      %v1202 = vrot.slane %v397, 6
      %v1203 = vsel %vm1182, %v1200, %v1202
      %v1204 = vrot.slane %v398, 6
      %v1205 = vsel %vm1182, %v1202, %v1204
      %v1206 = vrot.slane %v399, 6
      %v1207 = vsel %vm1182, %v1204, %v1206
      %v1208 = vrot.slane %v400, 6
      %v1209 = vsel %vm1182, %v1206, %v1208
      %v1210 = vrot.slane %v401, 6
      %v1211 = vsel %vm1182, %v1208, %v1210
      %v1212 = vrot.slane %v402, 6
      %v1213 = vsel %vm1182, %v1210, %v1212
      %v1215 = vsel %vm1182, %v1212, 0.0
      %v1216 = vld [vmem:[%s1 + $0x6] sm:$0x1]
      %1217 = vset.pattern.permute.xlu0 0
      %1218 = vperm.xlu0 %1217, %v1185
      %v1219 = vpop.permute.xlu0 %1218
      %1221 = vset.pattern.permute.xlu0 0
      %1222 = vperm.xlu0 %1221, %v1187
      %v1223 = vpop.permute.xlu0 %1222
      %1225 = vset.pattern.permute.xlu0 0
      %1226 = vperm.xlu0 %1225, %v1189
      %v1227 = vpop.permute.xlu0 %1226
      %1229 = vset.pattern.permute.xlu0 0
      %1230 = vperm.xlu0 %1229, %v1191
      %v1231 = vpop.permute.xlu0 %1230
      %1233 = vset.pattern.permute.xlu0 0
      %1234 = vperm.xlu0 %1233, %v1193
      %v1235 = vpop.permute.xlu0 %1234
      %1237 = vset.pattern.permute.xlu0 0
      %1238 = vperm.xlu0 %1237, %v1195
      %v1239 = vpop.permute.xlu0 %1238
      %1241 = vset.pattern.permute.xlu0 0
      %1242 = vperm.xlu0 %1241, %v1197
      %v1243 = vpop.permute.xlu0 %1242
      %1245 = vset.pattern.permute.xlu0 0
      %1246 = vperm.xlu0 %1245, %v1199
      %v1247 = vpop.permute.xlu0 %1246
      %1249 = vset.pattern.permute.xlu0 0
      %1250 = vperm.xlu0 %1249, %v1201
      %v1251 = vpop.permute.xlu0 %1250
      %1253 = vset.pattern.permute.xlu0 0
      %1254 = vperm.xlu0 %1253, %v1203
      %v1255 = vpop.permute.xlu0 %1254
      %1257 = vset.pattern.permute.xlu0 0
      %1258 = vperm.xlu0 %1257, %v1205
      %v1259 = vpop.permute.xlu0 %1258
      %1261 = vset.pattern.permute.xlu0 0
      %1262 = vperm.xlu0 %1261, %v1207
      %v1263 = vpop.permute.xlu0 %1262
      %1265 = vset.pattern.permute.xlu0 0
      %1266 = vperm.xlu0 %1265, %v1209
      %v1267 = vpop.permute.xlu0 %1266
      %1269 = vset.pattern.permute.xlu0 0
      %1270 = vperm.xlu0 %1269, %v1211
      %v1271 = vpop.permute.xlu0 %1270
      %1273 = vset.pattern.permute.xlu0 0
      %1274 = vperm.xlu0 %1273, %v1213
      %v1275 = vpop.permute.xlu0 %1274
      %1278 = vset.pattern.permute.xlu0 0
      %1279 = vperm.xlu0 %1278, %v1215
      %v1280 = vpop.permute.xlu0 %1279
      %v1282 = vperm.slane %v1216, 0
      %v1283 = vmul.f32 %v1219, %v1282
      %v1284 = vmul.f32 %v1223, %v1282
      %v1285 = vmul.f32 %v1227, %v1282
      %v1286 = vmul.f32 %v1231, %v1282
      %v1287 = vmul.f32 %v1235, %v1282
      %v1288 = vmul.f32 %v1239, %v1282
      %v1289 = vmul.f32 %v1243, %v1282
      %v1290 = vmul.f32 %v1247, %v1282
      %v1291 = vmul.f32 %v1251, %v1282
      %v1292 = vmul.f32 %v1255, %v1282
      %v1293 = vmul.f32 %v1259, %v1282
      %v1294 = vmul.f32 %v1263, %v1282
      %v1295 = vmul.f32 %v1267, %v1282
      %v1296 = vmul.f32 %v1271, %v1282
      %v1297 = vmul.f32 %v1275, %v1282
      %v1298 = vmul.f32 %v1280, %v1282
      %v1299 = vadd.f32 %v1166, %v1283
      %v1300 = vadd.f32 %v1167, %v1284
      %v1301 = vadd.f32 %v1168, %v1285
      %v1302 = vadd.f32 %v1169, %v1286
      %v1303 = vadd.f32 %v1170, %v1287
      %v1304 = vadd.f32 %v1171, %v1288
      %v1305 = vadd.f32 %v1172, %v1289
      %v1306 = vadd.f32 %v1173, %v1290
      %v1307 = vadd.f32 %v1174, %v1291
      %v1308 = vadd.f32 %v1175, %v1292
      %v1309 = vadd.f32 %v1176, %v1293
      %v1310 = vadd.f32 %v1177, %v1294
      %v1311 = vadd.f32 %v1178, %v1295
      %v1312 = vadd.f32 %v1179, %v1296
      %v1313 = vadd.f32 %v1180, %v1297
      %v1314 = vadd.f32 %v1181, %v1298
      %v1315 = vld [vmem:[%s2] sm:$0x1]
      %v1316 = vperm.slane %v1315, 0
      %v1317 = vmul.f32 %v1299, %v1316
      %v1318 = vmul.f32 %v1300, %v1316
      %v1319 = vmul.f32 %v1301, %v1316
      %v1320 = vmul.f32 %v1302, %v1316
      %v1321 = vmul.f32 %v1303, %v1316
      %v1322 = vmul.f32 %v1304, %v1316
      %v1323 = vmul.f32 %v1305, %v1316
      %v1324 = vmul.f32 %v1306, %v1316
      %v1325 = vmul.f32 %v1307, %v1316
      %v1326 = vmul.f32 %v1308, %v1316
      %v1327 = vmul.f32 %v1309, %v1316
      %v1328 = vmul.f32 %v1310, %v1316
      %v1329 = vmul.f32 %v1311, %v1316
      %v1330 = vmul.f32 %v1312, %v1316
      %v1331 = vmul.f32 %v1313, %v1316
      %v1332 = vmul.f32 %v1314, %v1316
      %v1333 = vld [vmem:[%s2 + $0x1] sm:$0x1]
      %v1334 = vperm.slane %v1333, 0
      %v1335 = vadd.f32 %v1317, %v1334
      %v1336 = vadd.f32 %v1318, %v1334
      %v1337 = vadd.f32 %v1319, %v1334
      %v1338 = vadd.f32 %v1320, %v1334
      %v1339 = vadd.f32 %v1321, %v1334
      %v1340 = vadd.f32 %v1322, %v1334
      %v1341 = vadd.f32 %v1323, %v1334
      %v1342 = vadd.f32 %v1324, %v1334
      %v1343 = vadd.f32 %v1325, %v1334
      %v1344 = vadd.f32 %v1326, %v1334
      %v1345 = vadd.f32 %v1327, %v1334
      %v1346 = vadd.f32 %v1328, %v1334
      %v1347 = vadd.f32 %v1329, %v1334
      %v1348 = vadd.f32 %v1330, %v1334
      %v1349 = vadd.f32 %v1331, %v1334
      %v1350 = vadd.f32 %v1332, %v1334
      %v1351 = vmax.f32 %v1335, 0.0
      %v1352 = vmax.f32 %v1336, 0.0
      %v1353 = vmax.f32 %v1337, 0.0
      %v1354 = vmax.f32 %v1338, 0.0
      %v1355 = vmax.f32 %v1339, 0.0
      %v1356 = vmax.f32 %v1340, 0.0
      %v1357 = vmax.f32 %v1341, 0.0
      %v1358 = vmax.f32 %v1342, 0.0
      %v1359 = vmax.f32 %v1343, 0.0
      %v1360 = vmax.f32 %v1344, 0.0
      %v1361 = vmax.f32 %v1345, 0.0
      %v1362 = vmax.f32 %v1346, 0.0
      %v1363 = vmax.f32 %v1347, 0.0
      %v1364 = vmax.f32 %v1348, 0.0
      %v1365 = vmax.f32 %v1349, 0.0
      %v1366 = vmax.f32 %v1350, 0.0
      %v1367 = vlaneseq
      %v1368 = vshrl.u32 %v1367, 7
      %v1369 = vadd.s32 %v1368, 8
      %v1370 = vadd.s32 %v1368, 16
      %v1371 = vadd.s32 %v1368, 24
      %v1372 = vadd.s32 %v1368, 32
      %v1373 = vadd.s32 %v1368, 40
      %v1374 = vadd.s32 %v1368, 48
      %v1375 = vadd.s32 %v1368, 56
      %v1376 = vlaneseq
      %v1377 = vand.u32 %v1376, 127
      %v1378 = vmul.u32 %v1368, 2
      %v1379 = vmul.u32 %v1369, 2
      %v1380 = vmul.u32 %v1370, 2
      %v1381 = vmul.u32 %v1371, 2
      %v1382 = vmul.u32 %v1372, 2
      %v1383 = vmul.u32 %v1373, 2
      %v1384 = vmul.u32 %v1374, 2
      %v1385 = vmul.u32 %v1375, 2
      %vm1386 = vcmp.eq.s32.totalorder %v1377, %v1378
      %vm1387 = vcmp.eq.s32.totalorder %v1377, %v1379
      %vm1388 = vcmp.eq.s32.totalorder %v1377, %v1380
      %vm1389 = vcmp.eq.s32.totalorder %v1377, %v1381
      %vm1390 = vcmp.eq.s32.totalorder %v1377, %v1382
      %vm1391 = vcmp.eq.s32.totalorder %v1377, %v1383
      %vm1392 = vcmp.eq.s32.totalorder %v1377, %v1384
      %vm1393 = vcmp.eq.s32.totalorder %v1377, %v1385
      %v1394 = vsel %vm1386, 1, 0
      %v1395 = vsel %vm1387, 1, 0
      %v1396 = vsel %vm1388, 1, 0
      %v1397 = vsel %vm1389, 1, 0
      %v1398 = vsel %vm1390, 1, 0
      %v1399 = vsel %vm1391, 1, 0
      %v1400 = vsel %vm1392, 1, 0
      %v1401 = vsel %vm1393, 1, 0
      %v1402 = vcvt.s32.f32 %v1394
      %v1403 = vcvt.s32.f32 %v1395
      %v1404 = vcvt.s32.f32 %v1396
      %v1405 = vcvt.s32.f32 %v1397
      %v1406 = vcvt.s32.f32 %v1398
      %v1407 = vcvt.s32.f32 %v1399
      %v1408 = vcvt.s32.f32 %v1400
      %v1409 = vcvt.s32.f32 %v1401
      %v1410 = vadd.s32 %v1378, 1
      %v1411 = vadd.s32 %v1379, 1
      %v1412 = vadd.s32 %v1380, 1
      %v1413 = vadd.s32 %v1381, 1
      %v1414 = vadd.s32 %v1382, 1
      %v1415 = vadd.s32 %v1383, 1
      %v1416 = vadd.s32 %v1384, 1
      %v1417 = vadd.s32 %v1385, 1
      %vm1418 = vcmp.eq.s32.totalorder %v1377, %v1410
      %vm1419 = vcmp.eq.s32.totalorder %v1377, %v1411
      %vm1420 = vcmp.eq.s32.totalorder %v1377, %v1412
      %vm1421 = vcmp.eq.s32.totalorder %v1377, %v1413
      %vm1422 = vcmp.eq.s32.totalorder %v1377, %v1414
      %vm1423 = vcmp.eq.s32.totalorder %v1377, %v1415
      %vm1424 = vcmp.eq.s32.totalorder %v1377, %v1416
      %vm1425 = vcmp.eq.s32.totalorder %v1377, %v1417
      %v1426 = vsel %vm1418, 1, 0
      %v1427 = vsel %vm1419, 1, 0
      %v1428 = vsel %vm1420, 1, 0
      %v1429 = vsel %vm1421, 1, 0
      %v1430 = vsel %vm1422, 1, 0
      %v1431 = vsel %vm1423, 1, 0
      %v1432 = vsel %vm1424, 1, 0
      %v1433 = vsel %vm1425, 1, 0
      %v1434 = vcvt.s32.f32 %v1426
      %v1435 = vcvt.s32.f32 %v1427
      %v1436 = vcvt.s32.f32 %v1428
      %v1437 = vcvt.s32.f32 %v1429
      %v1438 = vcvt.s32.f32 %v1430
      %v1439 = vcvt.s32.f32 %v1431
      %v1440 = vcvt.s32.f32 %v1432
      %v1441 = vcvt.s32.f32 %v1433
      %1442 = vmatpush.msra.mxu0 %v1366
      %1443 = vmatpush.msra.mxu0 %v1365
      %1444 = vmatpush.msra.mxu0 %v1364
      %1445 = vmatpush.msra.mxu0 %v1363
      %1446 = vmatpush.msra.mxu0 %v1362
      %1447 = vmatpush.msra.mxu0 %v1361
      %1448 = vmatpush.msra.mxu0 %v1360
      %1449 = vmatpush.msra.mxu0 %v1359
      %1450 = vmatpush.msra.mxu0 %v1358
      %1451 = vmatpush.msra.mxu0 %v1357
      %1452 = vmatpush.msra.mxu0 %v1356
      %1453 = vmatpush.msra.mxu0 %v1355
      %1454 = vmatpush.msra.mxu0 %v1354
      %1455 = vmatpush.msra.mxu0 %v1353
      %1456 = vmatpush.msra.mxu0 %v1352
      %1457 = vmatpush.msra.mxu0 %v1351
      %1458 = vmatmul.f32.gmra.mxu0 %v1402
      %v1459 = vpop.f32.mrf.mxu0
      %v1460 = vadd.f32 0.0, %v1459
      %1461 = vmatmul.f32.gmra.mxu0 %v1403
      %v1462 = vpop.f32.mrf.mxu0
      %v1463 = vadd.f32 0.0, %v1462
      %1464 = vmatmul.f32.gmra.mxu0 %v1404
      %v1465 = vpop.f32.mrf.mxu0
      %v1466 = vadd.f32 0.0, %v1465
      %1467 = vmatmul.f32.gmra.mxu0 %v1405
      %v1468 = vpop.f32.mrf.mxu0
      %v1469 = vadd.f32 0.0, %v1468
      %1470 = vmatmul.f32.gmra.mxu0 %v1406
      %v1471 = vpop.f32.mrf.mxu0
      %v1472 = vadd.f32 0.0, %v1471
      %1473 = vmatmul.f32.gmra.mxu0 %v1407
      %v1474 = vpop.f32.mrf.mxu0
      %v1475 = vadd.f32 0.0, %v1474
      %1476 = vmatmul.f32.gmra.mxu0 %v1408
      %v1477 = vpop.f32.mrf.mxu0
      %v1478 = vadd.f32 0.0, %v1477
      %1479 = vmatmul.f32.gmra.mxu0 %v1409
      %v1480 = vpop.f32.mrf.mxu0
      %v1481 = vadd.f32 0.0, %v1480
      %1482 = vdwg.mxu0
      %1483 = vmatpush.msra.mxu0 %v1366
      %1484 = vmatpush.msra.mxu0 %v1365
      %1485 = vmatpush.msra.mxu0 %v1364
      %1486 = vmatpush.msra.mxu0 %v1363
      %1487 = vmatpush.msra.mxu0 %v1362
      %1488 = vmatpush.msra.mxu0 %v1361
      %1489 = vmatpush.msra.mxu0 %v1360
      %1490 = vmatpush.msra.mxu0 %v1359
      %1491 = vmatpush.msra.mxu0 %v1358
      %1492 = vmatpush.msra.mxu0 %v1357
      %1493 = vmatpush.msra.mxu0 %v1356
      %1494 = vmatpush.msra.mxu0 %v1355
      %1495 = vmatpush.msra.mxu0 %v1354
      %1496 = vmatpush.msra.mxu0 %v1353
      %1497 = vmatpush.msra.mxu0 %v1352
      %1498 = vmatpush.msra.mxu0 %v1351
      %1499 = vmatmul.f32.gmra.mxu0 %v1434
      %v1500 = vpop.f32.mrf.mxu0
      %v1501 = vadd.f32 0.0, %v1500
      %1502 = vmatmul.f32.gmra.mxu0 %v1435
      %v1503 = vpop.f32.mrf.mxu0
      %v1504 = vadd.f32 0.0, %v1503
      %1505 = vmatmul.f32.gmra.mxu0 %v1436
      %v1506 = vpop.f32.mrf.mxu0
      %v1507 = vadd.f32 0.0, %v1506
      %1508 = vmatmul.f32.gmra.mxu0 %v1437
      %v1509 = vpop.f32.mrf.mxu0
      %v1510 = vadd.f32 0.0, %v1509
      %1511 = vmatmul.f32.gmra.mxu0 %v1438
      %v1512 = vpop.f32.mrf.mxu0
      %v1513 = vadd.f32 0.0, %v1512
      %1514 = vmatmul.f32.gmra.mxu0 %v1439
      %v1515 = vpop.f32.mrf.mxu0
      %v1516 = vadd.f32 0.0, %v1515
      %1517 = vmatmul.f32.gmra.mxu0 %v1440
      %v1518 = vpop.f32.mrf.mxu0
      %v1519 = vadd.f32 0.0, %v1518
      %1520 = vmatmul.f32.gmra.mxu0 %v1441
      %v1521 = vpop.f32.mrf.mxu0
      %v1522 = vadd.f32 0.0, %v1521
      %1523 = vdwg.mxu0
      %v1524 = vmax.f32 %v1460, %v1501
      %v1525 = vmax.f32 %v1463, %v1504
      %v1526 = vmax.f32 %v1466, %v1507
      %v1527 = vmax.f32 %v1469, %v1510
      %v1528 = vmax.f32 %v1472, %v1513
      %v1529 = vmax.f32 %v1475, %v1516
      %v1530 = vmax.f32 %v1478, %v1519
      %v1531 = vmax.f32 %v1481, %v1522
      %v1532 = vpack.c.bf16 %v1525, %v1524
      %v1533 = vpack.c.bf16 %v1527, %v1526
      %v1534 = vpack.c.bf16 %v1529, %v1528
      %v1535 = vpack.c.bf16 %v1531, %v1530
      %v1536 = vld [vmem:[%s3] sm:$0xf]
      %v1537 = vld [vmem:[%s3 + $0x4] sm:$0xf]
      %v1538 = vld [vmem:[%s3 + $0x8] sm:$0xf]
      %v1539 = vld [vmem:[%s3 + $0xc] sm:$0xf]
      %v1540 = vld [vmem:[%s3 + $0x10] sm:$0xf]
      %v1541 = vld [vmem:[%s3 + $0x14] sm:$0xf]
      %v1542 = vld [vmem:[%s3 + $0x18] sm:$0xf]
      %v1543 = vld [vmem:[%s3 + $0x1c] sm:$0xf]
      %v1544 = vld [vmem:[%s3 + $0x20] sm:$0xf]
      %v1545 = vld [vmem:[%s3 + $0x24] sm:$0xf]
      %v1546 = vld [vmem:[%s3 + $0x28] sm:$0xf]
      %v1547 = vld [vmem:[%s3 + $0x2c] sm:$0xf]
      %v1548 = vld [vmem:[%s3 + $0x30] sm:$0xf]
      %v1549 = vld [vmem:[%s3 + $0x34] sm:$0xf]
      %v1550 = vld [vmem:[%s3 + $0x38] sm:$0xf]
      %v1551 = vld [vmem:[%s3 + $0x3c] sm:$0xf]
      %v1560 = vrot.slane %v1524, 1
      %v1561 = vrot.slane %v1525, 1
      %v1562 = vsel %vm517, %v1560, %v1561
      %v1563 = vrot.slane %v1526, 1
      %v1564 = vsel %vm517, %v1561, %v1563
      %v1565 = vrot.slane %v1527, 1
      %v1566 = vsel %vm517, %v1563, %v1565
      %v1567 = vrot.slane %v1528, 1
      %v1568 = vsel %vm517, %v1565, %v1567
      %v1569 = vrot.slane %v1529, 1
      %v1570 = vsel %vm517, %v1567, %v1569
      %v1571 = vrot.slane %v1530, 1
      %v1572 = vsel %vm517, %v1569, %v1571
      %v1573 = vrot.slane %v1531, 1
      %v1574 = vsel %vm517, %v1571, %v1573
      %v1583 = vsel %vm517, %v1573, 0.0
      %v1584 = vpack.c.bf16 %v1564, %v1562
      %v1585 = vpack.c.bf16 %v1568, %v1566
      %v1586 = vpack.c.bf16 %v1572, %v1570
      %v1587 = vpack.c.bf16 %v1583, %v1574
      %s1588 = scalar_lea.vmem %s3, 64
      %v1589 = vld [vmem:[%s1588] sm:$0xf]
      %v1590 = vld [vmem:[%s1588 + $0x4] sm:$0xf]
      %v1591 = vld [vmem:[%s1588 + $0x8] sm:$0xf]
      %v1592 = vld [vmem:[%s1588 + $0xc] sm:$0xf]
      %v1593 = vld [vmem:[%s1588 + $0x10] sm:$0xf]
      %v1594 = vld [vmem:[%s1588 + $0x14] sm:$0xf]
      %v1595 = vld [vmem:[%s1588 + $0x18] sm:$0xf]
      %v1596 = vld [vmem:[%s1588 + $0x1c] sm:$0xf]
      %v1597 = vld [vmem:[%s1588 + $0x20] sm:$0xf]
      %v1598 = vld [vmem:[%s1588 + $0x24] sm:$0xf]
      %v1599 = vld [vmem:[%s1588 + $0x28] sm:$0xf]
      %v1600 = vld [vmem:[%s1588 + $0x2c] sm:$0xf]
      %v1601 = vld [vmem:[%s1588 + $0x30] sm:$0xf]
      %v1602 = vld [vmem:[%s1588 + $0x34] sm:$0xf]
      %v1603 = vld [vmem:[%s1588 + $0x38] sm:$0xf]
      %v1604 = vld [vmem:[%s1588 + $0x3c] sm:$0xf]
      %v1621 = vunpack.c.l.b16 %v1589
      %v1622 = vunpack.c.l.b16 %v1590
      %v1623 = vunpack.c.l.b16 %v1591
      %v1624 = vunpack.c.l.b16 %v1592
      %v1625 = vunpack.c.l.b16 %v1593
      %v1626 = vunpack.c.l.b16 %v1594
      %v1627 = vunpack.c.l.b16 %v1595
      %v1628 = vunpack.c.l.b16 %v1596
      %v1629 = vunpack.c.l.b16 %v1597
      %v1630 = vunpack.c.l.b16 %v1598
      %v1631 = vunpack.c.l.b16 %v1599
      %v1632 = vunpack.c.l.b16 %v1600
      %v1633 = vunpack.c.l.b16 %v1601
      %v1634 = vunpack.c.l.b16 %v1602
      %v1635 = vunpack.c.l.b16 %v1603
      %v1636 = vunpack.c.l.b16 %v1604
      %v1637 = vpack.c.b16 %v1622, %v1621
      %v1638 = vpack.c.b16 %v1624, %v1623
      %v1639 = vpack.c.b16 %v1626, %v1625
      %v1640 = vpack.c.b16 %v1628, %v1627
      %v1641 = vpack.c.b16 %v1630, %v1629
      %v1642 = vpack.c.b16 %v1632, %v1631
      %v1643 = vpack.c.b16 %v1634, %v1633
      %v1644 = vpack.c.b16 %v1636, %v1635
      %1653 = vmatpush.bf16.msra.mxu0 %v1644
      %1654 = vmatpush.bf16.msra.mxu0 %v1643
      %1655 = vmatpush.bf16.msra.mxu0 %v1642
      %1656 = vmatpush.bf16.msra.mxu0 %v1641
      %1657 = vmatpush.bf16.msra.mxu0 %v1640
      %1658 = vmatpush.bf16.msra.mxu0 %v1639
      %1659 = vmatpush.bf16.msra.mxu0 %v1638
      %1660 = vmatpush.bf16.msra.mxu0 %v1637
      %1661 = vmatmul.bf16.gmra.mxu0 %v1584
      %v1662 = vpop.f32.mrf.mxu0
      %v1663 = vadd.f32 0.0, %v1662
      %v1664 = vpop.f32.mrf.mxu0
      %v1665 = vadd.f32 0.0, %v1664
      %1666 = vmatmul.bf16.gmra.mxu0 %v1585
      %v1667 = vpop.f32.mrf.mxu0
      %v1668 = vadd.f32 0.0, %v1667
      %v1669 = vpop.f32.mrf.mxu0
      %v1670 = vadd.f32 0.0, %v1669
      %1671 = vmatmul.bf16.gmra.mxu0 %v1586
      %v1672 = vpop.f32.mrf.mxu0
      %v1673 = vadd.f32 0.0, %v1672
      %v1674 = vpop.f32.mrf.mxu0
      %v1675 = vadd.f32 0.0, %v1674
      %1676 = vmatmul.bf16.gmra.mxu0 %v1587
      %v1677 = vpop.f32.mrf.mxu0
      %v1678 = vadd.f32 0.0, %v1677
      %v1679 = vpop.f32.mrf.mxu0
      %v1680 = vadd.f32 0.0, %v1679
      %1681 = vdwg.mxu0
      %v1698 = vunpack.c.l.b16 %v1536
      %v1699 = vunpack.c.l.b16 %v1537
      %v1700 = vunpack.c.l.b16 %v1538
      %v1701 = vunpack.c.l.b16 %v1539
      %v1702 = vunpack.c.l.b16 %v1540
      %v1703 = vunpack.c.l.b16 %v1541
      %v1704 = vunpack.c.l.b16 %v1542
      %v1705 = vunpack.c.l.b16 %v1543
      %v1706 = vunpack.c.l.b16 %v1544
      %v1707 = vunpack.c.l.b16 %v1545
      %v1708 = vunpack.c.l.b16 %v1546
      %v1709 = vunpack.c.l.b16 %v1547
      %v1710 = vunpack.c.l.b16 %v1548
      %v1711 = vunpack.c.l.b16 %v1549
      %v1712 = vunpack.c.l.b16 %v1550
      %v1713 = vunpack.c.l.b16 %v1551
      %v1714 = vpack.c.b16 %v1699, %v1698
      %v1715 = vpack.c.b16 %v1701, %v1700
      %v1716 = vpack.c.b16 %v1703, %v1702
      %v1717 = vpack.c.b16 %v1705, %v1704
      %v1718 = vpack.c.b16 %v1707, %v1706
      %v1719 = vpack.c.b16 %v1709, %v1708
      %v1720 = vpack.c.b16 %v1711, %v1710
      %v1721 = vpack.c.b16 %v1713, %v1712
      %1730 = vmatpush.bf16.msra.mxu0 %v1721
      %1731 = vmatpush.bf16.msra.mxu0 %v1720
      %1732 = vmatpush.bf16.msra.mxu0 %v1719
      %1733 = vmatpush.bf16.msra.mxu0 %v1718
      %1734 = vmatpush.bf16.msra.mxu0 %v1717
      %1735 = vmatpush.bf16.msra.mxu0 %v1716
      %1736 = vmatpush.bf16.msra.mxu0 %v1715
      %1737 = vmatpush.bf16.msra.mxu0 %v1714
      %1738 = vmatmul.bf16.gmra.mxu0 %v1532
      %v1739 = vpop.f32.mrf.mxu0
      %v1740 = vadd.f32 %v1663, %v1739
      %v1741 = vpop.f32.mrf.mxu0
      %v1742 = vadd.f32 %v1665, %v1741
      %1743 = vmatmul.bf16.gmra.mxu0 %v1533
      %v1744 = vpop.f32.mrf.mxu0
      %v1745 = vadd.f32 %v1668, %v1744
      %v1746 = vpop.f32.mrf.mxu0
      %v1747 = vadd.f32 %v1670, %v1746
      %1748 = vmatmul.bf16.gmra.mxu0 %v1534
      %v1749 = vpop.f32.mrf.mxu0
      %v1750 = vadd.f32 %v1673, %v1749
      %v1751 = vpop.f32.mrf.mxu0
      %v1752 = vadd.f32 %v1675, %v1751
      %1753 = vmatmul.bf16.gmra.mxu0 %v1535
      %v1754 = vpop.f32.mrf.mxu0
      %v1755 = vadd.f32 %v1678, %v1754
      %v1756 = vpop.f32.mrf.mxu0
      %v1757 = vadd.f32 %v1680, %v1756
      %1758 = vdwg.mxu0
      %v1759 = vrot.slane %v1524, 2
      %v1760 = vrot.slane %v1525, 2
      %v1761 = vsel %vm650, %v1759, %v1760
      %v1762 = vrot.slane %v1526, 2
      %v1763 = vsel %vm650, %v1760, %v1762
      %v1764 = vrot.slane %v1527, 2
      %v1765 = vsel %vm650, %v1762, %v1764
      %v1766 = vrot.slane %v1528, 2
      %v1767 = vsel %vm650, %v1764, %v1766
      %v1768 = vrot.slane %v1529, 2
      %v1769 = vsel %vm650, %v1766, %v1768
      %v1770 = vrot.slane %v1530, 2
      %v1771 = vsel %vm650, %v1768, %v1770
      %v1772 = vrot.slane %v1531, 2
      %v1773 = vsel %vm650, %v1770, %v1772
      %v1782 = vsel %vm650, %v1772, 0.0
      %v1783 = vpack.c.bf16 %v1763, %v1761
      %v1784 = vpack.c.bf16 %v1767, %v1765
      %v1785 = vpack.c.bf16 %v1771, %v1769
      %v1786 = vpack.c.bf16 %v1782, %v1773
      %s1787 = scalar_lea.vmem %s3, 128
      %v1788 = vld [vmem:[%s1787] sm:$0xf]
      %v1789 = vld [vmem:[%s1787 + $0x4] sm:$0xf]
      %v1790 = vld [vmem:[%s1787 + $0x8] sm:$0xf]
      %v1791 = vld [vmem:[%s1787 + $0xc] sm:$0xf]
      %v1792 = vld [vmem:[%s1787 + $0x10] sm:$0xf]
      %v1793 = vld [vmem:[%s1787 + $0x14] sm:$0xf]
      %v1794 = vld [vmem:[%s1787 + $0x18] sm:$0xf]
      %v1795 = vld [vmem:[%s1787 + $0x1c] sm:$0xf]
      %v1796 = vld [vmem:[%s1787 + $0x20] sm:$0xf]
      %v1797 = vld [vmem:[%s1787 + $0x24] sm:$0xf]
      %v1798 = vld [vmem:[%s1787 + $0x28] sm:$0xf]
      %v1799 = vld [vmem:[%s1787 + $0x2c] sm:$0xf]
      %v1800 = vld [vmem:[%s1787 + $0x30] sm:$0xf]
      %v1801 = vld [vmem:[%s1787 + $0x34] sm:$0xf]
      %v1802 = vld [vmem:[%s1787 + $0x38] sm:$0xf]
      %v1803 = vld [vmem:[%s1787 + $0x3c] sm:$0xf]
      %v1820 = vunpack.c.l.b16 %v1788
      %v1821 = vunpack.c.l.b16 %v1789
      %v1822 = vunpack.c.l.b16 %v1790
      %v1823 = vunpack.c.l.b16 %v1791
      %v1824 = vunpack.c.l.b16 %v1792
      %v1825 = vunpack.c.l.b16 %v1793
      %v1826 = vunpack.c.l.b16 %v1794
      %v1827 = vunpack.c.l.b16 %v1795
      %v1828 = vunpack.c.l.b16 %v1796
      %v1829 = vunpack.c.l.b16 %v1797
      %v1830 = vunpack.c.l.b16 %v1798
      %v1831 = vunpack.c.l.b16 %v1799
      %v1832 = vunpack.c.l.b16 %v1800
      %v1833 = vunpack.c.l.b16 %v1801
      %v1834 = vunpack.c.l.b16 %v1802
      %v1835 = vunpack.c.l.b16 %v1803
      %v1836 = vpack.c.b16 %v1821, %v1820
      %v1837 = vpack.c.b16 %v1823, %v1822
      %v1838 = vpack.c.b16 %v1825, %v1824
      %v1839 = vpack.c.b16 %v1827, %v1826
      %v1840 = vpack.c.b16 %v1829, %v1828
      %v1841 = vpack.c.b16 %v1831, %v1830
      %v1842 = vpack.c.b16 %v1833, %v1832
      %v1843 = vpack.c.b16 %v1835, %v1834
      %1852 = vmatpush.bf16.msra.mxu0 %v1843
      %1853 = vmatpush.bf16.msra.mxu0 %v1842
      %1854 = vmatpush.bf16.msra.mxu0 %v1841
      %1855 = vmatpush.bf16.msra.mxu0 %v1840
      %1856 = vmatpush.bf16.msra.mxu0 %v1839
      %1857 = vmatpush.bf16.msra.mxu0 %v1838
      %1858 = vmatpush.bf16.msra.mxu0 %v1837
      %1859 = vmatpush.bf16.msra.mxu0 %v1836
      %1860 = vmatmul.bf16.gmra.mxu0 %v1783
      %v1861 = vpop.f32.mrf.mxu0
      %v1862 = vadd.f32 0.0, %v1861
      %v1863 = vpop.f32.mrf.mxu0
      %v1864 = vadd.f32 0.0, %v1863
      %1865 = vmatmul.bf16.gmra.mxu0 %v1784
      %v1866 = vpop.f32.mrf.mxu0
      %v1867 = vadd.f32 0.0, %v1866
      %v1868 = vpop.f32.mrf.mxu0
      %v1869 = vadd.f32 0.0, %v1868
      %1870 = vmatmul.bf16.gmra.mxu0 %v1785
      %v1871 = vpop.f32.mrf.mxu0
      %v1872 = vadd.f32 0.0, %v1871
      %v1873 = vpop.f32.mrf.mxu0
      %v1874 = vadd.f32 0.0, %v1873
      %1875 = vmatmul.bf16.gmra.mxu0 %v1786
      %v1876 = vpop.f32.mrf.mxu0
      %v1877 = vadd.f32 0.0, %v1876
      %v1878 = vpop.f32.mrf.mxu0
      %v1879 = vadd.f32 0.0, %v1878
      %1880 = vdwg.mxu0
      %v1881 = vadd.f32 %v1740, %v1862
      %v1882 = vadd.f32 %v1742, %v1864
      %v1883 = vadd.f32 %v1745, %v1867
      %v1884 = vadd.f32 %v1747, %v1869
      %v1885 = vadd.f32 %v1750, %v1872
      %v1886 = vadd.f32 %v1752, %v1874
      %v1887 = vadd.f32 %v1755, %v1877
      %v1888 = vadd.f32 %v1757, %v1879
      %v1889 = vld [vmem:[%s4] sm:$0x1]
      %v1890 = vperm.slane %v1889, 0
      %v1891 = vmul.f32 %v1881, %v1890
      %v1892 = vmul.f32 %v1882, %v1890
      %v1893 = vmul.f32 %v1883, %v1890
      %v1894 = vmul.f32 %v1884, %v1890
      %v1895 = vmul.f32 %v1885, %v1890
      %v1896 = vmul.f32 %v1886, %v1890
      %v1897 = vmul.f32 %v1887, %v1890
      %v1898 = vmul.f32 %v1888, %v1890
      %v1899 = vld [vmem:[%s4 + $0x1] sm:$0x1]
      %v1900 = vperm.slane %v1899, 0
      %v1901 = vadd.f32 %v1891, %v1900
      %v1902 = vadd.f32 %v1892, %v1900
      %v1903 = vadd.f32 %v1893, %v1900
      %v1904 = vadd.f32 %v1894, %v1900
      %v1905 = vadd.f32 %v1895, %v1900
      %v1906 = vadd.f32 %v1896, %v1900
      %v1907 = vadd.f32 %v1897, %v1900
      %v1908 = vadd.f32 %v1898, %v1900
      %v1909 = vmax.f32 %v1901, 0.0
      %v1910 = vmax.f32 %v1902, 0.0
      %v1911 = vmax.f32 %v1903, 0.0
      %v1912 = vmax.f32 %v1904, 0.0
      %v1913 = vmax.f32 %v1905, 0.0
      %v1914 = vmax.f32 %v1906, 0.0
      %v1915 = vmax.f32 %v1907, 0.0
      %v1916 = vmax.f32 %v1908, 0.0
      %v1917 = vpack.c.bf16 %v1910, %v1909
      %v1918 = vpack.c.bf16 %v1912, %v1911
      %v1919 = vpack.c.bf16 %v1914, %v1913
      %v1920 = vpack.c.bf16 %v1916, %v1915
      %v1921 = vld [vmem:[%s5] sm:$0xf]
      %v1922 = vld [vmem:[%s5 + $0x4] sm:$0xf]
      %v1923 = vld [vmem:[%s5 + $0x8] sm:$0xf]
      %v1924 = vld [vmem:[%s5 + $0xc] sm:$0xf]
      %v1925 = vld [vmem:[%s5 + $0x10] sm:$0xf]
      %v1926 = vld [vmem:[%s5 + $0x14] sm:$0xf]
      %v1927 = vld [vmem:[%s5 + $0x18] sm:$0xf]
      %v1928 = vld [vmem:[%s5 + $0x1c] sm:$0xf]
      %v1929 = vld [vmem:[%s5 + $0x20] sm:$0xf]
      %v1930 = vld [vmem:[%s5 + $0x24] sm:$0xf]
      %v1931 = vld [vmem:[%s5 + $0x28] sm:$0xf]
      %v1932 = vld [vmem:[%s5 + $0x2c] sm:$0xf]
      %v1933 = vld [vmem:[%s5 + $0x30] sm:$0xf]
      %v1934 = vld [vmem:[%s5 + $0x34] sm:$0xf]
      %v1935 = vld [vmem:[%s5 + $0x38] sm:$0xf]
      %v1936 = vld [vmem:[%s5 + $0x3c] sm:$0xf]
      %v1945 = vrot.slane %v1909, 1
      %v1946 = vrot.slane %v1910, 1
      %v1947 = vsel %vm517, %v1945, %v1946
      %v1948 = vrot.slane %v1911, 1
      %v1949 = vsel %vm517, %v1946, %v1948
      %v1950 = vrot.slane %v1912, 1
      %v1951 = vsel %vm517, %v1948, %v1950
      %v1952 = vrot.slane %v1913, 1
      %v1953 = vsel %vm517, %v1950, %v1952
      %v1954 = vrot.slane %v1914, 1
      %v1955 = vsel %vm517, %v1952, %v1954
      %v1956 = vrot.slane %v1915, 1
      %v1957 = vsel %vm517, %v1954, %v1956
      %v1958 = vrot.slane %v1916, 1
      %v1959 = vsel %vm517, %v1956, %v1958
      %v1968 = vsel %vm517, %v1958, 0.0
      %v1969 = vpack.c.bf16 %v1949, %v1947
      %v1970 = vpack.c.bf16 %v1953, %v1951
      %v1971 = vpack.c.bf16 %v1957, %v1955
      %v1972 = vpack.c.bf16 %v1968, %v1959
      %s1973 = scalar_lea.vmem %s5, 64
      %v1974 = vld [vmem:[%s1973] sm:$0xf]
      %v1975 = vld [vmem:[%s1973 + $0x4] sm:$0xf]
      %v1976 = vld [vmem:[%s1973 + $0x8] sm:$0xf]
      %v1977 = vld [vmem:[%s1973 + $0xc] sm:$0xf]
      %v1978 = vld [vmem:[%s1973 + $0x10] sm:$0xf]
      %v1979 = vld [vmem:[%s1973 + $0x14] sm:$0xf]
      %v1980 = vld [vmem:[%s1973 + $0x18] sm:$0xf]
      %v1981 = vld [vmem:[%s1973 + $0x1c] sm:$0xf]
      %v1982 = vld [vmem:[%s1973 + $0x20] sm:$0xf]
      %v1983 = vld [vmem:[%s1973 + $0x24] sm:$0xf]
      %v1984 = vld [vmem:[%s1973 + $0x28] sm:$0xf]
      %v1985 = vld [vmem:[%s1973 + $0x2c] sm:$0xf]
      %v1986 = vld [vmem:[%s1973 + $0x30] sm:$0xf]
      %v1987 = vld [vmem:[%s1973 + $0x34] sm:$0xf]
      %v1988 = vld [vmem:[%s1973 + $0x38] sm:$0xf]
      %v1989 = vld [vmem:[%s1973 + $0x3c] sm:$0xf]
      %v2006 = vunpack.c.l.b16 %v1974
      %v2007 = vunpack.c.l.b16 %v1975
      %v2008 = vunpack.c.l.b16 %v1976
      %v2009 = vunpack.c.l.b16 %v1977
      %v2010 = vunpack.c.l.b16 %v1978
      %v2011 = vunpack.c.l.b16 %v1979
      %v2012 = vunpack.c.l.b16 %v1980
      %v2013 = vunpack.c.l.b16 %v1981
      %v2014 = vunpack.c.l.b16 %v1982
      %v2015 = vunpack.c.l.b16 %v1983
      %v2016 = vunpack.c.l.b16 %v1984
      %v2017 = vunpack.c.l.b16 %v1985
      %v2018 = vunpack.c.l.b16 %v1986
      %v2019 = vunpack.c.l.b16 %v1987
      %v2020 = vunpack.c.l.b16 %v1988
      %v2021 = vunpack.c.l.b16 %v1989
      %v2022 = vpack.c.b16 %v2007, %v2006
      %v2023 = vpack.c.b16 %v2009, %v2008
      %v2024 = vpack.c.b16 %v2011, %v2010
      %v2025 = vpack.c.b16 %v2013, %v2012
      %v2026 = vpack.c.b16 %v2015, %v2014
      %v2027 = vpack.c.b16 %v2017, %v2016
      %v2028 = vpack.c.b16 %v2019, %v2018
      %v2029 = vpack.c.b16 %v2021, %v2020
      %2038 = vmatpush.bf16.msra.mxu0 %v2029
      %2039 = vmatpush.bf16.msra.mxu0 %v2028
      %2040 = vmatpush.bf16.msra.mxu0 %v2027
      %2041 = vmatpush.bf16.msra.mxu0 %v2026
      %2042 = vmatpush.bf16.msra.mxu0 %v2025
      %2043 = vmatpush.bf16.msra.mxu0 %v2024
      %2044 = vmatpush.bf16.msra.mxu0 %v2023
      %2045 = vmatpush.bf16.msra.mxu0 %v2022
      %2046 = vmatmul.bf16.gmra.mxu0 %v1969
      %v2047 = vpop.f32.mrf.mxu0
      %v2048 = vadd.f32 0.0, %v2047
      %v2049 = vpop.f32.mrf.mxu0
      %v2050 = vadd.f32 0.0, %v2049
      %2051 = vmatmul.bf16.gmra.mxu0 %v1970
      %v2052 = vpop.f32.mrf.mxu0
      %v2053 = vadd.f32 0.0, %v2052
      %v2054 = vpop.f32.mrf.mxu0
      %v2055 = vadd.f32 0.0, %v2054
      %2056 = vmatmul.bf16.gmra.mxu0 %v1971
      %v2057 = vpop.f32.mrf.mxu0
      %v2058 = vadd.f32 0.0, %v2057
      %v2059 = vpop.f32.mrf.mxu0
      %v2060 = vadd.f32 0.0, %v2059
      %2061 = vmatmul.bf16.gmra.mxu0 %v1972
      %v2062 = vpop.f32.mrf.mxu0
      %v2063 = vadd.f32 0.0, %v2062
      %v2064 = vpop.f32.mrf.mxu0
      %v2065 = vadd.f32 0.0, %v2064
      %2066 = vdwg.mxu0
      %v2083 = vunpack.c.l.b16 %v1921
      %v2084 = vunpack.c.l.b16 %v1922
      %v2085 = vunpack.c.l.b16 %v1923
      %v2086 = vunpack.c.l.b16 %v1924
      %v2087 = vunpack.c.l.b16 %v1925
      %v2088 = vunpack.c.l.b16 %v1926
      %v2089 = vunpack.c.l.b16 %v1927
      %v2090 = vunpack.c.l.b16 %v1928
      %v2091 = vunpack.c.l.b16 %v1929
      %v2092 = vunpack.c.l.b16 %v1930
      %v2093 = vunpack.c.l.b16 %v1931
      %v2094 = vunpack.c.l.b16 %v1932
      %v2095 = vunpack.c.l.b16 %v1933
      %v2096 = vunpack.c.l.b16 %v1934
      %v2097 = vunpack.c.l.b16 %v1935
      %v2098 = vunpack.c.l.b16 %v1936
      %v2099 = vpack.c.b16 %v2084, %v2083
      %v2100 = vpack.c.b16 %v2086, %v2085
      %v2101 = vpack.c.b16 %v2088, %v2087
      %v2102 = vpack.c.b16 %v2090, %v2089
      %v2103 = vpack.c.b16 %v2092, %v2091
      %v2104 = vpack.c.b16 %v2094, %v2093
      %v2105 = vpack.c.b16 %v2096, %v2095
      %v2106 = vpack.c.b16 %v2098, %v2097
      %2115 = vmatpush.bf16.msra.mxu0 %v2106
      %2116 = vmatpush.bf16.msra.mxu0 %v2105
      %2117 = vmatpush.bf16.msra.mxu0 %v2104
      %2118 = vmatpush.bf16.msra.mxu0 %v2103
      %2119 = vmatpush.bf16.msra.mxu0 %v2102
      %2120 = vmatpush.bf16.msra.mxu0 %v2101
      %2121 = vmatpush.bf16.msra.mxu0 %v2100
      %2122 = vmatpush.bf16.msra.mxu0 %v2099
      %2123 = vmatmul.bf16.gmra.mxu0 %v1917
      %v2124 = vpop.f32.mrf.mxu0
      %v2125 = vadd.f32 %v2048, %v2124
      %v2126 = vpop.f32.mrf.mxu0
      %v2127 = vadd.f32 %v2050, %v2126
      %2128 = vmatmul.bf16.gmra.mxu0 %v1918
      %v2129 = vpop.f32.mrf.mxu0
      %v2130 = vadd.f32 %v2053, %v2129
      %v2131 = vpop.f32.mrf.mxu0
      %v2132 = vadd.f32 %v2055, %v2131
      %2133 = vmatmul.bf16.gmra.mxu0 %v1919
      %v2134 = vpop.f32.mrf.mxu0
      %v2135 = vadd.f32 %v2058, %v2134
      %v2136 = vpop.f32.mrf.mxu0
      %v2137 = vadd.f32 %v2060, %v2136
      %2138 = vmatmul.bf16.gmra.mxu0 %v1920
      %v2139 = vpop.f32.mrf.mxu0
      %v2140 = vadd.f32 %v2063, %v2139
      %v2141 = vpop.f32.mrf.mxu0
      %v2142 = vadd.f32 %v2065, %v2141
      %2143 = vdwg.mxu0
      %v2144 = vrot.slane %v1909, 2
      %v2145 = vrot.slane %v1910, 2
      %v2146 = vsel %vm650, %v2144, %v2145
      %v2147 = vrot.slane %v1911, 2
      %v2148 = vsel %vm650, %v2145, %v2147
      %v2149 = vrot.slane %v1912, 2
      %v2150 = vsel %vm650, %v2147, %v2149
      %v2151 = vrot.slane %v1913, 2
      %v2152 = vsel %vm650, %v2149, %v2151
      %v2153 = vrot.slane %v1914, 2
      %v2154 = vsel %vm650, %v2151, %v2153
      %v2155 = vrot.slane %v1915, 2
      %v2156 = vsel %vm650, %v2153, %v2155
      %v2157 = vrot.slane %v1916, 2
      %v2158 = vsel %vm650, %v2155, %v2157
      %v2167 = vsel %vm650, %v2157, 0.0
      %v2168 = vpack.c.bf16 %v2148, %v2146
      %v2169 = vpack.c.bf16 %v2152, %v2150
      %v2170 = vpack.c.bf16 %v2156, %v2154
      %v2171 = vpack.c.bf16 %v2167, %v2158
      %s2172 = scalar_lea.vmem %s5, 128
      %v2173 = vld [vmem:[%s2172] sm:$0xf]
      %v2174 = vld [vmem:[%s2172 + $0x4] sm:$0xf]
      %v2175 = vld [vmem:[%s2172 + $0x8] sm:$0xf]
      %v2176 = vld [vmem:[%s2172 + $0xc] sm:$0xf]
      %v2177 = vld [vmem:[%s2172 + $0x10] sm:$0xf]
      %v2178 = vld [vmem:[%s2172 + $0x14] sm:$0xf]
      %v2179 = vld [vmem:[%s2172 + $0x18] sm:$0xf]
      %v2180 = vld [vmem:[%s2172 + $0x1c] sm:$0xf]
      %v2181 = vld [vmem:[%s2172 + $0x20] sm:$0xf]
      %v2182 = vld [vmem:[%s2172 + $0x24] sm:$0xf]
      %v2183 = vld [vmem:[%s2172 + $0x28] sm:$0xf]
      %v2184 = vld [vmem:[%s2172 + $0x2c] sm:$0xf]
      %v2185 = vld [vmem:[%s2172 + $0x30] sm:$0xf]
      %v2186 = vld [vmem:[%s2172 + $0x34] sm:$0xf]
      %v2187 = vld [vmem:[%s2172 + $0x38] sm:$0xf]
      %v2188 = vld [vmem:[%s2172 + $0x3c] sm:$0xf]
      %v2205 = vunpack.c.l.b16 %v2173
      %v2206 = vunpack.c.l.b16 %v2174
      %v2207 = vunpack.c.l.b16 %v2175
      %v2208 = vunpack.c.l.b16 %v2176
      %v2209 = vunpack.c.l.b16 %v2177
      %v2210 = vunpack.c.l.b16 %v2178
      %v2211 = vunpack.c.l.b16 %v2179
      %v2212 = vunpack.c.l.b16 %v2180
      %v2213 = vunpack.c.l.b16 %v2181
      %v2214 = vunpack.c.l.b16 %v2182
      %v2215 = vunpack.c.l.b16 %v2183
      %v2216 = vunpack.c.l.b16 %v2184
      %v2217 = vunpack.c.l.b16 %v2185
      %v2218 = vunpack.c.l.b16 %v2186
      %v2219 = vunpack.c.l.b16 %v2187
      %v2220 = vunpack.c.l.b16 %v2188
      %v2221 = vpack.c.b16 %v2206, %v2205
      %v2222 = vpack.c.b16 %v2208, %v2207
      %v2223 = vpack.c.b16 %v2210, %v2209
      %v2224 = vpack.c.b16 %v2212, %v2211
      %v2225 = vpack.c.b16 %v2214, %v2213
      %v2226 = vpack.c.b16 %v2216, %v2215
      %v2227 = vpack.c.b16 %v2218, %v2217
      %v2228 = vpack.c.b16 %v2220, %v2219
      %2237 = vmatpush.bf16.msra.mxu0 %v2228
      %2238 = vmatpush.bf16.msra.mxu0 %v2227
      %2239 = vmatpush.bf16.msra.mxu0 %v2226
      %2240 = vmatpush.bf16.msra.mxu0 %v2225
      %2241 = vmatpush.bf16.msra.mxu0 %v2224
      %2242 = vmatpush.bf16.msra.mxu0 %v2223
      %2243 = vmatpush.bf16.msra.mxu0 %v2222
      %2244 = vmatpush.bf16.msra.mxu0 %v2221
      %2245 = vmatmul.bf16.gmra.mxu0 %v2168
      %v2246 = vpop.f32.mrf.mxu0
      %v2247 = vadd.f32 0.0, %v2246
      %v2248 = vpop.f32.mrf.mxu0
      %v2249 = vadd.f32 0.0, %v2248
      %2250 = vmatmul.bf16.gmra.mxu0 %v2169
      %v2251 = vpop.f32.mrf.mxu0
      %v2252 = vadd.f32 0.0, %v2251
      %v2253 = vpop.f32.mrf.mxu0
      %v2254 = vadd.f32 0.0, %v2253
      %2255 = vmatmul.bf16.gmra.mxu0 %v2170
      %v2256 = vpop.f32.mrf.mxu0
      %v2257 = vadd.f32 0.0, %v2256
      %v2258 = vpop.f32.mrf.mxu0
      %v2259 = vadd.f32 0.0, %v2258
      %2260 = vmatmul.bf16.gmra.mxu0 %v2171
      %v2261 = vpop.f32.mrf.mxu0
      %v2262 = vadd.f32 0.0, %v2261
      %v2263 = vpop.f32.mrf.mxu0
      %v2264 = vadd.f32 0.0, %v2263
      %2265 = vdwg.mxu0
      %v2266 = vadd.f32 %v2125, %v2247
      %v2267 = vadd.f32 %v2127, %v2249
      %v2268 = vadd.f32 %v2130, %v2252
      %v2269 = vadd.f32 %v2132, %v2254
      %v2270 = vadd.f32 %v2135, %v2257
      %v2271 = vadd.f32 %v2137, %v2259
      %v2272 = vadd.f32 %v2140, %v2262
      %v2273 = vadd.f32 %v2142, %v2264
      %v2274 = vld [vmem:[%s6] sm:$0x1]
      %v2275 = vperm.slane %v2274, 0
      %v2276 = vmul.f32 %v2266, %v2275
      %v2277 = vmul.f32 %v2267, %v2275
      %v2278 = vmul.f32 %v2268, %v2275
      %v2279 = vmul.f32 %v2269, %v2275
      %v2280 = vmul.f32 %v2270, %v2275
      %v2281 = vmul.f32 %v2271, %v2275
      %v2282 = vmul.f32 %v2272, %v2275
      %v2283 = vmul.f32 %v2273, %v2275
      %v2284 = vld [vmem:[%s6 + $0x1] sm:$0x1]
      %v2285 = vperm.slane %v2284, 0
      %v2286 = vadd.f32 %v2276, %v2285
      %v2287 = vadd.f32 %v2277, %v2285
      %v2288 = vadd.f32 %v2278, %v2285
      %v2289 = vadd.f32 %v2279, %v2285
      %v2290 = vadd.f32 %v2280, %v2285
      %v2291 = vadd.f32 %v2281, %v2285
      %v2292 = vadd.f32 %v2282, %v2285
      %v2293 = vadd.f32 %v2283, %v2285
      %v2294 = vmax.f32 %v2286, 0.0
      %v2295 = vmax.f32 %v2287, 0.0
      %v2296 = vmax.f32 %v2288, 0.0
      %v2297 = vmax.f32 %v2289, 0.0
      %v2298 = vmax.f32 %v2290, 0.0
      %v2299 = vmax.f32 %v2291, 0.0
      %v2300 = vmax.f32 %v2292, 0.0
      %v2301 = vmax.f32 %v2293, 0.0
      %v2302 = vpack.c.bf16 %v2295, %v2294
      %v2303 = vpack.c.bf16 %v2297, %v2296
      %v2304 = vpack.c.bf16 %v2299, %v2298
      %v2305 = vpack.c.bf16 %v2301, %v2300
      %v2306 = vld [vmem:[%s7] sm:$0xff]
      %v2307 = vld [vmem:[%s7 + $0x8] sm:$0xff]
      %v2308 = vld [vmem:[%s7 + $0x10] sm:$0xff]
      %v2309 = vld [vmem:[%s7 + $0x18] sm:$0xff]
      %v2310 = vld [vmem:[%s7 + $0x20] sm:$0xff]
      %v2311 = vld [vmem:[%s7 + $0x28] sm:$0xff]
      %v2312 = vld [vmem:[%s7 + $0x30] sm:$0xff]
      %v2313 = vld [vmem:[%s7 + $0x38] sm:$0xff]
      %v2314 = vld [vmem:[%s7 + $0x40] sm:$0xff]
      %v2315 = vld [vmem:[%s7 + $0x48] sm:$0xff]
      %v2316 = vld [vmem:[%s7 + $0x50] sm:$0xff]
      %v2317 = vld [vmem:[%s7 + $0x58] sm:$0xff]
      %v2318 = vld [vmem:[%s7 + $0x60] sm:$0xff]
      %v2319 = vld [vmem:[%s7 + $0x68] sm:$0xff]
      %v2320 = vld [vmem:[%s7 + $0x70] sm:$0xff]
      %v2321 = vld [vmem:[%s7 + $0x78] sm:$0xff]
      %v2330 = vrot.slane %v2294, 1
      %v2331 = vrot.slane %v2295, 1
      %v2332 = vsel %vm517, %v2330, %v2331
      %v2333 = vrot.slane %v2296, 1
      %v2334 = vsel %vm517, %v2331, %v2333
      %v2335 = vrot.slane %v2297, 1
      %v2336 = vsel %vm517, %v2333, %v2335
      %v2337 = vrot.slane %v2298, 1
      %v2338 = vsel %vm517, %v2335, %v2337
      %v2339 = vrot.slane %v2299, 1
      %v2340 = vsel %vm517, %v2337, %v2339
      %v2341 = vrot.slane %v2300, 1
      %v2342 = vsel %vm517, %v2339, %v2341
      %v2343 = vrot.slane %v2301, 1
      %v2344 = vsel %vm517, %v2341, %v2343
      %v2353 = vsel %vm517, %v2343, 0.0
      %v2354 = vpack.c.bf16 %v2334, %v2332
      %v2355 = vpack.c.bf16 %v2338, %v2336
      %v2356 = vpack.c.bf16 %v2342, %v2340
      %v2357 = vpack.c.bf16 %v2353, %v2344
      %s2358 = scalar_lea.vmem %s7, 128
      %v2359 = vld [vmem:[%s2358] sm:$0xff]
      %v2360 = vld [vmem:[%s2358 + $0x8] sm:$0xff]
      %v2361 = vld [vmem:[%s2358 + $0x10] sm:$0xff]
      %v2362 = vld [vmem:[%s2358 + $0x18] sm:$0xff]
      %v2363 = vld [vmem:[%s2358 + $0x20] sm:$0xff]
      %v2364 = vld [vmem:[%s2358 + $0x28] sm:$0xff]
      %v2365 = vld [vmem:[%s2358 + $0x30] sm:$0xff]
      %v2366 = vld [vmem:[%s2358 + $0x38] sm:$0xff]
      %v2367 = vld [vmem:[%s2358 + $0x40] sm:$0xff]
      %v2368 = vld [vmem:[%s2358 + $0x48] sm:$0xff]
      %v2369 = vld [vmem:[%s2358 + $0x50] sm:$0xff]
      %v2370 = vld [vmem:[%s2358 + $0x58] sm:$0xff]
      %v2371 = vld [vmem:[%s2358 + $0x60] sm:$0xff]
      %v2372 = vld [vmem:[%s2358 + $0x68] sm:$0xff]
      %v2373 = vld [vmem:[%s2358 + $0x70] sm:$0xff]
      %v2374 = vld [vmem:[%s2358 + $0x78] sm:$0xff]
      %v2391 = vunpack.c.l.b16 %v2359
      %v2392 = vunpack.c.h.b16 %v2359
      %v2393 = vunpack.c.l.b16 %v2360
      %v2394 = vunpack.c.h.b16 %v2360
      %v2395 = vunpack.c.l.b16 %v2361
      %v2396 = vunpack.c.h.b16 %v2361
      %v2397 = vunpack.c.l.b16 %v2362
      %v2398 = vunpack.c.h.b16 %v2362
      %v2399 = vunpack.c.l.b16 %v2363
      %v2400 = vunpack.c.h.b16 %v2363
      %v2401 = vunpack.c.l.b16 %v2364
      %v2402 = vunpack.c.h.b16 %v2364
      %v2403 = vunpack.c.l.b16 %v2365
      %v2404 = vunpack.c.h.b16 %v2365
      %v2405 = vunpack.c.l.b16 %v2366
      %v2406 = vunpack.c.h.b16 %v2366
      %v2407 = vunpack.c.l.b16 %v2367
      %v2408 = vunpack.c.h.b16 %v2367
      %v2409 = vunpack.c.l.b16 %v2368
      %v2410 = vunpack.c.h.b16 %v2368
      %v2411 = vunpack.c.l.b16 %v2369
      %v2412 = vunpack.c.h.b16 %v2369
      %v2413 = vunpack.c.l.b16 %v2370
      %v2414 = vunpack.c.h.b16 %v2370
      %v2415 = vunpack.c.l.b16 %v2371
      %v2416 = vunpack.c.h.b16 %v2371
      %v2417 = vunpack.c.l.b16 %v2372
      %v2418 = vunpack.c.h.b16 %v2372
      %v2419 = vunpack.c.l.b16 %v2373
      %v2420 = vunpack.c.h.b16 %v2373
      %v2421 = vunpack.c.l.b16 %v2374
      %v2422 = vunpack.c.h.b16 %v2374
      %v2423 = vpack.c.b16 %v2393, %v2391
      %v2424 = vpack.c.b16 %v2394, %v2392
      %v2425 = vpack.c.b16 %v2397, %v2395
      %v2426 = vpack.c.b16 %v2398, %v2396
      %v2427 = vpack.c.b16 %v2401, %v2399
      %v2428 = vpack.c.b16 %v2402, %v2400
      %v2429 = vpack.c.b16 %v2405, %v2403
      %v2430 = vpack.c.b16 %v2406, %v2404
      %v2431 = vpack.c.b16 %v2409, %v2407
      %v2432 = vpack.c.b16 %v2410, %v2408
      %v2433 = vpack.c.b16 %v2413, %v2411
      %v2434 = vpack.c.b16 %v2414, %v2412
      %v2435 = vpack.c.b16 %v2417, %v2415
      %v2436 = vpack.c.b16 %v2418, %v2416
      %v2437 = vpack.c.b16 %v2421, %v2419
      %v2438 = vpack.c.b16 %v2422, %v2420
      %2455 = vmatpush.bf16.msra.mxu0 %v2437
      %2456 = vmatpush.bf16.msra.mxu0 %v2435
      %2457 = vmatpush.bf16.msra.mxu0 %v2433
      %2458 = vmatpush.bf16.msra.mxu0 %v2431
      %2459 = vmatpush.bf16.msra.mxu0 %v2429
      %2460 = vmatpush.bf16.msra.mxu0 %v2427
      %2461 = vmatpush.bf16.msra.mxu0 %v2425
      %2462 = vmatpush.bf16.msra.mxu0 %v2423
      %2463 = vmatmul.bf16.gmra.mxu0 %v2354
      %v2464 = vpop.f32.mrf.mxu0
      %v2465 = vadd.f32 0.0, %v2464
      %v2466 = vpop.f32.mrf.mxu0
      %v2467 = vadd.f32 0.0, %v2466
      %2468 = vmatmul.bf16.gmra.mxu0 %v2355
      %v2469 = vpop.f32.mrf.mxu0
      %v2470 = vadd.f32 0.0, %v2469
      %v2471 = vpop.f32.mrf.mxu0
      %v2472 = vadd.f32 0.0, %v2471
      %2473 = vmatmul.bf16.gmra.mxu0 %v2356
      %v2474 = vpop.f32.mrf.mxu0
      %v2475 = vadd.f32 0.0, %v2474
      %v2476 = vpop.f32.mrf.mxu0
      %v2477 = vadd.f32 0.0, %v2476
      %2478 = vmatmul.bf16.gmra.mxu0 %v2357
      %v2479 = vpop.f32.mrf.mxu0
      %v2480 = vadd.f32 0.0, %v2479
      %v2481 = vpop.f32.mrf.mxu0
      %v2482 = vadd.f32 0.0, %v2481
      %2483 = vdwg.mxu0
      %2484 = vmatpush.bf16.msra.mxu0 %v2438
      %2485 = vmatpush.bf16.msra.mxu0 %v2436
      %2486 = vmatpush.bf16.msra.mxu0 %v2434
      %2487 = vmatpush.bf16.msra.mxu0 %v2432
      %2488 = vmatpush.bf16.msra.mxu0 %v2430
      %2489 = vmatpush.bf16.msra.mxu0 %v2428
      %2490 = vmatpush.bf16.msra.mxu0 %v2426
      %2491 = vmatpush.bf16.msra.mxu0 %v2424
      %2492 = vmatmul.bf16.gmra.mxu0 %v2354
      %v2493 = vpop.f32.mrf.mxu0
      %v2494 = vadd.f32 0.0, %v2493
      %v2495 = vpop.f32.mrf.mxu0
      %v2496 = vadd.f32 0.0, %v2495
      %2497 = vmatmul.bf16.gmra.mxu0 %v2355
      %v2498 = vpop.f32.mrf.mxu0
      %v2499 = vadd.f32 0.0, %v2498
      %v2500 = vpop.f32.mrf.mxu0
      %v2501 = vadd.f32 0.0, %v2500
      %2502 = vmatmul.bf16.gmra.mxu0 %v2356
      %v2503 = vpop.f32.mrf.mxu0
      %v2504 = vadd.f32 0.0, %v2503
      %v2505 = vpop.f32.mrf.mxu0
      %v2506 = vadd.f32 0.0, %v2505
      %2507 = vmatmul.bf16.gmra.mxu0 %v2357
      %v2508 = vpop.f32.mrf.mxu0
      %v2509 = vadd.f32 0.0, %v2508
      %v2510 = vpop.f32.mrf.mxu0
      %v2511 = vadd.f32 0.0, %v2510
      %2512 = vdwg.mxu0
      %v2529 = vunpack.c.l.b16 %v2306
      %v2530 = vunpack.c.h.b16 %v2306
      %v2531 = vunpack.c.l.b16 %v2307
      %v2532 = vunpack.c.h.b16 %v2307
      %v2533 = vunpack.c.l.b16 %v2308
      %v2534 = vunpack.c.h.b16 %v2308
      %v2535 = vunpack.c.l.b16 %v2309
      %v2536 = vunpack.c.h.b16 %v2309
      %v2537 = vunpack.c.l.b16 %v2310
      %v2538 = vunpack.c.h.b16 %v2310
      %v2539 = vunpack.c.l.b16 %v2311
      %v2540 = vunpack.c.h.b16 %v2311
      %v2541 = vunpack.c.l.b16 %v2312
      %v2542 = vunpack.c.h.b16 %v2312
      %v2543 = vunpack.c.l.b16 %v2313
      %v2544 = vunpack.c.h.b16 %v2313
      %v2545 = vunpack.c.l.b16 %v2314
      %v2546 = vunpack.c.h.b16 %v2314
      %v2547 = vunpack.c.l.b16 %v2315
      %v2548 = vunpack.c.h.b16 %v2315
      %v2549 = vunpack.c.l.b16 %v2316
      %v2550 = vunpack.c.h.b16 %v2316
      %v2551 = vunpack.c.l.b16 %v2317
      %v2552 = vunpack.c.h.b16 %v2317
      %v2553 = vunpack.c.l.b16 %v2318
      %v2554 = vunpack.c.h.b16 %v2318
      %v2555 = vunpack.c.l.b16 %v2319
      %v2556 = vunpack.c.h.b16 %v2319
      %v2557 = vunpack.c.l.b16 %v2320
      %v2558 = vunpack.c.h.b16 %v2320
      %v2559 = vunpack.c.l.b16 %v2321
      %v2560 = vunpack.c.h.b16 %v2321
      %v2561 = vpack.c.b16 %v2531, %v2529
      %v2562 = vpack.c.b16 %v2532, %v2530
      %v2563 = vpack.c.b16 %v2535, %v2533
      %v2564 = vpack.c.b16 %v2536, %v2534
      %v2565 = vpack.c.b16 %v2539, %v2537
      %v2566 = vpack.c.b16 %v2540, %v2538
      %v2567 = vpack.c.b16 %v2543, %v2541
      %v2568 = vpack.c.b16 %v2544, %v2542
      %v2569 = vpack.c.b16 %v2547, %v2545
      %v2570 = vpack.c.b16 %v2548, %v2546
      %v2571 = vpack.c.b16 %v2551, %v2549
      %v2572 = vpack.c.b16 %v2552, %v2550
      %v2573 = vpack.c.b16 %v2555, %v2553
      %v2574 = vpack.c.b16 %v2556, %v2554
      %v2575 = vpack.c.b16 %v2559, %v2557
      %v2576 = vpack.c.b16 %v2560, %v2558
      %2593 = vmatpush.bf16.msra.mxu0 %v2575
      %2594 = vmatpush.bf16.msra.mxu0 %v2573
      %2595 = vmatpush.bf16.msra.mxu0 %v2571
      %2596 = vmatpush.bf16.msra.mxu0 %v2569
      %2597 = vmatpush.bf16.msra.mxu0 %v2567
      %2598 = vmatpush.bf16.msra.mxu0 %v2565
      %2599 = vmatpush.bf16.msra.mxu0 %v2563
      %2600 = vmatpush.bf16.msra.mxu0 %v2561
      %2601 = vmatmul.bf16.gmra.mxu0 %v2302
      %v2602 = vpop.f32.mrf.mxu0
      %v2603 = vadd.f32 %v2465, %v2602
      %v2604 = vpop.f32.mrf.mxu0
      %v2605 = vadd.f32 %v2467, %v2604
      %2606 = vmatmul.bf16.gmra.mxu0 %v2303
      %v2607 = vpop.f32.mrf.mxu0
      %v2608 = vadd.f32 %v2470, %v2607
      %v2609 = vpop.f32.mrf.mxu0
      %v2610 = vadd.f32 %v2472, %v2609
      %2611 = vmatmul.bf16.gmra.mxu0 %v2304
      %v2612 = vpop.f32.mrf.mxu0
      %v2613 = vadd.f32 %v2475, %v2612
      %v2614 = vpop.f32.mrf.mxu0
      %v2615 = vadd.f32 %v2477, %v2614
      %2616 = vmatmul.bf16.gmra.mxu0 %v2305
      %v2617 = vpop.f32.mrf.mxu0
      %v2618 = vadd.f32 %v2480, %v2617
      %v2619 = vpop.f32.mrf.mxu0
      %v2620 = vadd.f32 %v2482, %v2619
      %2621 = vdwg.mxu0
      %2622 = vmatpush.bf16.msra.mxu0 %v2576
      %2623 = vmatpush.bf16.msra.mxu0 %v2574
      %2624 = vmatpush.bf16.msra.mxu0 %v2572
      %2625 = vmatpush.bf16.msra.mxu0 %v2570
      %2626 = vmatpush.bf16.msra.mxu0 %v2568
      %2627 = vmatpush.bf16.msra.mxu0 %v2566
      %2628 = vmatpush.bf16.msra.mxu0 %v2564
      %2629 = vmatpush.bf16.msra.mxu0 %v2562
      %2630 = vmatmul.bf16.gmra.mxu0 %v2302
      %v2631 = vpop.f32.mrf.mxu0
      %v2632 = vadd.f32 %v2494, %v2631
      %v2633 = vpop.f32.mrf.mxu0
      %v2634 = vadd.f32 %v2496, %v2633
      %2635 = vmatmul.bf16.gmra.mxu0 %v2303
      %v2636 = vpop.f32.mrf.mxu0
      %v2637 = vadd.f32 %v2499, %v2636
      %v2638 = vpop.f32.mrf.mxu0
      %v2639 = vadd.f32 %v2501, %v2638
      %2640 = vmatmul.bf16.gmra.mxu0 %v2304
      %v2641 = vpop.f32.mrf.mxu0
      %v2642 = vadd.f32 %v2504, %v2641
      %v2643 = vpop.f32.mrf.mxu0
      %v2644 = vadd.f32 %v2506, %v2643
      %2645 = vmatmul.bf16.gmra.mxu0 %v2305
      %v2646 = vpop.f32.mrf.mxu0
      %v2647 = vadd.f32 %v2509, %v2646
      %v2648 = vpop.f32.mrf.mxu0
      %v2649 = vadd.f32 %v2511, %v2648
      %2650 = vdwg.mxu0
      %v2651 = vrot.slane %v2294, 2
      %v2652 = vrot.slane %v2295, 2
      %v2653 = vsel %vm650, %v2651, %v2652
      %v2654 = vrot.slane %v2296, 2
      %v2655 = vsel %vm650, %v2652, %v2654
      %v2656 = vrot.slane %v2297, 2
      %v2657 = vsel %vm650, %v2654, %v2656
      %v2658 = vrot.slane %v2298, 2
      %v2659 = vsel %vm650, %v2656, %v2658
      %v2660 = vrot.slane %v2299, 2
      %v2661 = vsel %vm650, %v2658, %v2660
      %v2662 = vrot.slane %v2300, 2
      %v2663 = vsel %vm650, %v2660, %v2662
      %v2664 = vrot.slane %v2301, 2
      %v2665 = vsel %vm650, %v2662, %v2664
      %v2674 = vsel %vm650, %v2664, 0.0
      %v2675 = vpack.c.bf16 %v2655, %v2653
      %v2676 = vpack.c.bf16 %v2659, %v2657
      %v2677 = vpack.c.bf16 %v2663, %v2661
      %v2678 = vpack.c.bf16 %v2674, %v2665
      %s2679 = scalar_lea.vmem %s7, 256
      %v2680 = vld [vmem:[%s2679] sm:$0xff]
      %v2681 = vld [vmem:[%s2679 + $0x8] sm:$0xff]
      %v2682 = vld [vmem:[%s2679 + $0x10] sm:$0xff]
      %v2683 = vld [vmem:[%s2679 + $0x18] sm:$0xff]
      %v2684 = vld [vmem:[%s2679 + $0x20] sm:$0xff]
      %v2685 = vld [vmem:[%s2679 + $0x28] sm:$0xff]
      %v2686 = vld [vmem:[%s2679 + $0x30] sm:$0xff]
      %v2687 = vld [vmem:[%s2679 + $0x38] sm:$0xff]
      %v2688 = vld [vmem:[%s2679 + $0x40] sm:$0xff]
      %v2689 = vld [vmem:[%s2679 + $0x48] sm:$0xff]
      %v2690 = vld [vmem:[%s2679 + $0x50] sm:$0xff]
      %v2691 = vld [vmem:[%s2679 + $0x58] sm:$0xff]
      %v2692 = vld [vmem:[%s2679 + $0x60] sm:$0xff]
      %v2693 = vld [vmem:[%s2679 + $0x68] sm:$0xff]
      %v2694 = vld [vmem:[%s2679 + $0x70] sm:$0xff]
      %v2695 = vld [vmem:[%s2679 + $0x78] sm:$0xff]
      %v2712 = vunpack.c.l.b16 %v2680
      %v2713 = vunpack.c.h.b16 %v2680
      %v2714 = vunpack.c.l.b16 %v2681
      %v2715 = vunpack.c.h.b16 %v2681
      %v2716 = vunpack.c.l.b16 %v2682
      %v2717 = vunpack.c.h.b16 %v2682
      %v2718 = vunpack.c.l.b16 %v2683
      %v2719 = vunpack.c.h.b16 %v2683
      %v2720 = vunpack.c.l.b16 %v2684
      %v2721 = vunpack.c.h.b16 %v2684
      %v2722 = vunpack.c.l.b16 %v2685
      %v2723 = vunpack.c.h.b16 %v2685
      %v2724 = vunpack.c.l.b16 %v2686
      %v2725 = vunpack.c.h.b16 %v2686
      %v2726 = vunpack.c.l.b16 %v2687
      %v2727 = vunpack.c.h.b16 %v2687
      %v2728 = vunpack.c.l.b16 %v2688
      %v2729 = vunpack.c.h.b16 %v2688
      %v2730 = vunpack.c.l.b16 %v2689
      %v2731 = vunpack.c.h.b16 %v2689
      %v2732 = vunpack.c.l.b16 %v2690
      %v2733 = vunpack.c.h.b16 %v2690
      %v2734 = vunpack.c.l.b16 %v2691
      %v2735 = vunpack.c.h.b16 %v2691
      %v2736 = vunpack.c.l.b16 %v2692
      %v2737 = vunpack.c.h.b16 %v2692
      %v2738 = vunpack.c.l.b16 %v2693
      %v2739 = vunpack.c.h.b16 %v2693
      %v2740 = vunpack.c.l.b16 %v2694
      %v2741 = vunpack.c.h.b16 %v2694
      %v2742 = vunpack.c.l.b16 %v2695
      %v2743 = vunpack.c.h.b16 %v2695
      %v2744 = vpack.c.b16 %v2714, %v2712
      %v2745 = vpack.c.b16 %v2715, %v2713
      %v2746 = vpack.c.b16 %v2718, %v2716
      %v2747 = vpack.c.b16 %v2719, %v2717
      %v2748 = vpack.c.b16 %v2722, %v2720
      %v2749 = vpack.c.b16 %v2723, %v2721
      %v2750 = vpack.c.b16 %v2726, %v2724
      %v2751 = vpack.c.b16 %v2727, %v2725
      %v2752 = vpack.c.b16 %v2730, %v2728
      %v2753 = vpack.c.b16 %v2731, %v2729
      %v2754 = vpack.c.b16 %v2734, %v2732
      %v2755 = vpack.c.b16 %v2735, %v2733
      %v2756 = vpack.c.b16 %v2738, %v2736
      %v2757 = vpack.c.b16 %v2739, %v2737
      %v2758 = vpack.c.b16 %v2742, %v2740
      %v2759 = vpack.c.b16 %v2743, %v2741
      %2776 = vmatpush.bf16.msra.mxu0 %v2758
      %2777 = vmatpush.bf16.msra.mxu0 %v2756
      %2778 = vmatpush.bf16.msra.mxu0 %v2754
      %2779 = vmatpush.bf16.msra.mxu0 %v2752
      %2780 = vmatpush.bf16.msra.mxu0 %v2750
      %2781 = vmatpush.bf16.msra.mxu0 %v2748
      %2782 = vmatpush.bf16.msra.mxu0 %v2746
      %2783 = vmatpush.bf16.msra.mxu0 %v2744
      %2784 = vmatmul.bf16.gmra.mxu0 %v2675
      %v2785 = vpop.f32.mrf.mxu0
      %v2786 = vadd.f32 0.0, %v2785
      %v2787 = vpop.f32.mrf.mxu0
      %v2788 = vadd.f32 0.0, %v2787
      %2789 = vmatmul.bf16.gmra.mxu0 %v2676
      %v2790 = vpop.f32.mrf.mxu0
      %v2791 = vadd.f32 0.0, %v2790
      %v2792 = vpop.f32.mrf.mxu0
      %v2793 = vadd.f32 0.0, %v2792
      %2794 = vmatmul.bf16.gmra.mxu0 %v2677
      %v2795 = vpop.f32.mrf.mxu0
      %v2796 = vadd.f32 0.0, %v2795
      %v2797 = vpop.f32.mrf.mxu0
      %v2798 = vadd.f32 0.0, %v2797
      %2799 = vmatmul.bf16.gmra.mxu0 %v2678
      %v2800 = vpop.f32.mrf.mxu0
      %v2801 = vadd.f32 0.0, %v2800
      %v2802 = vpop.f32.mrf.mxu0
      %v2803 = vadd.f32 0.0, %v2802
      %2804 = vdwg.mxu0
      %2805 = vmatpush.bf16.msra.mxu0 %v2759
      %2806 = vmatpush.bf16.msra.mxu0 %v2757
      %2807 = vmatpush.bf16.msra.mxu0 %v2755
      %2808 = vmatpush.bf16.msra.mxu0 %v2753
      %2809 = vmatpush.bf16.msra.mxu0 %v2751
      %2810 = vmatpush.bf16.msra.mxu0 %v2749
      %2811 = vmatpush.bf16.msra.mxu0 %v2747
      %2812 = vmatpush.bf16.msra.mxu0 %v2745
      %2813 = vmatmul.bf16.gmra.mxu0 %v2675
      %v2814 = vpop.f32.mrf.mxu0
      %v2815 = vadd.f32 0.0, %v2814
      %v2816 = vpop.f32.mrf.mxu0
      %v2817 = vadd.f32 0.0, %v2816
      %2818 = vmatmul.bf16.gmra.mxu0 %v2676
      %v2819 = vpop.f32.mrf.mxu0
      %v2820 = vadd.f32 0.0, %v2819
      %v2821 = vpop.f32.mrf.mxu0
      %v2822 = vadd.f32 0.0, %v2821
      %2823 = vmatmul.bf16.gmra.mxu0 %v2677
      %v2824 = vpop.f32.mrf.mxu0
      %v2825 = vadd.f32 0.0, %v2824
      %v2826 = vpop.f32.mrf.mxu0
      %v2827 = vadd.f32 0.0, %v2826
      %2828 = vmatmul.bf16.gmra.mxu0 %v2678
      %v2829 = vpop.f32.mrf.mxu0
      %v2830 = vadd.f32 0.0, %v2829
      %v2831 = vpop.f32.mrf.mxu0
      %v2832 = vadd.f32 0.0, %v2831
      %2833 = vdwg.mxu0
      %v2834 = vadd.f32 %v2603, %v2786
      %v2835 = vadd.f32 %v2632, %v2815
      %v2836 = vadd.f32 %v2605, %v2788
      %v2837 = vadd.f32 %v2634, %v2817
      %v2838 = vadd.f32 %v2608, %v2791
      %v2839 = vadd.f32 %v2637, %v2820
      %v2840 = vadd.f32 %v2610, %v2793
      %v2841 = vadd.f32 %v2639, %v2822
      %v2842 = vadd.f32 %v2613, %v2796
      %v2843 = vadd.f32 %v2642, %v2825
      %v2844 = vadd.f32 %v2615, %v2798
      %v2845 = vadd.f32 %v2644, %v2827
      %v2846 = vadd.f32 %v2618, %v2801
      %v2847 = vadd.f32 %v2647, %v2830
      %v2848 = vadd.f32 %v2620, %v2803
      %v2849 = vadd.f32 %v2649, %v2832
      %v2850 = vld [vmem:[%s8] ss:$2 sm:$0x3]
      %v2852 = vperm.slane %v2850, 0
      %v2853 = vperm.slane %v2850, 1
      %v2856 = vmul.f32 %v2834, %v2852
      %v2857 = vmul.f32 %v2835, %v2853
      %v2858 = vmul.f32 %v2836, %v2852
      %v2859 = vmul.f32 %v2837, %v2853
      %v2860 = vmul.f32 %v2838, %v2852
      %v2861 = vmul.f32 %v2839, %v2853
      %v2862 = vmul.f32 %v2840, %v2852
      %v2863 = vmul.f32 %v2841, %v2853
      %v2864 = vmul.f32 %v2842, %v2852
      %v2865 = vmul.f32 %v2843, %v2853
      %v2866 = vmul.f32 %v2844, %v2852
      %v2867 = vmul.f32 %v2845, %v2853
      %v2868 = vmul.f32 %v2846, %v2852
      %v2869 = vmul.f32 %v2847, %v2853
      %v2870 = vmul.f32 %v2848, %v2852
      %v2871 = vmul.f32 %v2849, %v2853
      %s2872 = scalar_lea.vmem %s8, 1
      %v2873 = vld [vmem:[%s2872] ss:$2 sm:$0x3]
      %v2875 = vperm.slane %v2873, 0
      %v2876 = vperm.slane %v2873, 1
      %v2879 = vadd.f32 %v2856, %v2875
      %v2880 = vadd.f32 %v2857, %v2876
      %v2881 = vadd.f32 %v2858, %v2875
      %v2882 = vadd.f32 %v2859, %v2876
      %v2883 = vadd.f32 %v2860, %v2875
      %v2884 = vadd.f32 %v2861, %v2876
      %v2885 = vadd.f32 %v2862, %v2875
      %v2886 = vadd.f32 %v2863, %v2876
      %v2887 = vadd.f32 %v2864, %v2875
      %v2888 = vadd.f32 %v2865, %v2876
      %v2889 = vadd.f32 %v2866, %v2875
      %v2890 = vadd.f32 %v2867, %v2876
      %v2891 = vadd.f32 %v2868, %v2875
      %v2892 = vadd.f32 %v2869, %v2876
      %v2893 = vadd.f32 %v2870, %v2875
      %v2894 = vadd.f32 %v2871, %v2876
      %v2895 = vmax.f32 %v2879, 0.0
      %v2896 = vmax.f32 %v2880, 0.0
      %v2897 = vmax.f32 %v2881, 0.0
      %v2898 = vmax.f32 %v2882, 0.0
      %v2899 = vmax.f32 %v2883, 0.0
      %v2900 = vmax.f32 %v2884, 0.0
      %v2901 = vmax.f32 %v2885, 0.0
      %v2902 = vmax.f32 %v2886, 0.0
      %v2903 = vmax.f32 %v2887, 0.0
      %v2904 = vmax.f32 %v2888, 0.0
      %v2905 = vmax.f32 %v2889, 0.0
      %v2906 = vmax.f32 %v2890, 0.0
      %v2907 = vmax.f32 %v2891, 0.0
      %v2908 = vmax.f32 %v2892, 0.0
      %v2909 = vmax.f32 %v2893, 0.0
      %v2910 = vmax.f32 %v2894, 0.0
      %v2911 = vpack.c.bf16 %v2897, %v2895
      %v2912 = vpack.c.bf16 %v2898, %v2896
      %v2913 = vpack.c.bf16 %v2901, %v2899
      %v2914 = vpack.c.bf16 %v2902, %v2900
      %v2915 = vpack.c.bf16 %v2905, %v2903
      %v2916 = vpack.c.bf16 %v2906, %v2904
      %v2917 = vpack.c.bf16 %v2909, %v2907
      %v2918 = vpack.c.bf16 %v2910, %v2908
      %v2919 = vld [vmem:[%s9] sm:$0xff]
      %v2920 = vld [vmem:[%s9 + $0x8] sm:$0xff]
      %v2921 = vld [vmem:[%s9 + $0x10] sm:$0xff]
      %v2922 = vld [vmem:[%s9 + $0x18] sm:$0xff]
      %v2923 = vld [vmem:[%s9 + $0x20] sm:$0xff]
      %v2924 = vld [vmem:[%s9 + $0x28] sm:$0xff]
      %v2925 = vld [vmem:[%s9 + $0x30] sm:$0xff]
      %v2926 = vld [vmem:[%s9 + $0x38] sm:$0xff]
      %v2927 = vld [vmem:[%s9 + $0x40] sm:$0xff]
      %v2928 = vld [vmem:[%s9 + $0x48] sm:$0xff]
      %v2929 = vld [vmem:[%s9 + $0x50] sm:$0xff]
      %v2930 = vld [vmem:[%s9 + $0x58] sm:$0xff]
      %v2931 = vld [vmem:[%s9 + $0x60] sm:$0xff]
      %v2932 = vld [vmem:[%s9 + $0x68] sm:$0xff]
      %v2933 = vld [vmem:[%s9 + $0x70] sm:$0xff]
      %v2934 = vld [vmem:[%s9 + $0x78] sm:$0xff]
      %v2935 = vld [vmem:[%s9 + $0x80] sm:$0xff]
      %v2936 = vld [vmem:[%s9 + $0x88] sm:$0xff]
      %v2937 = vld [vmem:[%s9 + $0x90] sm:$0xff]
      %v2938 = vld [vmem:[%s9 + $0x98] sm:$0xff]
      %v2939 = vld [vmem:[%s9 + $0xa0] sm:$0xff]
      %v2940 = vld [vmem:[%s9 + $0xa8] sm:$0xff]
      %v2941 = vld [vmem:[%s9 + $0xb0] sm:$0xff]
      %v2942 = vld [vmem:[%s9 + $0xb8] sm:$0xff]
      %v2943 = vld [vmem:[%s9 + $0xc0] sm:$0xff]
      %v2944 = vld [vmem:[%s9 + $0xc8] sm:$0xff]
      %v2945 = vld [vmem:[%s9 + $0xd0] sm:$0xff]
      %v2946 = vld [vmem:[%s9 + $0xd8] sm:$0xff]
      %v2947 = vld [vmem:[%s9 + $0xe0] sm:$0xff]
      %v2948 = vld [vmem:[%s9 + $0xe8] sm:$0xff]
      %v2949 = vld [vmem:[%s9 + $0xf0] sm:$0xff]
      %v2950 = vld [vmem:[%s9 + $0xf8] sm:$0xff]
      %v2951 = vld [vmem:[%s9 + $0x100] sm:$0xff]
      %v2952 = vld [vmem:[%s9 + $0x108] sm:$0xff]
      %v2953 = vld [vmem:[%s9 + $0x110] sm:$0xff]
      %v2954 = vld [vmem:[%s9 + $0x118] sm:$0xff]
      %v2955 = vld [vmem:[%s9 + $0x120] sm:$0xff]
      %v2956 = vld [vmem:[%s9 + $0x128] sm:$0xff]
      %v2957 = vld [vmem:[%s9 + $0x130] sm:$0xff]
      %v2958 = vld [vmem:[%s9 + $0x138] sm:$0xff]
      %v2959 = vld [vmem:[%s9 + $0x140] sm:$0xff]
      %v2960 = vld [vmem:[%s9 + $0x148] sm:$0xff]
      %v2961 = vld [vmem:[%s9 + $0x150] sm:$0xff]
      %v2962 = vld [vmem:[%s9 + $0x158] sm:$0xff]
      %v2963 = vld [vmem:[%s9 + $0x160] sm:$0xff]
      %v2964 = vld [vmem:[%s9 + $0x168] sm:$0xff]
      %v2965 = vld [vmem:[%s9 + $0x170] sm:$0xff]
      %v2966 = vld [vmem:[%s9 + $0x178] sm:$0xff]
      %v2967 = vld [vmem:[%s9 + $0x180] sm:$0xff]
      %v2968 = vld [vmem:[%s9 + $0x188] sm:$0xff]
      %v2969 = vld [vmem:[%s9 + $0x190] sm:$0xff]
      %v2970 = vld [vmem:[%s9 + $0x198] sm:$0xff]
      %v2971 = vld [vmem:[%s9 + $0x1a0] sm:$0xff]
      %v2972 = vld [vmem:[%s9 + $0x1a8] sm:$0xff]
      %v2973 = vld [vmem:[%s9 + $0x1b0] sm:$0xff]
      %v2974 = vld [vmem:[%s9 + $0x1b8] sm:$0xff]
      %v2975 = vld [vmem:[%s9 + $0x1c0] sm:$0xff]
      %v2976 = vld [vmem:[%s9 + $0x1c8] sm:$0xff]
      %v2977 = vld [vmem:[%s9 + $0x1d0] sm:$0xff]
      %v2978 = vld [vmem:[%s9 + $0x1d8] sm:$0xff]
      %v2979 = vld [vmem:[%s9 + $0x1e0] sm:$0xff]
      %v2980 = vld [vmem:[%s9 + $0x1e8] sm:$0xff]
      %v2981 = vld [vmem:[%s9 + $0x1f0] sm:$0xff]
      %v2982 = vld [vmem:[%s9 + $0x1f8] sm:$0xff]
      %v2999 = vrot.slane %v2895, 1
      %v3000 = vrot.slane %v2897, 1
      %v3001 = vsel %vm517, %v2999, %v3000
      %v3002 = vrot.slane %v2896, 1
      %v3003 = vrot.slane %v2898, 1
      %v3004 = vsel %vm517, %v3002, %v3003
      %v3005 = vrot.slane %v2899, 1
      %v3006 = vsel %vm517, %v3000, %v3005
      %v3007 = vrot.slane %v2900, 1
      %v3008 = vsel %vm517, %v3003, %v3007
      %v3009 = vrot.slane %v2901, 1
      %v3010 = vsel %vm517, %v3005, %v3009
      %v3011 = vrot.slane %v2902, 1
      %v3012 = vsel %vm517, %v3007, %v3011
      %v3013 = vrot.slane %v2903, 1
      %v3014 = vsel %vm517, %v3009, %v3013
      %v3015 = vrot.slane %v2904, 1
      %v3016 = vsel %vm517, %v3011, %v3015
      %v3017 = vrot.slane %v2905, 1
      %v3018 = vsel %vm517, %v3013, %v3017
      %v3019 = vrot.slane %v2906, 1
      %v3020 = vsel %vm517, %v3015, %v3019
      %v3021 = vrot.slane %v2907, 1
      %v3022 = vsel %vm517, %v3017, %v3021
      %v3023 = vrot.slane %v2908, 1
      %v3024 = vsel %vm517, %v3019, %v3023
      %v3025 = vrot.slane %v2909, 1
      %v3026 = vsel %vm517, %v3021, %v3025
      %v3027 = vrot.slane %v2910, 1
      %v3028 = vsel %vm517, %v3023, %v3027
      %v3045 = vsel %vm517, %v3025, 0.0
      %v3046 = vsel %vm517, %v3027, 0.0
      %v3047 = vpack.c.bf16 %v3006, %v3001
      %v3048 = vpack.c.bf16 %v3008, %v3004
      %v3049 = vpack.c.bf16 %v3014, %v3010
      %v3050 = vpack.c.bf16 %v3016, %v3012
      %v3051 = vpack.c.bf16 %v3022, %v3018
      %v3052 = vpack.c.bf16 %v3024, %v3020
      %v3053 = vpack.c.bf16 %v3045, %v3026
      %v3054 = vpack.c.bf16 %v3046, %v3028
      %s3055 = scalar_lea.vmem %s9, 512
      %v3056 = vld [vmem:[%s3055] sm:$0xff]
      %v3057 = vld [vmem:[%s3055 + $0x8] sm:$0xff]
      %v3058 = vld [vmem:[%s3055 + $0x10] sm:$0xff]
      %v3059 = vld [vmem:[%s3055 + $0x18] sm:$0xff]
      %v3060 = vld [vmem:[%s3055 + $0x20] sm:$0xff]
      %v3061 = vld [vmem:[%s3055 + $0x28] sm:$0xff]
      %v3062 = vld [vmem:[%s3055 + $0x30] sm:$0xff]
      %v3063 = vld [vmem:[%s3055 + $0x38] sm:$0xff]
      %v3064 = vld [vmem:[%s3055 + $0x40] sm:$0xff]
      %v3065 = vld [vmem:[%s3055 + $0x48] sm:$0xff]
      %v3066 = vld [vmem:[%s3055 + $0x50] sm:$0xff]
      %v3067 = vld [vmem:[%s3055 + $0x58] sm:$0xff]
      %v3068 = vld [vmem:[%s3055 + $0x60] sm:$0xff]
      %v3069 = vld [vmem:[%s3055 + $0x68] sm:$0xff]
      %v3070 = vld [vmem:[%s3055 + $0x70] sm:$0xff]
      %v3071 = vld [vmem:[%s3055 + $0x78] sm:$0xff]
      %v3072 = vld [vmem:[%s3055 + $0x80] sm:$0xff]
      %v3073 = vld [vmem:[%s3055 + $0x88] sm:$0xff]
      %v3074 = vld [vmem:[%s3055 + $0x90] sm:$0xff]
      %v3075 = vld [vmem:[%s3055 + $0x98] sm:$0xff]
      %v3076 = vld [vmem:[%s3055 + $0xa0] sm:$0xff]
      %v3077 = vld [vmem:[%s3055 + $0xa8] sm:$0xff]
      %v3078 = vld [vmem:[%s3055 + $0xb0] sm:$0xff]
      %v3079 = vld [vmem:[%s3055 + $0xb8] sm:$0xff]
      %v3080 = vld [vmem:[%s3055 + $0xc0] sm:$0xff]
      %v3081 = vld [vmem:[%s3055 + $0xc8] sm:$0xff]
      %v3082 = vld [vmem:[%s3055 + $0xd0] sm:$0xff]
      %v3083 = vld [vmem:[%s3055 + $0xd8] sm:$0xff]
      %v3084 = vld [vmem:[%s3055 + $0xe0] sm:$0xff]
      %v3085 = vld [vmem:[%s3055 + $0xe8] sm:$0xff]
      %v3086 = vld [vmem:[%s3055 + $0xf0] sm:$0xff]
      %v3087 = vld [vmem:[%s3055 + $0xf8] sm:$0xff]
      %v3088 = vld [vmem:[%s3055 + $0x100] sm:$0xff]
      %v3089 = vld [vmem:[%s3055 + $0x108] sm:$0xff]
      %v3090 = vld [vmem:[%s3055 + $0x110] sm:$0xff]
      %v3091 = vld [vmem:[%s3055 + $0x118] sm:$0xff]
      %v3092 = vld [vmem:[%s3055 + $0x120] sm:$0xff]
      %v3093 = vld [vmem:[%s3055 + $0x128] sm:$0xff]
      %v3094 = vld [vmem:[%s3055 + $0x130] sm:$0xff]
      %v3095 = vld [vmem:[%s3055 + $0x138] sm:$0xff]
      %v3096 = vld [vmem:[%s3055 + $0x140] sm:$0xff]
      %v3097 = vld [vmem:[%s3055 + $0x148] sm:$0xff]
      %v3098 = vld [vmem:[%s3055 + $0x150] sm:$0xff]
      %v3099 = vld [vmem:[%s3055 + $0x158] sm:$0xff]
      %v3100 = vld [vmem:[%s3055 + $0x160] sm:$0xff]
      %v3101 = vld [vmem:[%s3055 + $0x168] sm:$0xff]
      %v3102 = vld [vmem:[%s3055 + $0x170] sm:$0xff]
      %v3103 = vld [vmem:[%s3055 + $0x178] sm:$0xff]
      %v3104 = vld [vmem:[%s3055 + $0x180] sm:$0xff]
      %v3105 = vld [vmem:[%s3055 + $0x188] sm:$0xff]
      %v3106 = vld [vmem:[%s3055 + $0x190] sm:$0xff]
      %v3107 = vld [vmem:[%s3055 + $0x198] sm:$0xff]
      %v3108 = vld [vmem:[%s3055 + $0x1a0] sm:$0xff]
      %v3109 = vld [vmem:[%s3055 + $0x1a8] sm:$0xff]
      %v3110 = vld [vmem:[%s3055 + $0x1b0] sm:$0xff]
      %v3111 = vld [vmem:[%s3055 + $0x1b8] sm:$0xff]
      %v3112 = vld [vmem:[%s3055 + $0x1c0] sm:$0xff]
      %v3113 = vld [vmem:[%s3055 + $0x1c8] sm:$0xff]
      %v3114 = vld [vmem:[%s3055 + $0x1d0] sm:$0xff]
      %v3115 = vld [vmem:[%s3055 + $0x1d8] sm:$0xff]
      %v3116 = vld [vmem:[%s3055 + $0x1e0] sm:$0xff]
      %v3117 = vld [vmem:[%s3055 + $0x1e8] sm:$0xff]
      %v3118 = vld [vmem:[%s3055 + $0x1f0] sm:$0xff]
      %v3119 = vld [vmem:[%s3055 + $0x1f8] sm:$0xff]
      %v3184 = vunpack.c.l.b16 %v3056
      %v3185 = vunpack.c.h.b16 %v3056
      %v3186 = vunpack.c.l.b16 %v3057
      %v3187 = vunpack.c.h.b16 %v3057
      %v3188 = vunpack.c.l.b16 %v3058
      %v3189 = vunpack.c.h.b16 %v3058
      %v3190 = vunpack.c.l.b16 %v3059
      %v3191 = vunpack.c.h.b16 %v3059
      %v3192 = vunpack.c.l.b16 %v3060
      %v3193 = vunpack.c.h.b16 %v3060
      %v3194 = vunpack.c.l.b16 %v3061
      %v3195 = vunpack.c.h.b16 %v3061
      %v3196 = vunpack.c.l.b16 %v3062
      %v3197 = vunpack.c.h.b16 %v3062
      %v3198 = vunpack.c.l.b16 %v3063
      %v3199 = vunpack.c.h.b16 %v3063
      %v3200 = vunpack.c.l.b16 %v3064
      %v3201 = vunpack.c.h.b16 %v3064
      %v3202 = vunpack.c.l.b16 %v3065
      %v3203 = vunpack.c.h.b16 %v3065
      %v3204 = vunpack.c.l.b16 %v3066
      %v3205 = vunpack.c.h.b16 %v3066
      %v3206 = vunpack.c.l.b16 %v3067
      %v3207 = vunpack.c.h.b16 %v3067
      %v3208 = vunpack.c.l.b16 %v3068
      %v3209 = vunpack.c.h.b16 %v3068
      %v3210 = vunpack.c.l.b16 %v3069
      %v3211 = vunpack.c.h.b16 %v3069
      %v3212 = vunpack.c.l.b16 %v3070
      %v3213 = vunpack.c.h.b16 %v3070
      %v3214 = vunpack.c.l.b16 %v3071
      %v3215 = vunpack.c.h.b16 %v3071
      %v3216 = vunpack.c.l.b16 %v3072
      %v3217 = vunpack.c.h.b16 %v3072
      %v3218 = vunpack.c.l.b16 %v3073
      %v3219 = vunpack.c.h.b16 %v3073
      %v3220 = vunpack.c.l.b16 %v3074
      %v3221 = vunpack.c.h.b16 %v3074
      %v3222 = vunpack.c.l.b16 %v3075
      %v3223 = vunpack.c.h.b16 %v3075
      %v3224 = vunpack.c.l.b16 %v3076
      %v3225 = vunpack.c.h.b16 %v3076
      %v3226 = vunpack.c.l.b16 %v3077
      %v3227 = vunpack.c.h.b16 %v3077
      %v3228 = vunpack.c.l.b16 %v3078
      %v3229 = vunpack.c.h.b16 %v3078
      %v3230 = vunpack.c.l.b16 %v3079
      %v3231 = vunpack.c.h.b16 %v3079
      %v3232 = vunpack.c.l.b16 %v3080
      %v3233 = vunpack.c.h.b16 %v3080
      %v3234 = vunpack.c.l.b16 %v3081
      %v3235 = vunpack.c.h.b16 %v3081
      %v3236 = vunpack.c.l.b16 %v3082
      %v3237 = vunpack.c.h.b16 %v3082
      %v3238 = vunpack.c.l.b16 %v3083
      %v3239 = vunpack.c.h.b16 %v3083
      %v3240 = vunpack.c.l.b16 %v3084
      %v3241 = vunpack.c.h.b16 %v3084
      %v3242 = vunpack.c.l.b16 %v3085
      %v3243 = vunpack.c.h.b16 %v3085
      %v3244 = vunpack.c.l.b16 %v3086
      %v3245 = vunpack.c.h.b16 %v3086
      %v3246 = vunpack.c.l.b16 %v3087
      %v3247 = vunpack.c.h.b16 %v3087
      %v3248 = vunpack.c.l.b16 %v3088
      %v3249 = vunpack.c.h.b16 %v3088
      %v3250 = vunpack.c.l.b16 %v3089
      %v3251 = vunpack.c.h.b16 %v3089
      %v3252 = vunpack.c.l.b16 %v3090
      %v3253 = vunpack.c.h.b16 %v3090
      %v3254 = vunpack.c.l.b16 %v3091
      %v3255 = vunpack.c.h.b16 %v3091
      %v3256 = vunpack.c.l.b16 %v3092
      %v3257 = vunpack.c.h.b16 %v3092
      %v3258 = vunpack.c.l.b16 %v3093
      %v3259 = vunpack.c.h.b16 %v3093
      %v3260 = vunpack.c.l.b16 %v3094
      %v3261 = vunpack.c.h.b16 %v3094
      %v3262 = vunpack.c.l.b16 %v3095
      %v3263 = vunpack.c.h.b16 %v3095
      %v3264 = vunpack.c.l.b16 %v3096
      %v3265 = vunpack.c.h.b16 %v3096
      %v3266 = vunpack.c.l.b16 %v3097
      %v3267 = vunpack.c.h.b16 %v3097
      %v3268 = vunpack.c.l.b16 %v3098
      %v3269 = vunpack.c.h.b16 %v3098
      %v3270 = vunpack.c.l.b16 %v3099
      %v3271 = vunpack.c.h.b16 %v3099
      %v3272 = vunpack.c.l.b16 %v3100
      %v3273 = vunpack.c.h.b16 %v3100
      %v3274 = vunpack.c.l.b16 %v3101
      %v3275 = vunpack.c.h.b16 %v3101
      %v3276 = vunpack.c.l.b16 %v3102
      %v3277 = vunpack.c.h.b16 %v3102
      %v3278 = vunpack.c.l.b16 %v3103
      %v3279 = vunpack.c.h.b16 %v3103
      %v3280 = vunpack.c.l.b16 %v3104
      %v3281 = vunpack.c.h.b16 %v3104
      %v3282 = vunpack.c.l.b16 %v3105
      %v3283 = vunpack.c.h.b16 %v3105
      %v3284 = vunpack.c.l.b16 %v3106
      %v3285 = vunpack.c.h.b16 %v3106
      %v3286 = vunpack.c.l.b16 %v3107
      %v3287 = vunpack.c.h.b16 %v3107
      %v3288 = vunpack.c.l.b16 %v3108
      %v3289 = vunpack.c.h.b16 %v3108
      %v3290 = vunpack.c.l.b16 %v3109
      %v3291 = vunpack.c.h.b16 %v3109
      %v3292 = vunpack.c.l.b16 %v3110
      %v3293 = vunpack.c.h.b16 %v3110
      %v3294 = vunpack.c.l.b16 %v3111
      %v3295 = vunpack.c.h.b16 %v3111
      %v3296 = vunpack.c.l.b16 %v3112
      %v3297 = vunpack.c.h.b16 %v3112
      %v3298 = vunpack.c.l.b16 %v3113
      %v3299 = vunpack.c.h.b16 %v3113
      %v3300 = vunpack.c.l.b16 %v3114
      %v3301 = vunpack.c.h.b16 %v3114
      %v3302 = vunpack.c.l.b16 %v3115
      %v3303 = vunpack.c.h.b16 %v3115
      %v3304 = vunpack.c.l.b16 %v3116
      %v3305 = vunpack.c.h.b16 %v3116
      %v3306 = vunpack.c.l.b16 %v3117
      %v3307 = vunpack.c.h.b16 %v3117
      %v3308 = vunpack.c.l.b16 %v3118
      %v3309 = vunpack.c.h.b16 %v3118
      %v3310 = vunpack.c.l.b16 %v3119
      %v3311 = vunpack.c.h.b16 %v3119
      %v3312 = vpack.c.b16 %v3188, %v3184
      %v3313 = vpack.c.b16 %v3189, %v3185
      %v3314 = vpack.c.b16 %v3190, %v3186
      %v3315 = vpack.c.b16 %v3191, %v3187
      %v3316 = vpack.c.b16 %v3196, %v3192
      %v3317 = vpack.c.b16 %v3197, %v3193
      %v3318 = vpack.c.b16 %v3198, %v3194
      %v3319 = vpack.c.b16 %v3199, %v3195
      %v3320 = vpack.c.b16 %v3204, %v3200
      %v3321 = vpack.c.b16 %v3205, %v3201
      %v3322 = vpack.c.b16 %v3206, %v3202
      %v3323 = vpack.c.b16 %v3207, %v3203
      %v3324 = vpack.c.b16 %v3212, %v3208
      %v3325 = vpack.c.b16 %v3213, %v3209
      %v3326 = vpack.c.b16 %v3214, %v3210
      %v3327 = vpack.c.b16 %v3215, %v3211
      %v3328 = vpack.c.b16 %v3220, %v3216
      %v3329 = vpack.c.b16 %v3221, %v3217
      %v3330 = vpack.c.b16 %v3222, %v3218
      %v3331 = vpack.c.b16 %v3223, %v3219
      %v3332 = vpack.c.b16 %v3228, %v3224
      %v3333 = vpack.c.b16 %v3229, %v3225
      %v3334 = vpack.c.b16 %v3230, %v3226
      %v3335 = vpack.c.b16 %v3231, %v3227
      %v3336 = vpack.c.b16 %v3236, %v3232
      %v3337 = vpack.c.b16 %v3237, %v3233
      %v3338 = vpack.c.b16 %v3238, %v3234
      %v3339 = vpack.c.b16 %v3239, %v3235
      %v3340 = vpack.c.b16 %v3244, %v3240
      %v3341 = vpack.c.b16 %v3245, %v3241
      %v3342 = vpack.c.b16 %v3246, %v3242
      %v3343 = vpack.c.b16 %v3247, %v3243
      %v3344 = vpack.c.b16 %v3252, %v3248
      %v3345 = vpack.c.b16 %v3253, %v3249
      %v3346 = vpack.c.b16 %v3254, %v3250
      %v3347 = vpack.c.b16 %v3255, %v3251
      %v3348 = vpack.c.b16 %v3260, %v3256
      %v3349 = vpack.c.b16 %v3261, %v3257
      %v3350 = vpack.c.b16 %v3262, %v3258
      %v3351 = vpack.c.b16 %v3263, %v3259
      %v3352 = vpack.c.b16 %v3268, %v3264
      %v3353 = vpack.c.b16 %v3269, %v3265
      %v3354 = vpack.c.b16 %v3270, %v3266
      %v3355 = vpack.c.b16 %v3271, %v3267
      %v3356 = vpack.c.b16 %v3276, %v3272
      %v3357 = vpack.c.b16 %v3277, %v3273
      %v3358 = vpack.c.b16 %v3278, %v3274
      %v3359 = vpack.c.b16 %v3279, %v3275
      %v3360 = vpack.c.b16 %v3284, %v3280
      %v3361 = vpack.c.b16 %v3285, %v3281
      %v3362 = vpack.c.b16 %v3286, %v3282
      %v3363 = vpack.c.b16 %v3287, %v3283
      %v3364 = vpack.c.b16 %v3292, %v3288
      %v3365 = vpack.c.b16 %v3293, %v3289
      %v3366 = vpack.c.b16 %v3294, %v3290
      %v3367 = vpack.c.b16 %v3295, %v3291
      %v3368 = vpack.c.b16 %v3300, %v3296
      %v3369 = vpack.c.b16 %v3301, %v3297
      %v3370 = vpack.c.b16 %v3302, %v3298
      %v3371 = vpack.c.b16 %v3303, %v3299
      %v3372 = vpack.c.b16 %v3308, %v3304
      %v3373 = vpack.c.b16 %v3309, %v3305
      %v3374 = vpack.c.b16 %v3310, %v3306
      %v3375 = vpack.c.b16 %v3311, %v3307
      %3440 = vmatpush.bf16.msra.mxu0 %v3340
      %3441 = vmatpush.bf16.msra.mxu0 %v3336
      %3442 = vmatpush.bf16.msra.mxu0 %v3332
      %3443 = vmatpush.bf16.msra.mxu0 %v3328
      %3444 = vmatpush.bf16.msra.mxu0 %v3324
      %3445 = vmatpush.bf16.msra.mxu0 %v3320
      %3446 = vmatpush.bf16.msra.mxu0 %v3316
      %3447 = vmatpush.bf16.msra.mxu0 %v3312
      %3448 = vmatmul.bf16.gmra.mxu0 %v3047
      %v3449 = vpop.f32.mrf.mxu0
      %v3450 = vadd.f32 0.0, %v3449
      %v3451 = vpop.f32.mrf.mxu0
      %v3452 = vadd.f32 0.0, %v3451
      %3453 = vmatmul.bf16.gmra.mxu0 %v3049
      %v3454 = vpop.f32.mrf.mxu0
      %v3455 = vadd.f32 0.0, %v3454
      %v3456 = vpop.f32.mrf.mxu0
      %v3457 = vadd.f32 0.0, %v3456
      %3458 = vmatmul.bf16.gmra.mxu0 %v3051
      %v3459 = vpop.f32.mrf.mxu0
      %v3460 = vadd.f32 0.0, %v3459
      %v3461 = vpop.f32.mrf.mxu0
      %v3462 = vadd.f32 0.0, %v3461
      %3463 = vmatmul.bf16.gmra.mxu0 %v3053
      %v3464 = vpop.f32.mrf.mxu0
      %v3465 = vadd.f32 0.0, %v3464
      %v3466 = vpop.f32.mrf.mxu0
      %v3467 = vadd.f32 0.0, %v3466
      %3468 = vdwg.mxu0
      %3469 = vmatpush.bf16.msra.mxu0 %v3372
      %3470 = vmatpush.bf16.msra.mxu0 %v3368
      %3471 = vmatpush.bf16.msra.mxu0 %v3364
      %3472 = vmatpush.bf16.msra.mxu0 %v3360
      %3473 = vmatpush.bf16.msra.mxu0 %v3356
      %3474 = vmatpush.bf16.msra.mxu0 %v3352
      %3475 = vmatpush.bf16.msra.mxu0 %v3348
      %3476 = vmatpush.bf16.msra.mxu0 %v3344
      %3477 = vmatmul.bf16.gmra.mxu0 %v3048
      %v3478 = vpop.f32.mrf.mxu0
      %v3479 = vadd.f32 %v3450, %v3478
      %v3480 = vpop.f32.mrf.mxu0
      %v3481 = vadd.f32 %v3452, %v3480
      %3482 = vmatmul.bf16.gmra.mxu0 %v3050
      %v3483 = vpop.f32.mrf.mxu0
      %v3484 = vadd.f32 %v3455, %v3483
      %v3485 = vpop.f32.mrf.mxu0
      %v3486 = vadd.f32 %v3457, %v3485
      %3487 = vmatmul.bf16.gmra.mxu0 %v3052
      %v3488 = vpop.f32.mrf.mxu0
      %v3489 = vadd.f32 %v3460, %v3488
      %v3490 = vpop.f32.mrf.mxu0
      %v3491 = vadd.f32 %v3462, %v3490
      %3492 = vmatmul.bf16.gmra.mxu0 %v3054
      %v3493 = vpop.f32.mrf.mxu0
      %v3494 = vadd.f32 %v3465, %v3493
      %v3495 = vpop.f32.mrf.mxu0
      %v3496 = vadd.f32 %v3467, %v3495
      %3497 = vdwg.mxu0
      %3498 = vmatpush.bf16.msra.mxu0 %v3341
      %3499 = vmatpush.bf16.msra.mxu0 %v3337
      %3500 = vmatpush.bf16.msra.mxu0 %v3333
      %3501 = vmatpush.bf16.msra.mxu0 %v3329
      %3502 = vmatpush.bf16.msra.mxu0 %v3325
      %3503 = vmatpush.bf16.msra.mxu0 %v3321
      %3504 = vmatpush.bf16.msra.mxu0 %v3317
      %3505 = vmatpush.bf16.msra.mxu0 %v3313
      %3506 = vmatmul.bf16.gmra.mxu0 %v3047
      %v3507 = vpop.f32.mrf.mxu0
      %v3508 = vadd.f32 0.0, %v3507
      %v3509 = vpop.f32.mrf.mxu0
      %v3510 = vadd.f32 0.0, %v3509
      %3511 = vmatmul.bf16.gmra.mxu0 %v3049
      %v3512 = vpop.f32.mrf.mxu0
      %v3513 = vadd.f32 0.0, %v3512
      %v3514 = vpop.f32.mrf.mxu0
      %v3515 = vadd.f32 0.0, %v3514
      %3516 = vmatmul.bf16.gmra.mxu0 %v3051
      %v3517 = vpop.f32.mrf.mxu0
      %v3518 = vadd.f32 0.0, %v3517
      %v3519 = vpop.f32.mrf.mxu0
      %v3520 = vadd.f32 0.0, %v3519
      %3521 = vmatmul.bf16.gmra.mxu0 %v3053
      %v3522 = vpop.f32.mrf.mxu0
      %v3523 = vadd.f32 0.0, %v3522
      %v3524 = vpop.f32.mrf.mxu0
      %v3525 = vadd.f32 0.0, %v3524
      %3526 = vdwg.mxu0
      %3527 = vmatpush.bf16.msra.mxu0 %v3373
      %3528 = vmatpush.bf16.msra.mxu0 %v3369
      %3529 = vmatpush.bf16.msra.mxu0 %v3365
      %3530 = vmatpush.bf16.msra.mxu0 %v3361
      %3531 = vmatpush.bf16.msra.mxu0 %v3357
      %3532 = vmatpush.bf16.msra.mxu0 %v3353
      %3533 = vmatpush.bf16.msra.mxu0 %v3349
      %3534 = vmatpush.bf16.msra.mxu0 %v3345
      %3535 = vmatmul.bf16.gmra.mxu0 %v3048
      %v3536 = vpop.f32.mrf.mxu0
      %v3537 = vadd.f32 %v3508, %v3536
      %v3538 = vpop.f32.mrf.mxu0
      %v3539 = vadd.f32 %v3510, %v3538
      %3540 = vmatmul.bf16.gmra.mxu0 %v3050
      %v3541 = vpop.f32.mrf.mxu0
      %v3542 = vadd.f32 %v3513, %v3541
      %v3543 = vpop.f32.mrf.mxu0
      %v3544 = vadd.f32 %v3515, %v3543
      %3545 = vmatmul.bf16.gmra.mxu0 %v3052
      %v3546 = vpop.f32.mrf.mxu0
      %v3547 = vadd.f32 %v3518, %v3546
      %v3548 = vpop.f32.mrf.mxu0
      %v3549 = vadd.f32 %v3520, %v3548
      %3550 = vmatmul.bf16.gmra.mxu0 %v3054
      %v3551 = vpop.f32.mrf.mxu0
      %v3552 = vadd.f32 %v3523, %v3551
      %v3553 = vpop.f32.mrf.mxu0
      %v3554 = vadd.f32 %v3525, %v3553
      %3555 = vdwg.mxu0
      %3556 = vmatpush.bf16.msra.mxu0 %v3342
      %3557 = vmatpush.bf16.msra.mxu0 %v3338
      %3558 = vmatpush.bf16.msra.mxu0 %v3334
      %3559 = vmatpush.bf16.msra.mxu0 %v3330
      %3560 = vmatpush.bf16.msra.mxu0 %v3326
      %3561 = vmatpush.bf16.msra.mxu0 %v3322
      %3562 = vmatpush.bf16.msra.mxu0 %v3318
      %3563 = vmatpush.bf16.msra.mxu0 %v3314
      %3564 = vmatmul.bf16.gmra.mxu0 %v3047
      %v3565 = vpop.f32.mrf.mxu0
      %v3566 = vadd.f32 0.0, %v3565
      %v3567 = vpop.f32.mrf.mxu0
      %v3568 = vadd.f32 0.0, %v3567
      %3569 = vmatmul.bf16.gmra.mxu0 %v3049
      %v3570 = vpop.f32.mrf.mxu0
      %v3571 = vadd.f32 0.0, %v3570
      %v3572 = vpop.f32.mrf.mxu0
      %v3573 = vadd.f32 0.0, %v3572
      %3574 = vmatmul.bf16.gmra.mxu0 %v3051
      %v3575 = vpop.f32.mrf.mxu0
      %v3576 = vadd.f32 0.0, %v3575
      %v3577 = vpop.f32.mrf.mxu0
      %v3578 = vadd.f32 0.0, %v3577
      %3579 = vmatmul.bf16.gmra.mxu0 %v3053
      %v3580 = vpop.f32.mrf.mxu0
      %v3581 = vadd.f32 0.0, %v3580
      %v3582 = vpop.f32.mrf.mxu0
      %v3583 = vadd.f32 0.0, %v3582
      %3584 = vdwg.mxu0
      %3585 = vmatpush.bf16.msra.mxu0 %v3374
      %3586 = vmatpush.bf16.msra.mxu0 %v3370
      %3587 = vmatpush.bf16.msra.mxu0 %v3366
      %3588 = vmatpush.bf16.msra.mxu0 %v3362
      %3589 = vmatpush.bf16.msra.mxu0 %v3358
      %3590 = vmatpush.bf16.msra.mxu0 %v3354
      %3591 = vmatpush.bf16.msra.mxu0 %v3350
      %3592 = vmatpush.bf16.msra.mxu0 %v3346
      %3593 = vmatmul.bf16.gmra.mxu0 %v3048
      %v3594 = vpop.f32.mrf.mxu0
      %v3595 = vadd.f32 %v3566, %v3594
      %v3596 = vpop.f32.mrf.mxu0
      %v3597 = vadd.f32 %v3568, %v3596
      %3598 = vmatmul.bf16.gmra.mxu0 %v3050
      %v3599 = vpop.f32.mrf.mxu0
      %v3600 = vadd.f32 %v3571, %v3599
      %v3601 = vpop.f32.mrf.mxu0
      %v3602 = vadd.f32 %v3573, %v3601
      %3603 = vmatmul.bf16.gmra.mxu0 %v3052
      %v3604 = vpop.f32.mrf.mxu0
      %v3605 = vadd.f32 %v3576, %v3604
      %v3606 = vpop.f32.mrf.mxu0
      %v3607 = vadd.f32 %v3578, %v3606
      %3608 = vmatmul.bf16.gmra.mxu0 %v3054
      %v3609 = vpop.f32.mrf.mxu0
      %v3610 = vadd.f32 %v3581, %v3609
      %v3611 = vpop.f32.mrf.mxu0
      %v3612 = vadd.f32 %v3583, %v3611
      %3613 = vdwg.mxu0
      %3614 = vmatpush.bf16.msra.mxu0 %v3343
      %3615 = vmatpush.bf16.msra.mxu0 %v3339
      %3616 = vmatpush.bf16.msra.mxu0 %v3335
      %3617 = vmatpush.bf16.msra.mxu0 %v3331
      %3618 = vmatpush.bf16.msra.mxu0 %v3327
      %3619 = vmatpush.bf16.msra.mxu0 %v3323
      %3620 = vmatpush.bf16.msra.mxu0 %v3319
      %3621 = vmatpush.bf16.msra.mxu0 %v3315
      %3622 = vmatmul.bf16.gmra.mxu0 %v3047
      %v3623 = vpop.f32.mrf.mxu0
      %v3624 = vadd.f32 0.0, %v3623
      %v3625 = vpop.f32.mrf.mxu0
      %v3626 = vadd.f32 0.0, %v3625
      %3627 = vmatmul.bf16.gmra.mxu0 %v3049
      %v3628 = vpop.f32.mrf.mxu0
      %v3629 = vadd.f32 0.0, %v3628
      %v3630 = vpop.f32.mrf.mxu0
      %v3631 = vadd.f32 0.0, %v3630
      %3632 = vmatmul.bf16.gmra.mxu0 %v3051
      %v3633 = vpop.f32.mrf.mxu0
      %v3634 = vadd.f32 0.0, %v3633
      %v3635 = vpop.f32.mrf.mxu0
      %v3636 = vadd.f32 0.0, %v3635
      %3637 = vmatmul.bf16.gmra.mxu0 %v3053
      %v3638 = vpop.f32.mrf.mxu0
      %v3639 = vadd.f32 0.0, %v3638
      %v3640 = vpop.f32.mrf.mxu0
      %v3641 = vadd.f32 0.0, %v3640
      %3642 = vdwg.mxu0
      %3643 = vmatpush.bf16.msra.mxu0 %v3375
      %3644 = vmatpush.bf16.msra.mxu0 %v3371
      %3645 = vmatpush.bf16.msra.mxu0 %v3367
      %3646 = vmatpush.bf16.msra.mxu0 %v3363
      %3647 = vmatpush.bf16.msra.mxu0 %v3359
      %3648 = vmatpush.bf16.msra.mxu0 %v3355
      %3649 = vmatpush.bf16.msra.mxu0 %v3351
      %3650 = vmatpush.bf16.msra.mxu0 %v3347
      %3651 = vmatmul.bf16.gmra.mxu0 %v3048
      %v3652 = vpop.f32.mrf.mxu0
      %v3653 = vadd.f32 %v3624, %v3652
      %v3654 = vpop.f32.mrf.mxu0
      %v3655 = vadd.f32 %v3626, %v3654
      %3656 = vmatmul.bf16.gmra.mxu0 %v3050
      %v3657 = vpop.f32.mrf.mxu0
      %v3658 = vadd.f32 %v3629, %v3657
      %v3659 = vpop.f32.mrf.mxu0
      %v3660 = vadd.f32 %v3631, %v3659
      %3661 = vmatmul.bf16.gmra.mxu0 %v3052
      %v3662 = vpop.f32.mrf.mxu0
      %v3663 = vadd.f32 %v3634, %v3662
      %v3664 = vpop.f32.mrf.mxu0
      %v3665 = vadd.f32 %v3636, %v3664
      %3666 = vmatmul.bf16.gmra.mxu0 %v3054
      %v3667 = vpop.f32.mrf.mxu0
      %v3668 = vadd.f32 %v3639, %v3667
      %v3669 = vpop.f32.mrf.mxu0
      %v3670 = vadd.f32 %v3641, %v3669
      %3671 = vdwg.mxu0
      %v3736 = vunpack.c.l.b16 %v2919
      %v3737 = vunpack.c.h.b16 %v2919
      %v3738 = vunpack.c.l.b16 %v2920
      %v3739 = vunpack.c.h.b16 %v2920
      %v3740 = vunpack.c.l.b16 %v2921
      %v3741 = vunpack.c.h.b16 %v2921
      %v3742 = vunpack.c.l.b16 %v2922
      %v3743 = vunpack.c.h.b16 %v2922
      %v3744 = vunpack.c.l.b16 %v2923
      %v3745 = vunpack.c.h.b16 %v2923
      %v3746 = vunpack.c.l.b16 %v2924
      %v3747 = vunpack.c.h.b16 %v2924
      %v3748 = vunpack.c.l.b16 %v2925
      %v3749 = vunpack.c.h.b16 %v2925
      %v3750 = vunpack.c.l.b16 %v2926
      %v3751 = vunpack.c.h.b16 %v2926
      %v3752 = vunpack.c.l.b16 %v2927
      %v3753 = vunpack.c.h.b16 %v2927
      %v3754 = vunpack.c.l.b16 %v2928
      %v3755 = vunpack.c.h.b16 %v2928
      %v3756 = vunpack.c.l.b16 %v2929
      %v3757 = vunpack.c.h.b16 %v2929
      %v3758 = vunpack.c.l.b16 %v2930
      %v3759 = vunpack.c.h.b16 %v2930
      %v3760 = vunpack.c.l.b16 %v2931
      %v3761 = vunpack.c.h.b16 %v2931
      %v3762 = vunpack.c.l.b16 %v2932
      %v3763 = vunpack.c.h.b16 %v2932
      %v3764 = vunpack.c.l.b16 %v2933
      %v3765 = vunpack.c.h.b16 %v2933
      %v3766 = vunpack.c.l.b16 %v2934
      %v3767 = vunpack.c.h.b16 %v2934
      %v3768 = vunpack.c.l.b16 %v2935
      %v3769 = vunpack.c.h.b16 %v2935
      %v3770 = vunpack.c.l.b16 %v2936
      %v3771 = vunpack.c.h.b16 %v2936
      %v3772 = vunpack.c.l.b16 %v2937
      %v3773 = vunpack.c.h.b16 %v2937
      %v3774 = vunpack.c.l.b16 %v2938
      %v3775 = vunpack.c.h.b16 %v2938
      %v3776 = vunpack.c.l.b16 %v2939
      %v3777 = vunpack.c.h.b16 %v2939
      %v3778 = vunpack.c.l.b16 %v2940
      %v3779 = vunpack.c.h.b16 %v2940
      %v3780 = vunpack.c.l.b16 %v2941
      %v3781 = vunpack.c.h.b16 %v2941
      %v3782 = vunpack.c.l.b16 %v2942
      %v3783 = vunpack.c.h.b16 %v2942
      %v3784 = vunpack.c.l.b16 %v2943
      %v3785 = vunpack.c.h.b16 %v2943
      %v3786 = vunpack.c.l.b16 %v2944
      %v3787 = vunpack.c.h.b16 %v2944
      %v3788 = vunpack.c.l.b16 %v2945
      %v3789 = vunpack.c.h.b16 %v2945
      %v3790 = vunpack.c.l.b16 %v2946
      %v3791 = vunpack.c.h.b16 %v2946
      %v3792 = vunpack.c.l.b16 %v2947
      %v3793 = vunpack.c.h.b16 %v2947
      %v3794 = vunpack.c.l.b16 %v2948
      %v3795 = vunpack.c.h.b16 %v2948
      %v3796 = vunpack.c.l.b16 %v2949
      %v3797 = vunpack.c.h.b16 %v2949
      %v3798 = vunpack.c.l.b16 %v2950
      %v3799 = vunpack.c.h.b16 %v2950
      %v3800 = vunpack.c.l.b16 %v2951
      %v3801 = vunpack.c.h.b16 %v2951
      %v3802 = vunpack.c.l.b16 %v2952
      %v3803 = vunpack.c.h.b16 %v2952
      %v3804 = vunpack.c.l.b16 %v2953
      %v3805 = vunpack.c.h.b16 %v2953
      %v3806 = vunpack.c.l.b16 %v2954
      %v3807 = vunpack.c.h.b16 %v2954
      %v3808 = vunpack.c.l.b16 %v2955
      %v3809 = vunpack.c.h.b16 %v2955
      %v3810 = vunpack.c.l.b16 %v2956
      %v3811 = vunpack.c.h.b16 %v2956
      %v3812 = vunpack.c.l.b16 %v2957
      %v3813 = vunpack.c.h.b16 %v2957
      %v3814 = vunpack.c.l.b16 %v2958
      %v3815 = vunpack.c.h.b16 %v2958
      %v3816 = vunpack.c.l.b16 %v2959
      %v3817 = vunpack.c.h.b16 %v2959
      %v3818 = vunpack.c.l.b16 %v2960
      %v3819 = vunpack.c.h.b16 %v2960
      %v3820 = vunpack.c.l.b16 %v2961
      %v3821 = vunpack.c.h.b16 %v2961
      %v3822 = vunpack.c.l.b16 %v2962
      %v3823 = vunpack.c.h.b16 %v2962
      %v3824 = vunpack.c.l.b16 %v2963
      %v3825 = vunpack.c.h.b16 %v2963
      %v3826 = vunpack.c.l.b16 %v2964
      %v3827 = vunpack.c.h.b16 %v2964
      %v3828 = vunpack.c.l.b16 %v2965
      %v3829 = vunpack.c.h.b16 %v2965
      %v3830 = vunpack.c.l.b16 %v2966
      %v3831 = vunpack.c.h.b16 %v2966
      %v3832 = vunpack.c.l.b16 %v2967
      %v3833 = vunpack.c.h.b16 %v2967
      %v3834 = vunpack.c.l.b16 %v2968
      %v3835 = vunpack.c.h.b16 %v2968
      %v3836 = vunpack.c.l.b16 %v2969
      %v3837 = vunpack.c.h.b16 %v2969
      %v3838 = vunpack.c.l.b16 %v2970
      %v3839 = vunpack.c.h.b16 %v2970
      %v3840 = vunpack.c.l.b16 %v2971
      %v3841 = vunpack.c.h.b16 %v2971
      %v3842 = vunpack.c.l.b16 %v2972
      %v3843 = vunpack.c.h.b16 %v2972
      %v3844 = vunpack.c.l.b16 %v2973
      %v3845 = vunpack.c.h.b16 %v2973
      %v3846 = vunpack.c.l.b16 %v2974
      %v3847 = vunpack.c.h.b16 %v2974
      %v3848 = vunpack.c.l.b16 %v2975
      %v3849 = vunpack.c.h.b16 %v2975
      %v3850 = vunpack.c.l.b16 %v2976
      %v3851 = vunpack.c.h.b16 %v2976
      %v3852 = vunpack.c.l.b16 %v2977
      %v3853 = vunpack.c.h.b16 %v2977
      %v3854 = vunpack.c.l.b16 %v2978
      %v3855 = vunpack.c.h.b16 %v2978
      %v3856 = vunpack.c.l.b16 %v2979
      %v3857 = vunpack.c.h.b16 %v2979
      %v3858 = vunpack.c.l.b16 %v2980
      %v3859 = vunpack.c.h.b16 %v2980
      %v3860 = vunpack.c.l.b16 %v2981
      %v3861 = vunpack.c.h.b16 %v2981
      %v3862 = vunpack.c.l.b16 %v2982
      %v3863 = vunpack.c.h.b16 %v2982
      %v3864 = vpack.c.b16 %v3740, %v3736
      %v3865 = vpack.c.b16 %v3741, %v3737
      %v3866 = vpack.c.b16 %v3742, %v3738
      %v3867 = vpack.c.b16 %v3743, %v3739
      %v3868 = vpack.c.b16 %v3748, %v3744
      %v3869 = vpack.c.b16 %v3749, %v3745
      %v3870 = vpack.c.b16 %v3750, %v3746
      %v3871 = vpack.c.b16 %v3751, %v3747
      %v3872 = vpack.c.b16 %v3756, %v3752
      %v3873 = vpack.c.b16 %v3757, %v3753
      %v3874 = vpack.c.b16 %v3758, %v3754
      %v3875 = vpack.c.b16 %v3759, %v3755
      %v3876 = vpack.c.b16 %v3764, %v3760
      %v3877 = vpack.c.b16 %v3765, %v3761
      %v3878 = vpack.c.b16 %v3766, %v3762
      %v3879 = vpack.c.b16 %v3767, %v3763
      %v3880 = vpack.c.b16 %v3772, %v3768
      %v3881 = vpack.c.b16 %v3773, %v3769
      %v3882 = vpack.c.b16 %v3774, %v3770
      %v3883 = vpack.c.b16 %v3775, %v3771
      %v3884 = vpack.c.b16 %v3780, %v3776
      %v3885 = vpack.c.b16 %v3781, %v3777
      %v3886 = vpack.c.b16 %v3782, %v3778
      %v3887 = vpack.c.b16 %v3783, %v3779
      %v3888 = vpack.c.b16 %v3788, %v3784
      %v3889 = vpack.c.b16 %v3789, %v3785
      %v3890 = vpack.c.b16 %v3790, %v3786
      %v3891 = vpack.c.b16 %v3791, %v3787
      %v3892 = vpack.c.b16 %v3796, %v3792
      %v3893 = vpack.c.b16 %v3797, %v3793
      %v3894 = vpack.c.b16 %v3798, %v3794
      %v3895 = vpack.c.b16 %v3799, %v3795
      %v3896 = vpack.c.b16 %v3804, %v3800
      %v3897 = vpack.c.b16 %v3805, %v3801
      %v3898 = vpack.c.b16 %v3806, %v3802
      %v3899 = vpack.c.b16 %v3807, %v3803
      %v3900 = vpack.c.b16 %v3812, %v3808
      %v3901 = vpack.c.b16 %v3813, %v3809
      %v3902 = vpack.c.b16 %v3814, %v3810
      %v3903 = vpack.c.b16 %v3815, %v3811
      %v3904 = vpack.c.b16 %v3820, %v3816
      %v3905 = vpack.c.b16 %v3821, %v3817
      %v3906 = vpack.c.b16 %v3822, %v3818
      %v3907 = vpack.c.b16 %v3823, %v3819
      %v3908 = vpack.c.b16 %v3828, %v3824
      %v3909 = vpack.c.b16 %v3829, %v3825
      %v3910 = vpack.c.b16 %v3830, %v3826
      %v3911 = vpack.c.b16 %v3831, %v3827
      %v3912 = vpack.c.b16 %v3836, %v3832
      %v3913 = vpack.c.b16 %v3837, %v3833
      %v3914 = vpack.c.b16 %v3838, %v3834
      %v3915 = vpack.c.b16 %v3839, %v3835
      %v3916 = vpack.c.b16 %v3844, %v3840
      %v3917 = vpack.c.b16 %v3845, %v3841
      %v3918 = vpack.c.b16 %v3846, %v3842
      %v3919 = vpack.c.b16 %v3847, %v3843
      %v3920 = vpack.c.b16 %v3852, %v3848
      %v3921 = vpack.c.b16 %v3853, %v3849
      %v3922 = vpack.c.b16 %v3854, %v3850
      %v3923 = vpack.c.b16 %v3855, %v3851
      %v3924 = vpack.c.b16 %v3860, %v3856
      %v3925 = vpack.c.b16 %v3861, %v3857
      %v3926 = vpack.c.b16 %v3862, %v3858
      %v3927 = vpack.c.b16 %v3863, %v3859
      %3992 = vmatpush.bf16.msra.mxu0 %v3892
      %3993 = vmatpush.bf16.msra.mxu0 %v3888
      %3994 = vmatpush.bf16.msra.mxu0 %v3884
      %3995 = vmatpush.bf16.msra.mxu0 %v3880
      %3996 = vmatpush.bf16.msra.mxu0 %v3876
      %3997 = vmatpush.bf16.msra.mxu0 %v3872
      %3998 = vmatpush.bf16.msra.mxu0 %v3868
      %3999 = vmatpush.bf16.msra.mxu0 %v3864
      %4000 = vmatmul.bf16.gmra.mxu0 %v2911
      %v4001 = vpop.f32.mrf.mxu0
      %v4002 = vadd.f32 %v3479, %v4001
      %v4003 = vpop.f32.mrf.mxu0
      %v4004 = vadd.f32 %v3481, %v4003
      %4005 = vmatmul.bf16.gmra.mxu0 %v2913
      %v4006 = vpop.f32.mrf.mxu0
      %v4007 = vadd.f32 %v3484, %v4006
      %v4008 = vpop.f32.mrf.mxu0
      %v4009 = vadd.f32 %v3486, %v4008
      %4010 = vmatmul.bf16.gmra.mxu0 %v2915
      %v4011 = vpop.f32.mrf.mxu0
      %v4012 = vadd.f32 %v3489, %v4011
      %v4013 = vpop.f32.mrf.mxu0
      %v4014 = vadd.f32 %v3491, %v4013
      %4015 = vmatmul.bf16.gmra.mxu0 %v2917
      %v4016 = vpop.f32.mrf.mxu0
      %v4017 = vadd.f32 %v3494, %v4016
      %v4018 = vpop.f32.mrf.mxu0
      %v4019 = vadd.f32 %v3496, %v4018
      %4020 = vdwg.mxu0
      %4021 = vmatpush.bf16.msra.mxu0 %v3924
      %4022 = vmatpush.bf16.msra.mxu0 %v3920
      %4023 = vmatpush.bf16.msra.mxu0 %v3916
      %4024 = vmatpush.bf16.msra.mxu0 %v3912
      %4025 = vmatpush.bf16.msra.mxu0 %v3908
      %4026 = vmatpush.bf16.msra.mxu0 %v3904
      %4027 = vmatpush.bf16.msra.mxu0 %v3900
      %4028 = vmatpush.bf16.msra.mxu0 %v3896
      %4029 = vmatmul.bf16.gmra.mxu0 %v2912
      %v4030 = vpop.f32.mrf.mxu0
      %v4031 = vadd.f32 %v4002, %v4030
      %v4032 = vpop.f32.mrf.mxu0
      %v4033 = vadd.f32 %v4004, %v4032
      %4034 = vmatmul.bf16.gmra.mxu0 %v2914
      %v4035 = vpop.f32.mrf.mxu0
      %v4036 = vadd.f32 %v4007, %v4035
      %v4037 = vpop.f32.mrf.mxu0
      %v4038 = vadd.f32 %v4009, %v4037
      %4039 = vmatmul.bf16.gmra.mxu0 %v2916
      %v4040 = vpop.f32.mrf.mxu0
      %v4041 = vadd.f32 %v4012, %v4040
      %v4042 = vpop.f32.mrf.mxu0
      %v4043 = vadd.f32 %v4014, %v4042
      %4044 = vmatmul.bf16.gmra.mxu0 %v2918
      %v4045 = vpop.f32.mrf.mxu0
      %v4046 = vadd.f32 %v4017, %v4045
      %v4047 = vpop.f32.mrf.mxu0
      %v4048 = vadd.f32 %v4019, %v4047
      %4049 = vdwg.mxu0
      %4050 = vmatpush.bf16.msra.mxu0 %v3893
      %4051 = vmatpush.bf16.msra.mxu0 %v3889
      %4052 = vmatpush.bf16.msra.mxu0 %v3885
      %4053 = vmatpush.bf16.msra.mxu0 %v3881
      %4054 = vmatpush.bf16.msra.mxu0 %v3877
      %4055 = vmatpush.bf16.msra.mxu0 %v3873
      %4056 = vmatpush.bf16.msra.mxu0 %v3869
      %4057 = vmatpush.bf16.msra.mxu0 %v3865
      %4058 = vmatmul.bf16.gmra.mxu0 %v2911
      %v4059 = vpop.f32.mrf.mxu0
      %v4060 = vadd.f32 %v3537, %v4059
      %v4061 = vpop.f32.mrf.mxu0
      %v4062 = vadd.f32 %v3539, %v4061
      %4063 = vmatmul.bf16.gmra.mxu0 %v2913
      %v4064 = vpop.f32.mrf.mxu0
      %v4065 = vadd.f32 %v3542, %v4064
      %v4066 = vpop.f32.mrf.mxu0
      %v4067 = vadd.f32 %v3544, %v4066
      %4068 = vmatmul.bf16.gmra.mxu0 %v2915
      %v4069 = vpop.f32.mrf.mxu0
      %v4070 = vadd.f32 %v3547, %v4069
      %v4071 = vpop.f32.mrf.mxu0
      %v4072 = vadd.f32 %v3549, %v4071
      %4073 = vmatmul.bf16.gmra.mxu0 %v2917
      %v4074 = vpop.f32.mrf.mxu0
      %v4075 = vadd.f32 %v3552, %v4074
      %v4076 = vpop.f32.mrf.mxu0
      %v4077 = vadd.f32 %v3554, %v4076
      %4078 = vdwg.mxu0
      %4079 = vmatpush.bf16.msra.mxu0 %v3925
      %4080 = vmatpush.bf16.msra.mxu0 %v3921
      %4081 = vmatpush.bf16.msra.mxu0 %v3917
      %4082 = vmatpush.bf16.msra.mxu0 %v3913
      %4083 = vmatpush.bf16.msra.mxu0 %v3909
      %4084 = vmatpush.bf16.msra.mxu0 %v3905
      %4085 = vmatpush.bf16.msra.mxu0 %v3901
      %4086 = vmatpush.bf16.msra.mxu0 %v3897
      %4087 = vmatmul.bf16.gmra.mxu0 %v2912
      %v4088 = vpop.f32.mrf.mxu0
      %v4089 = vadd.f32 %v4060, %v4088
      %v4090 = vpop.f32.mrf.mxu0
      %v4091 = vadd.f32 %v4062, %v4090
      %4092 = vmatmul.bf16.gmra.mxu0 %v2914
      %v4093 = vpop.f32.mrf.mxu0
      %v4094 = vadd.f32 %v4065, %v4093
      %v4095 = vpop.f32.mrf.mxu0
      %v4096 = vadd.f32 %v4067, %v4095
      %4097 = vmatmul.bf16.gmra.mxu0 %v2916
      %v4098 = vpop.f32.mrf.mxu0
      %v4099 = vadd.f32 %v4070, %v4098
      %v4100 = vpop.f32.mrf.mxu0
      %v4101 = vadd.f32 %v4072, %v4100
      %4102 = vmatmul.bf16.gmra.mxu0 %v2918
      %v4103 = vpop.f32.mrf.mxu0
      %v4104 = vadd.f32 %v4075, %v4103
      %v4105 = vpop.f32.mrf.mxu0
      %v4106 = vadd.f32 %v4077, %v4105
      %4107 = vdwg.mxu0
      %4108 = vmatpush.bf16.msra.mxu0 %v3894
      %4109 = vmatpush.bf16.msra.mxu0 %v3890
      %4110 = vmatpush.bf16.msra.mxu0 %v3886
      %4111 = vmatpush.bf16.msra.mxu0 %v3882
      %4112 = vmatpush.bf16.msra.mxu0 %v3878
      %4113 = vmatpush.bf16.msra.mxu0 %v3874
      %4114 = vmatpush.bf16.msra.mxu0 %v3870
      %4115 = vmatpush.bf16.msra.mxu0 %v3866
      %4116 = vmatmul.bf16.gmra.mxu0 %v2911
      %v4117 = vpop.f32.mrf.mxu0
      %v4118 = vadd.f32 %v3595, %v4117
      %v4119 = vpop.f32.mrf.mxu0
      %v4120 = vadd.f32 %v3597, %v4119
      %4121 = vmatmul.bf16.gmra.mxu0 %v2913
      %v4122 = vpop.f32.mrf.mxu0
      %v4123 = vadd.f32 %v3600, %v4122
      %v4124 = vpop.f32.mrf.mxu0
      %v4125 = vadd.f32 %v3602, %v4124
      %4126 = vmatmul.bf16.gmra.mxu0 %v2915
      %v4127 = vpop.f32.mrf.mxu0
      %v4128 = vadd.f32 %v3605, %v4127
      %v4129 = vpop.f32.mrf.mxu0
      %v4130 = vadd.f32 %v3607, %v4129
      %4131 = vmatmul.bf16.gmra.mxu0 %v2917
      %v4132 = vpop.f32.mrf.mxu0
      %v4133 = vadd.f32 %v3610, %v4132
      %v4134 = vpop.f32.mrf.mxu0
      %v4135 = vadd.f32 %v3612, %v4134
      %4136 = vdwg.mxu0
      %4137 = vmatpush.bf16.msra.mxu0 %v3926
      %4138 = vmatpush.bf16.msra.mxu0 %v3922
      %4139 = vmatpush.bf16.msra.mxu0 %v3918
      %4140 = vmatpush.bf16.msra.mxu0 %v3914
      %4141 = vmatpush.bf16.msra.mxu0 %v3910
      %4142 = vmatpush.bf16.msra.mxu0 %v3906
      %4143 = vmatpush.bf16.msra.mxu0 %v3902
      %4144 = vmatpush.bf16.msra.mxu0 %v3898
      %4145 = vmatmul.bf16.gmra.mxu0 %v2912
      %v4146 = vpop.f32.mrf.mxu0
      %v4147 = vadd.f32 %v4118, %v4146
      %v4148 = vpop.f32.mrf.mxu0
      %v4149 = vadd.f32 %v4120, %v4148
      %4150 = vmatmul.bf16.gmra.mxu0 %v2914
      %v4151 = vpop.f32.mrf.mxu0
      %v4152 = vadd.f32 %v4123, %v4151
      %v4153 = vpop.f32.mrf.mxu0
      %v4154 = vadd.f32 %v4125, %v4153
      %4155 = vmatmul.bf16.gmra.mxu0 %v2916
      %v4156 = vpop.f32.mrf.mxu0
      %v4157 = vadd.f32 %v4128, %v4156
      %v4158 = vpop.f32.mrf.mxu0
      %v4159 = vadd.f32 %v4130, %v4158
      %4160 = vmatmul.bf16.gmra.mxu0 %v2918
      %v4161 = vpop.f32.mrf.mxu0
      %v4162 = vadd.f32 %v4133, %v4161
      %v4163 = vpop.f32.mrf.mxu0
      %v4164 = vadd.f32 %v4135, %v4163
      %4165 = vdwg.mxu0
      %4166 = vmatpush.bf16.msra.mxu0 %v3895
      %4167 = vmatpush.bf16.msra.mxu0 %v3891
      %4168 = vmatpush.bf16.msra.mxu0 %v3887
      %4169 = vmatpush.bf16.msra.mxu0 %v3883
      %4170 = vmatpush.bf16.msra.mxu0 %v3879
      %4171 = vmatpush.bf16.msra.mxu0 %v3875
      %4172 = vmatpush.bf16.msra.mxu0 %v3871
      %4173 = vmatpush.bf16.msra.mxu0 %v3867
      %4174 = vmatmul.bf16.gmra.mxu0 %v2911
      %v4175 = vpop.f32.mrf.mxu0
      %v4176 = vadd.f32 %v3653, %v4175
      %v4177 = vpop.f32.mrf.mxu0
      %v4178 = vadd.f32 %v3655, %v4177
      %4179 = vmatmul.bf16.gmra.mxu0 %v2913
      %v4180 = vpop.f32.mrf.mxu0
      %v4181 = vadd.f32 %v3658, %v4180
      %v4182 = vpop.f32.mrf.mxu0
      %v4183 = vadd.f32 %v3660, %v4182
      %4184 = vmatmul.bf16.gmra.mxu0 %v2915
      %v4185 = vpop.f32.mrf.mxu0
      %v4186 = vadd.f32 %v3663, %v4185
      %v4187 = vpop.f32.mrf.mxu0
      %v4188 = vadd.f32 %v3665, %v4187
      %4189 = vmatmul.bf16.gmra.mxu0 %v2917
      %v4190 = vpop.f32.mrf.mxu0
      %v4191 = vadd.f32 %v3668, %v4190
      %v4192 = vpop.f32.mrf.mxu0
      %v4193 = vadd.f32 %v3670, %v4192
      %4194 = vdwg.mxu0
      %4195 = vmatpush.bf16.msra.mxu0 %v3927
      %4196 = vmatpush.bf16.msra.mxu0 %v3923
      %4197 = vmatpush.bf16.msra.mxu0 %v3919
      %4198 = vmatpush.bf16.msra.mxu0 %v3915
      %4199 = vmatpush.bf16.msra.mxu0 %v3911
      %4200 = vmatpush.bf16.msra.mxu0 %v3907
      %4201 = vmatpush.bf16.msra.mxu0 %v3903
      %4202 = vmatpush.bf16.msra.mxu0 %v3899
      %4203 = vmatmul.bf16.gmra.mxu0 %v2912
      %v4204 = vpop.f32.mrf.mxu0
      %v4205 = vadd.f32 %v4176, %v4204
      %v4206 = vpop.f32.mrf.mxu0
      %v4207 = vadd.f32 %v4178, %v4206
      %4208 = vmatmul.bf16.gmra.mxu0 %v2914
      %v4209 = vpop.f32.mrf.mxu0
      %v4210 = vadd.f32 %v4181, %v4209
      %v4211 = vpop.f32.mrf.mxu0
      %v4212 = vadd.f32 %v4183, %v4211
      %4213 = vmatmul.bf16.gmra.mxu0 %v2916
      %v4214 = vpop.f32.mrf.mxu0
      %v4215 = vadd.f32 %v4186, %v4214
      %v4216 = vpop.f32.mrf.mxu0
      %v4217 = vadd.f32 %v4188, %v4216
      %4218 = vmatmul.bf16.gmra.mxu0 %v2918
      %v4219 = vpop.f32.mrf.mxu0
      %v4220 = vadd.f32 %v4191, %v4219
      %v4221 = vpop.f32.mrf.mxu0
      %v4222 = vadd.f32 %v4193, %v4221
      %4223 = vdwg.mxu0
      %v4224 = vrot.slane %v2895, 2
      %v4225 = vrot.slane %v2897, 2
      %v4226 = vsel %vm650, %v4224, %v4225
      %v4227 = vrot.slane %v2896, 2
      %v4228 = vrot.slane %v2898, 2
      %v4229 = vsel %vm650, %v4227, %v4228
      %v4230 = vrot.slane %v2899, 2
      %v4231 = vsel %vm650, %v4225, %v4230
      %v4232 = vrot.slane %v2900, 2
      %v4233 = vsel %vm650, %v4228, %v4232
      %v4234 = vrot.slane %v2901, 2
      %v4235 = vsel %vm650, %v4230, %v4234
      %v4236 = vrot.slane %v2902, 2
      %v4237 = vsel %vm650, %v4232, %v4236
      %v4238 = vrot.slane %v2903, 2
      %v4239 = vsel %vm650, %v4234, %v4238
      %v4240 = vrot.slane %v2904, 2
      %v4241 = vsel %vm650, %v4236, %v4240
      %v4242 = vrot.slane %v2905, 2
      %v4243 = vsel %vm650, %v4238, %v4242
      %v4244 = vrot.slane %v2906, 2
      %v4245 = vsel %vm650, %v4240, %v4244
      %v4246 = vrot.slane %v2907, 2
      %v4247 = vsel %vm650, %v4242, %v4246
      %v4248 = vrot.slane %v2908, 2
      %v4249 = vsel %vm650, %v4244, %v4248
      %v4250 = vrot.slane %v2909, 2
      %v4251 = vsel %vm650, %v4246, %v4250
      %v4252 = vrot.slane %v2910, 2
      %v4253 = vsel %vm650, %v4248, %v4252
      %v4270 = vsel %vm650, %v4250, 0.0
      %v4271 = vsel %vm650, %v4252, 0.0
      %v4272 = vpack.c.bf16 %v4231, %v4226
      %v4273 = vpack.c.bf16 %v4233, %v4229
      %v4274 = vpack.c.bf16 %v4239, %v4235
      %v4275 = vpack.c.bf16 %v4241, %v4237
      %v4276 = vpack.c.bf16 %v4247, %v4243
      %v4277 = vpack.c.bf16 %v4249, %v4245
      %v4278 = vpack.c.bf16 %v4270, %v4251
      %v4279 = vpack.c.bf16 %v4271, %v4253
      %s4280 = scalar_lea.vmem %s9, 1024
      %v4281 = vld [vmem:[%s4280] sm:$0xff]
      %v4282 = vld [vmem:[%s4280 + $0x8] sm:$0xff]
      %v4283 = vld [vmem:[%s4280 + $0x10] sm:$0xff]
      %v4284 = vld [vmem:[%s4280 + $0x18] sm:$0xff]
      %v4285 = vld [vmem:[%s4280 + $0x20] sm:$0xff]
      %v4286 = vld [vmem:[%s4280 + $0x28] sm:$0xff]
      %v4287 = vld [vmem:[%s4280 + $0x30] sm:$0xff]
      %v4288 = vld [vmem:[%s4280 + $0x38] sm:$0xff]
      %v4289 = vld [vmem:[%s4280 + $0x40] sm:$0xff]
      %v4290 = vld [vmem:[%s4280 + $0x48] sm:$0xff]
      %v4291 = vld [vmem:[%s4280 + $0x50] sm:$0xff]
      %v4292 = vld [vmem:[%s4280 + $0x58] sm:$0xff]
      %v4293 = vld [vmem:[%s4280 + $0x60] sm:$0xff]
      %v4294 = vld [vmem:[%s4280 + $0x68] sm:$0xff]
      %v4295 = vld [vmem:[%s4280 + $0x70] sm:$0xff]
      %v4296 = vld [vmem:[%s4280 + $0x78] sm:$0xff]
      %v4297 = vld [vmem:[%s4280 + $0x80] sm:$0xff]
      %v4298 = vld [vmem:[%s4280 + $0x88] sm:$0xff]
      %v4299 = vld [vmem:[%s4280 + $0x90] sm:$0xff]
      %v4300 = vld [vmem:[%s4280 + $0x98] sm:$0xff]
      %v4301 = vld [vmem:[%s4280 + $0xa0] sm:$0xff]
      %v4302 = vld [vmem:[%s4280 + $0xa8] sm:$0xff]
      %v4303 = vld [vmem:[%s4280 + $0xb0] sm:$0xff]
      %v4304 = vld [vmem:[%s4280 + $0xb8] sm:$0xff]
      %v4305 = vld [vmem:[%s4280 + $0xc0] sm:$0xff]
      %v4306 = vld [vmem:[%s4280 + $0xc8] sm:$0xff]
      %v4307 = vld [vmem:[%s4280 + $0xd0] sm:$0xff]
      %v4308 = vld [vmem:[%s4280 + $0xd8] sm:$0xff]
      %v4309 = vld [vmem:[%s4280 + $0xe0] sm:$0xff]
      %v4310 = vld [vmem:[%s4280 + $0xe8] sm:$0xff]
      %v4311 = vld [vmem:[%s4280 + $0xf0] sm:$0xff]
      %v4312 = vld [vmem:[%s4280 + $0xf8] sm:$0xff]
      %v4313 = vld [vmem:[%s4280 + $0x100] sm:$0xff]
      %v4314 = vld [vmem:[%s4280 + $0x108] sm:$0xff]
      %v4315 = vld [vmem:[%s4280 + $0x110] sm:$0xff]
      %v4316 = vld [vmem:[%s4280 + $0x118] sm:$0xff]
      %v4317 = vld [vmem:[%s4280 + $0x120] sm:$0xff]
      %v4318 = vld [vmem:[%s4280 + $0x128] sm:$0xff]
      %v4319 = vld [vmem:[%s4280 + $0x130] sm:$0xff]
      %v4320 = vld [vmem:[%s4280 + $0x138] sm:$0xff]
      %v4321 = vld [vmem:[%s4280 + $0x140] sm:$0xff]
      %v4322 = vld [vmem:[%s4280 + $0x148] sm:$0xff]
      %v4323 = vld [vmem:[%s4280 + $0x150] sm:$0xff]
      %v4324 = vld [vmem:[%s4280 + $0x158] sm:$0xff]
      %v4325 = vld [vmem:[%s4280 + $0x160] sm:$0xff]
      %v4326 = vld [vmem:[%s4280 + $0x168] sm:$0xff]
      %v4327 = vld [vmem:[%s4280 + $0x170] sm:$0xff]
      %v4328 = vld [vmem:[%s4280 + $0x178] sm:$0xff]
      %v4329 = vld [vmem:[%s4280 + $0x180] sm:$0xff]
      %v4330 = vld [vmem:[%s4280 + $0x188] sm:$0xff]
      %v4331 = vld [vmem:[%s4280 + $0x190] sm:$0xff]
      %v4332 = vld [vmem:[%s4280 + $0x198] sm:$0xff]
      %v4333 = vld [vmem:[%s4280 + $0x1a0] sm:$0xff]
      %v4334 = vld [vmem:[%s4280 + $0x1a8] sm:$0xff]
      %v4335 = vld [vmem:[%s4280 + $0x1b0] sm:$0xff]
      %v4336 = vld [vmem:[%s4280 + $0x1b8] sm:$0xff]
      %v4337 = vld [vmem:[%s4280 + $0x1c0] sm:$0xff]
      %v4338 = vld [vmem:[%s4280 + $0x1c8] sm:$0xff]
      %v4339 = vld [vmem:[%s4280 + $0x1d0] sm:$0xff]
      %v4340 = vld [vmem:[%s4280 + $0x1d8] sm:$0xff]
      %v4341 = vld [vmem:[%s4280 + $0x1e0] sm:$0xff]
      %v4342 = vld [vmem:[%s4280 + $0x1e8] sm:$0xff]
      %v4343 = vld [vmem:[%s4280 + $0x1f0] sm:$0xff]
      %v4344 = vld [vmem:[%s4280 + $0x1f8] sm:$0xff]
      %v4409 = vunpack.c.l.b16 %v4281
      %v4410 = vunpack.c.h.b16 %v4281
      %v4411 = vunpack.c.l.b16 %v4282
      %v4412 = vunpack.c.h.b16 %v4282
      %v4413 = vunpack.c.l.b16 %v4283
      %v4414 = vunpack.c.h.b16 %v4283
      %v4415 = vunpack.c.l.b16 %v4284
      %v4416 = vunpack.c.h.b16 %v4284
      %v4417 = vunpack.c.l.b16 %v4285
      %v4418 = vunpack.c.h.b16 %v4285
      %v4419 = vunpack.c.l.b16 %v4286
      %v4420 = vunpack.c.h.b16 %v4286
      %v4421 = vunpack.c.l.b16 %v4287
      %v4422 = vunpack.c.h.b16 %v4287
      %v4423 = vunpack.c.l.b16 %v4288
      %v4424 = vunpack.c.h.b16 %v4288
      %v4425 = vunpack.c.l.b16 %v4289
      %v4426 = vunpack.c.h.b16 %v4289
      %v4427 = vunpack.c.l.b16 %v4290
      %v4428 = vunpack.c.h.b16 %v4290
      %v4429 = vunpack.c.l.b16 %v4291
      %v4430 = vunpack.c.h.b16 %v4291
      %v4431 = vunpack.c.l.b16 %v4292
      %v4432 = vunpack.c.h.b16 %v4292
      %v4433 = vunpack.c.l.b16 %v4293
      %v4434 = vunpack.c.h.b16 %v4293
      %v4435 = vunpack.c.l.b16 %v4294
      %v4436 = vunpack.c.h.b16 %v4294
      %v4437 = vunpack.c.l.b16 %v4295
      %v4438 = vunpack.c.h.b16 %v4295
      %v4439 = vunpack.c.l.b16 %v4296
      %v4440 = vunpack.c.h.b16 %v4296
      %v4441 = vunpack.c.l.b16 %v4297
      %v4442 = vunpack.c.h.b16 %v4297
      %v4443 = vunpack.c.l.b16 %v4298
      %v4444 = vunpack.c.h.b16 %v4298
      %v4445 = vunpack.c.l.b16 %v4299
      %v4446 = vunpack.c.h.b16 %v4299
      %v4447 = vunpack.c.l.b16 %v4300
      %v4448 = vunpack.c.h.b16 %v4300
      %v4449 = vunpack.c.l.b16 %v4301
      %v4450 = vunpack.c.h.b16 %v4301
      %v4451 = vunpack.c.l.b16 %v4302
      %v4452 = vunpack.c.h.b16 %v4302
      %v4453 = vunpack.c.l.b16 %v4303
      %v4454 = vunpack.c.h.b16 %v4303
      %v4455 = vunpack.c.l.b16 %v4304
      %v4456 = vunpack.c.h.b16 %v4304
      %v4457 = vunpack.c.l.b16 %v4305
      %v4458 = vunpack.c.h.b16 %v4305
      %v4459 = vunpack.c.l.b16 %v4306
      %v4460 = vunpack.c.h.b16 %v4306
      %v4461 = vunpack.c.l.b16 %v4307
      %v4462 = vunpack.c.h.b16 %v4307
      %v4463 = vunpack.c.l.b16 %v4308
      %v4464 = vunpack.c.h.b16 %v4308
      %v4465 = vunpack.c.l.b16 %v4309
      %v4466 = vunpack.c.h.b16 %v4309
      %v4467 = vunpack.c.l.b16 %v4310
      %v4468 = vunpack.c.h.b16 %v4310
      %v4469 = vunpack.c.l.b16 %v4311
      %v4470 = vunpack.c.h.b16 %v4311
      %v4471 = vunpack.c.l.b16 %v4312
      %v4472 = vunpack.c.h.b16 %v4312
      %v4473 = vunpack.c.l.b16 %v4313
      %v4474 = vunpack.c.h.b16 %v4313
      %v4475 = vunpack.c.l.b16 %v4314
      %v4476 = vunpack.c.h.b16 %v4314
      %v4477 = vunpack.c.l.b16 %v4315
      %v4478 = vunpack.c.h.b16 %v4315
      %v4479 = vunpack.c.l.b16 %v4316
      %v4480 = vunpack.c.h.b16 %v4316
      %v4481 = vunpack.c.l.b16 %v4317
      %v4482 = vunpack.c.h.b16 %v4317
      %v4483 = vunpack.c.l.b16 %v4318
      %v4484 = vunpack.c.h.b16 %v4318
      %v4485 = vunpack.c.l.b16 %v4319
      %v4486 = vunpack.c.h.b16 %v4319
      %v4487 = vunpack.c.l.b16 %v4320
      %v4488 = vunpack.c.h.b16 %v4320
      %v4489 = vunpack.c.l.b16 %v4321
      %v4490 = vunpack.c.h.b16 %v4321
      %v4491 = vunpack.c.l.b16 %v4322
      %v4492 = vunpack.c.h.b16 %v4322
      %v4493 = vunpack.c.l.b16 %v4323
      %v4494 = vunpack.c.h.b16 %v4323
      %v4495 = vunpack.c.l.b16 %v4324
      %v4496 = vunpack.c.h.b16 %v4324
      %v4497 = vunpack.c.l.b16 %v4325
      %v4498 = vunpack.c.h.b16 %v4325
      %v4499 = vunpack.c.l.b16 %v4326
      %v4500 = vunpack.c.h.b16 %v4326
      %v4501 = vunpack.c.l.b16 %v4327
      %v4502 = vunpack.c.h.b16 %v4327
      %v4503 = vunpack.c.l.b16 %v4328
      %v4504 = vunpack.c.h.b16 %v4328
      %v4505 = vunpack.c.l.b16 %v4329
      %v4506 = vunpack.c.h.b16 %v4329
      %v4507 = vunpack.c.l.b16 %v4330
      %v4508 = vunpack.c.h.b16 %v4330
      %v4509 = vunpack.c.l.b16 %v4331
      %v4510 = vunpack.c.h.b16 %v4331
      %v4511 = vunpack.c.l.b16 %v4332
      %v4512 = vunpack.c.h.b16 %v4332
      %v4513 = vunpack.c.l.b16 %v4333
      %v4514 = vunpack.c.h.b16 %v4333
      %v4515 = vunpack.c.l.b16 %v4334
      %v4516 = vunpack.c.h.b16 %v4334
      %v4517 = vunpack.c.l.b16 %v4335
      %v4518 = vunpack.c.h.b16 %v4335
      %v4519 = vunpack.c.l.b16 %v4336
      %v4520 = vunpack.c.h.b16 %v4336
      %v4521 = vunpack.c.l.b16 %v4337
      %v4522 = vunpack.c.h.b16 %v4337
      %v4523 = vunpack.c.l.b16 %v4338
      %v4524 = vunpack.c.h.b16 %v4338
      %v4525 = vunpack.c.l.b16 %v4339
      %v4526 = vunpack.c.h.b16 %v4339
      %v4527 = vunpack.c.l.b16 %v4340
      %v4528 = vunpack.c.h.b16 %v4340
      %v4529 = vunpack.c.l.b16 %v4341
      %v4530 = vunpack.c.h.b16 %v4341
      %v4531 = vunpack.c.l.b16 %v4342
      %v4532 = vunpack.c.h.b16 %v4342
      %v4533 = vunpack.c.l.b16 %v4343
      %v4534 = vunpack.c.h.b16 %v4343
      %v4535 = vunpack.c.l.b16 %v4344
      %v4536 = vunpack.c.h.b16 %v4344
      %v4537 = vpack.c.b16 %v4413, %v4409
      %v4538 = vpack.c.b16 %v4414, %v4410
      %v4539 = vpack.c.b16 %v4415, %v4411
      %v4540 = vpack.c.b16 %v4416, %v4412
      %v4541 = vpack.c.b16 %v4421, %v4417
      %v4542 = vpack.c.b16 %v4422, %v4418
      %v4543 = vpack.c.b16 %v4423, %v4419
      %v4544 = vpack.c.b16 %v4424, %v4420
      %v4545 = vpack.c.b16 %v4429, %v4425
      %v4546 = vpack.c.b16 %v4430, %v4426
      %v4547 = vpack.c.b16 %v4431, %v4427
      %v4548 = vpack.c.b16 %v4432, %v4428
      %v4549 = vpack.c.b16 %v4437, %v4433
      %v4550 = vpack.c.b16 %v4438, %v4434
      %v4551 = vpack.c.b16 %v4439, %v4435
      %v4552 = vpack.c.b16 %v4440, %v4436
      %v4553 = vpack.c.b16 %v4445, %v4441
      %v4554 = vpack.c.b16 %v4446, %v4442
      %v4555 = vpack.c.b16 %v4447, %v4443
      %v4556 = vpack.c.b16 %v4448, %v4444
      %v4557 = vpack.c.b16 %v4453, %v4449
      %v4558 = vpack.c.b16 %v4454, %v4450
      %v4559 = vpack.c.b16 %v4455, %v4451
      %v4560 = vpack.c.b16 %v4456, %v4452
      %v4561 = vpack.c.b16 %v4461, %v4457
      %v4562 = vpack.c.b16 %v4462, %v4458
      %v4563 = vpack.c.b16 %v4463, %v4459
      %v4564 = vpack.c.b16 %v4464, %v4460
      %v4565 = vpack.c.b16 %v4469, %v4465
      %v4566 = vpack.c.b16 %v4470, %v4466
      %v4567 = vpack.c.b16 %v4471, %v4467
      %v4568 = vpack.c.b16 %v4472, %v4468
      %v4569 = vpack.c.b16 %v4477, %v4473
      %v4570 = vpack.c.b16 %v4478, %v4474
      %v4571 = vpack.c.b16 %v4479, %v4475
      %v4572 = vpack.c.b16 %v4480, %v4476
      %v4573 = vpack.c.b16 %v4485, %v4481
      %v4574 = vpack.c.b16 %v4486, %v4482
      %v4575 = vpack.c.b16 %v4487, %v4483
      %v4576 = vpack.c.b16 %v4488, %v4484
      %v4577 = vpack.c.b16 %v4493, %v4489
      %v4578 = vpack.c.b16 %v4494, %v4490
      %v4579 = vpack.c.b16 %v4495, %v4491
      %v4580 = vpack.c.b16 %v4496, %v4492
      %v4581 = vpack.c.b16 %v4501, %v4497
      %v4582 = vpack.c.b16 %v4502, %v4498
      %v4583 = vpack.c.b16 %v4503, %v4499
      %v4584 = vpack.c.b16 %v4504, %v4500
      %v4585 = vpack.c.b16 %v4509, %v4505
      %v4586 = vpack.c.b16 %v4510, %v4506
      %v4587 = vpack.c.b16 %v4511, %v4507
      %v4588 = vpack.c.b16 %v4512, %v4508
      %v4589 = vpack.c.b16 %v4517, %v4513
      %v4590 = vpack.c.b16 %v4518, %v4514
      %v4591 = vpack.c.b16 %v4519, %v4515
      %v4592 = vpack.c.b16 %v4520, %v4516
      %v4593 = vpack.c.b16 %v4525, %v4521
      %v4594 = vpack.c.b16 %v4526, %v4522
      %v4595 = vpack.c.b16 %v4527, %v4523
      %v4596 = vpack.c.b16 %v4528, %v4524
      %v4597 = vpack.c.b16 %v4533, %v4529
      %v4598 = vpack.c.b16 %v4534, %v4530
      %v4599 = vpack.c.b16 %v4535, %v4531
      %v4600 = vpack.c.b16 %v4536, %v4532
      %4665 = vmatpush.bf16.msra.mxu0 %v4565
      %4666 = vmatpush.bf16.msra.mxu0 %v4561
      %4667 = vmatpush.bf16.msra.mxu0 %v4557
      %4668 = vmatpush.bf16.msra.mxu0 %v4553
      %4669 = vmatpush.bf16.msra.mxu0 %v4549
      %4670 = vmatpush.bf16.msra.mxu0 %v4545
      %4671 = vmatpush.bf16.msra.mxu0 %v4541
      %4672 = vmatpush.bf16.msra.mxu0 %v4537
      %4673 = vmatmul.bf16.gmra.mxu0 %v4272
      %v4674 = vpop.f32.mrf.mxu0
      %v4675 = vadd.f32 0.0, %v4674
      %v4676 = vpop.f32.mrf.mxu0
      %v4677 = vadd.f32 0.0, %v4676
      %4678 = vmatmul.bf16.gmra.mxu0 %v4274
      %v4679 = vpop.f32.mrf.mxu0
      %v4680 = vadd.f32 0.0, %v4679
      %v4681 = vpop.f32.mrf.mxu0
      %v4682 = vadd.f32 0.0, %v4681
      %4683 = vmatmul.bf16.gmra.mxu0 %v4276
      %v4684 = vpop.f32.mrf.mxu0
      %v4685 = vadd.f32 0.0, %v4684
      %v4686 = vpop.f32.mrf.mxu0
      %v4687 = vadd.f32 0.0, %v4686
      %4688 = vmatmul.bf16.gmra.mxu0 %v4278
      %v4689 = vpop.f32.mrf.mxu0
      %v4690 = vadd.f32 0.0, %v4689
      %v4691 = vpop.f32.mrf.mxu0
      %v4692 = vadd.f32 0.0, %v4691
      %4693 = vdwg.mxu0
      %4694 = vmatpush.bf16.msra.mxu0 %v4597
      %4695 = vmatpush.bf16.msra.mxu0 %v4593
      %4696 = vmatpush.bf16.msra.mxu0 %v4589
      %4697 = vmatpush.bf16.msra.mxu0 %v4585
      %4698 = vmatpush.bf16.msra.mxu0 %v4581
      %4699 = vmatpush.bf16.msra.mxu0 %v4577
      %4700 = vmatpush.bf16.msra.mxu0 %v4573
      %4701 = vmatpush.bf16.msra.mxu0 %v4569
      %4702 = vmatmul.bf16.gmra.mxu0 %v4273
      %v4703 = vpop.f32.mrf.mxu0
      %v4704 = vadd.f32 %v4675, %v4703
      %v4705 = vpop.f32.mrf.mxu0
      %v4706 = vadd.f32 %v4677, %v4705
      %4707 = vmatmul.bf16.gmra.mxu0 %v4275
      %v4708 = vpop.f32.mrf.mxu0
      %v4709 = vadd.f32 %v4680, %v4708
      %v4710 = vpop.f32.mrf.mxu0
      %v4711 = vadd.f32 %v4682, %v4710
      %4712 = vmatmul.bf16.gmra.mxu0 %v4277
      %v4713 = vpop.f32.mrf.mxu0
      %v4714 = vadd.f32 %v4685, %v4713
      %v4715 = vpop.f32.mrf.mxu0
      %v4716 = vadd.f32 %v4687, %v4715
      %4717 = vmatmul.bf16.gmra.mxu0 %v4279
      %v4718 = vpop.f32.mrf.mxu0
      %v4719 = vadd.f32 %v4690, %v4718
      %v4720 = vpop.f32.mrf.mxu0
      %v4721 = vadd.f32 %v4692, %v4720
      %4722 = vdwg.mxu0
      %4723 = vmatpush.bf16.msra.mxu0 %v4566
      %4724 = vmatpush.bf16.msra.mxu0 %v4562
      %4725 = vmatpush.bf16.msra.mxu0 %v4558
      %4726 = vmatpush.bf16.msra.mxu0 %v4554
      %4727 = vmatpush.bf16.msra.mxu0 %v4550
      %4728 = vmatpush.bf16.msra.mxu0 %v4546
      %4729 = vmatpush.bf16.msra.mxu0 %v4542
      %4730 = vmatpush.bf16.msra.mxu0 %v4538
      %4731 = vmatmul.bf16.gmra.mxu0 %v4272
      %v4732 = vpop.f32.mrf.mxu0
      %v4733 = vadd.f32 0.0, %v4732
      %v4734 = vpop.f32.mrf.mxu0
      %v4735 = vadd.f32 0.0, %v4734
      %4736 = vmatmul.bf16.gmra.mxu0 %v4274
      %v4737 = vpop.f32.mrf.mxu0
      %v4738 = vadd.f32 0.0, %v4737
      %v4739 = vpop.f32.mrf.mxu0
      %v4740 = vadd.f32 0.0, %v4739
      %4741 = vmatmul.bf16.gmra.mxu0 %v4276
      %v4742 = vpop.f32.mrf.mxu0
      %v4743 = vadd.f32 0.0, %v4742
      %v4744 = vpop.f32.mrf.mxu0
      %v4745 = vadd.f32 0.0, %v4744
      %4746 = vmatmul.bf16.gmra.mxu0 %v4278
      %v4747 = vpop.f32.mrf.mxu0
      %v4748 = vadd.f32 0.0, %v4747
      %v4749 = vpop.f32.mrf.mxu0
      %v4750 = vadd.f32 0.0, %v4749
      %4751 = vdwg.mxu0
      %4752 = vmatpush.bf16.msra.mxu0 %v4598
      %4753 = vmatpush.bf16.msra.mxu0 %v4594
      %4754 = vmatpush.bf16.msra.mxu0 %v4590
      %4755 = vmatpush.bf16.msra.mxu0 %v4586
      %4756 = vmatpush.bf16.msra.mxu0 %v4582
      %4757 = vmatpush.bf16.msra.mxu0 %v4578
      %4758 = vmatpush.bf16.msra.mxu0 %v4574
      %4759 = vmatpush.bf16.msra.mxu0 %v4570
      %4760 = vmatmul.bf16.gmra.mxu0 %v4273
      %v4761 = vpop.f32.mrf.mxu0
      %v4762 = vadd.f32 %v4733, %v4761
      %v4763 = vpop.f32.mrf.mxu0
      %v4764 = vadd.f32 %v4735, %v4763
      %4765 = vmatmul.bf16.gmra.mxu0 %v4275
      %v4766 = vpop.f32.mrf.mxu0
      %v4767 = vadd.f32 %v4738, %v4766
      %v4768 = vpop.f32.mrf.mxu0
      %v4769 = vadd.f32 %v4740, %v4768
      %4770 = vmatmul.bf16.gmra.mxu0 %v4277
      %v4771 = vpop.f32.mrf.mxu0
      %v4772 = vadd.f32 %v4743, %v4771
      %v4773 = vpop.f32.mrf.mxu0
      %v4774 = vadd.f32 %v4745, %v4773
      %4775 = vmatmul.bf16.gmra.mxu0 %v4279
      %v4776 = vpop.f32.mrf.mxu0
      %v4777 = vadd.f32 %v4748, %v4776
      %v4778 = vpop.f32.mrf.mxu0
      %v4779 = vadd.f32 %v4750, %v4778
      %4780 = vdwg.mxu0
      %4781 = vmatpush.bf16.msra.mxu0 %v4567
      %4782 = vmatpush.bf16.msra.mxu0 %v4563
      %4783 = vmatpush.bf16.msra.mxu0 %v4559
      %4784 = vmatpush.bf16.msra.mxu0 %v4555
      %4785 = vmatpush.bf16.msra.mxu0 %v4551
      %4786 = vmatpush.bf16.msra.mxu0 %v4547
      %4787 = vmatpush.bf16.msra.mxu0 %v4543
      %4788 = vmatpush.bf16.msra.mxu0 %v4539
      %4789 = vmatmul.bf16.gmra.mxu0 %v4272
      %v4790 = vpop.f32.mrf.mxu0
      %v4791 = vadd.f32 0.0, %v4790
      %v4792 = vpop.f32.mrf.mxu0
      %v4793 = vadd.f32 0.0, %v4792
      %4794 = vmatmul.bf16.gmra.mxu0 %v4274
      %v4795 = vpop.f32.mrf.mxu0
      %v4796 = vadd.f32 0.0, %v4795
      %v4797 = vpop.f32.mrf.mxu0
      %v4798 = vadd.f32 0.0, %v4797
      %4799 = vmatmul.bf16.gmra.mxu0 %v4276
      %v4800 = vpop.f32.mrf.mxu0
      %v4801 = vadd.f32 0.0, %v4800
      %v4802 = vpop.f32.mrf.mxu0
      %v4803 = vadd.f32 0.0, %v4802
      %4804 = vmatmul.bf16.gmra.mxu0 %v4278
      %v4805 = vpop.f32.mrf.mxu0
      %v4806 = vadd.f32 0.0, %v4805
      %v4807 = vpop.f32.mrf.mxu0
      %v4808 = vadd.f32 0.0, %v4807
      %4809 = vdwg.mxu0
      %4810 = vmatpush.bf16.msra.mxu0 %v4599
      %4811 = vmatpush.bf16.msra.mxu0 %v4595
      %4812 = vmatpush.bf16.msra.mxu0 %v4591
      %4813 = vmatpush.bf16.msra.mxu0 %v4587
      %4814 = vmatpush.bf16.msra.mxu0 %v4583
      %4815 = vmatpush.bf16.msra.mxu0 %v4579
      %4816 = vmatpush.bf16.msra.mxu0 %v4575
      %4817 = vmatpush.bf16.msra.mxu0 %v4571
      %4818 = vmatmul.bf16.gmra.mxu0 %v4273
      %v4819 = vpop.f32.mrf.mxu0
      %v4820 = vadd.f32 %v4791, %v4819
      %v4821 = vpop.f32.mrf.mxu0
      %v4822 = vadd.f32 %v4793, %v4821
      %4823 = vmatmul.bf16.gmra.mxu0 %v4275
      %v4824 = vpop.f32.mrf.mxu0
      %v4825 = vadd.f32 %v4796, %v4824
      %v4826 = vpop.f32.mrf.mxu0
      %v4827 = vadd.f32 %v4798, %v4826
      %4828 = vmatmul.bf16.gmra.mxu0 %v4277
      %v4829 = vpop.f32.mrf.mxu0
      %v4830 = vadd.f32 %v4801, %v4829
      %v4831 = vpop.f32.mrf.mxu0
      %v4832 = vadd.f32 %v4803, %v4831
      %4833 = vmatmul.bf16.gmra.mxu0 %v4279
      %v4834 = vpop.f32.mrf.mxu0
      %v4835 = vadd.f32 %v4806, %v4834
      %v4836 = vpop.f32.mrf.mxu0
      %v4837 = vadd.f32 %v4808, %v4836
      %4838 = vdwg.mxu0
      %4839 = vmatpush.bf16.msra.mxu0 %v4568
      %4840 = vmatpush.bf16.msra.mxu0 %v4564
      %4841 = vmatpush.bf16.msra.mxu0 %v4560
      %4842 = vmatpush.bf16.msra.mxu0 %v4556
      %4843 = vmatpush.bf16.msra.mxu0 %v4552
      %4844 = vmatpush.bf16.msra.mxu0 %v4548
      %4845 = vmatpush.bf16.msra.mxu0 %v4544
      %4846 = vmatpush.bf16.msra.mxu0 %v4540
      %4847 = vmatmul.bf16.gmra.mxu0 %v4272
      %v4848 = vpop.f32.mrf.mxu0
      %v4849 = vadd.f32 0.0, %v4848
      %v4850 = vpop.f32.mrf.mxu0
      %v4851 = vadd.f32 0.0, %v4850
      %4852 = vmatmul.bf16.gmra.mxu0 %v4274
      %v4853 = vpop.f32.mrf.mxu0
      %v4854 = vadd.f32 0.0, %v4853
      %v4855 = vpop.f32.mrf.mxu0
      %v4856 = vadd.f32 0.0, %v4855
      %4857 = vmatmul.bf16.gmra.mxu0 %v4276
      %v4858 = vpop.f32.mrf.mxu0
      %v4859 = vadd.f32 0.0, %v4858
      %v4860 = vpop.f32.mrf.mxu0
      %v4861 = vadd.f32 0.0, %v4860
      %4862 = vmatmul.bf16.gmra.mxu0 %v4278
      %v4863 = vpop.f32.mrf.mxu0
      %v4864 = vadd.f32 0.0, %v4863
      %v4865 = vpop.f32.mrf.mxu0
      %v4866 = vadd.f32 0.0, %v4865
      %4867 = vdwg.mxu0
      %4868 = vmatpush.bf16.msra.mxu0 %v4600
      %4869 = vmatpush.bf16.msra.mxu0 %v4596
      %4870 = vmatpush.bf16.msra.mxu0 %v4592
      %4871 = vmatpush.bf16.msra.mxu0 %v4588
      %4872 = vmatpush.bf16.msra.mxu0 %v4584
      %4873 = vmatpush.bf16.msra.mxu0 %v4580
      %4874 = vmatpush.bf16.msra.mxu0 %v4576
      %4875 = vmatpush.bf16.msra.mxu0 %v4572
      %4876 = vmatmul.bf16.gmra.mxu0 %v4273
      %v4877 = vpop.f32.mrf.mxu0
      %v4878 = vadd.f32 %v4849, %v4877
      %v4879 = vpop.f32.mrf.mxu0
      %v4880 = vadd.f32 %v4851, %v4879
      %4881 = vmatmul.bf16.gmra.mxu0 %v4275
      %v4882 = vpop.f32.mrf.mxu0
      %v4883 = vadd.f32 %v4854, %v4882
      %v4884 = vpop.f32.mrf.mxu0
      %v4885 = vadd.f32 %v4856, %v4884
      %4886 = vmatmul.bf16.gmra.mxu0 %v4277
      %v4887 = vpop.f32.mrf.mxu0
      %v4888 = vadd.f32 %v4859, %v4887
      %v4889 = vpop.f32.mrf.mxu0
      %v4890 = vadd.f32 %v4861, %v4889
      %4891 = vmatmul.bf16.gmra.mxu0 %v4279
      %v4892 = vpop.f32.mrf.mxu0
      %v4893 = vadd.f32 %v4864, %v4892
      %v4894 = vpop.f32.mrf.mxu0
      %v4895 = vadd.f32 %v4866, %v4894
      %4896 = vdwg.mxu0
      %v4897 = vadd.f32 %v4031, %v4704
      %v4898 = vadd.f32 %v4089, %v4762
      %v4899 = vadd.f32 %v4147, %v4820
      %v4900 = vadd.f32 %v4205, %v4878
      %v4901 = vadd.f32 %v4033, %v4706
      %v4902 = vadd.f32 %v4091, %v4764
      %v4903 = vadd.f32 %v4149, %v4822
      %v4904 = vadd.f32 %v4207, %v4880
      %v4905 = vadd.f32 %v4036, %v4709
      %v4906 = vadd.f32 %v4094, %v4767
      %v4907 = vadd.f32 %v4152, %v4825
      %v4908 = vadd.f32 %v4210, %v4883
      %v4909 = vadd.f32 %v4038, %v4711
      %v4910 = vadd.f32 %v4096, %v4769
      %v4911 = vadd.f32 %v4154, %v4827
      %v4912 = vadd.f32 %v4212, %v4885
      %v4913 = vadd.f32 %v4041, %v4714
      %v4914 = vadd.f32 %v4099, %v4772
      %v4915 = vadd.f32 %v4157, %v4830
      %v4916 = vadd.f32 %v4215, %v4888
      %v4917 = vadd.f32 %v4043, %v4716
      %v4918 = vadd.f32 %v4101, %v4774
      %v4919 = vadd.f32 %v4159, %v4832
      %v4920 = vadd.f32 %v4217, %v4890
      %v4921 = vadd.f32 %v4046, %v4719
      %v4922 = vadd.f32 %v4104, %v4777
      %v4923 = vadd.f32 %v4162, %v4835
      %v4924 = vadd.f32 %v4220, %v4893
      %v4925 = vadd.f32 %v4048, %v4721
      %v4926 = vadd.f32 %v4106, %v4779
      %v4927 = vadd.f32 %v4164, %v4837
      %v4928 = vadd.f32 %v4222, %v4895
      %v4929 = vld [vmem:[%s10] ss:$2 sm:$0xf]
      %v4931 = vperm.slane %v4929, 0
      %v4932 = vperm.slane %v4929, 1
      %v4933 = vperm.slane %v4929, 2
      %v4934 = vperm.slane %v4929, 3
      %v4939 = vmul.f32 %v4897, %v4931
      %v4940 = vmul.f32 %v4898, %v4932
      %v4941 = vmul.f32 %v4899, %v4933
      %v4942 = vmul.f32 %v4900, %v4934
      %v4943 = vmul.f32 %v4901, %v4931
      %v4944 = vmul.f32 %v4902, %v4932
      %v4945 = vmul.f32 %v4903, %v4933
      %v4946 = vmul.f32 %v4904, %v4934
      %v4947 = vmul.f32 %v4905, %v4931
      %v4948 = vmul.f32 %v4906, %v4932
      %v4949 = vmul.f32 %v4907, %v4933
      %v4950 = vmul.f32 %v4908, %v4934
      %v4951 = vmul.f32 %v4909, %v4931
      %v4952 = vmul.f32 %v4910, %v4932
      %v4953 = vmul.f32 %v4911, %v4933
      %v4954 = vmul.f32 %v4912, %v4934
      %v4955 = vmul.f32 %v4913, %v4931
      %v4956 = vmul.f32 %v4914, %v4932
      %v4957 = vmul.f32 %v4915, %v4933
      %v4958 = vmul.f32 %v4916, %v4934
      %v4959 = vmul.f32 %v4917, %v4931
      %v4960 = vmul.f32 %v4918, %v4932
      %v4961 = vmul.f32 %v4919, %v4933
      %v4962 = vmul.f32 %v4920, %v4934
      %v4963 = vmul.f32 %v4921, %v4931
      %v4964 = vmul.f32 %v4922, %v4932
      %v4965 = vmul.f32 %v4923, %v4933
      %v4966 = vmul.f32 %v4924, %v4934
      %v4967 = vmul.f32 %v4925, %v4931
      %v4968 = vmul.f32 %v4926, %v4932
      %v4969 = vmul.f32 %v4927, %v4933
      %v4970 = vmul.f32 %v4928, %v4934
      %s4971 = scalar_lea.vmem %s10, 1
      %v4972 = vld [vmem:[%s4971] ss:$2 sm:$0xf]
      %v4974 = vperm.slane %v4972, 0
      %v4975 = vperm.slane %v4972, 1
      %v4976 = vperm.slane %v4972, 2
      %v4977 = vperm.slane %v4972, 3
      %v4982 = vadd.f32 %v4939, %v4974
      %v4983 = vadd.f32 %v4940, %v4975
      %v4984 = vadd.f32 %v4941, %v4976
      %v4985 = vadd.f32 %v4942, %v4977
      %v4986 = vadd.f32 %v4943, %v4974
      %v4987 = vadd.f32 %v4944, %v4975
      %v4988 = vadd.f32 %v4945, %v4976
      %v4989 = vadd.f32 %v4946, %v4977
      %v4990 = vadd.f32 %v4947, %v4974
      %v4991 = vadd.f32 %v4948, %v4975
      %v4992 = vadd.f32 %v4949, %v4976
      %v4993 = vadd.f32 %v4950, %v4977
      %v4994 = vadd.f32 %v4951, %v4974
      %v4995 = vadd.f32 %v4952, %v4975
      %v4996 = vadd.f32 %v4953, %v4976
      %v4997 = vadd.f32 %v4954, %v4977
      %v4998 = vadd.f32 %v4955, %v4974
      %v4999 = vadd.f32 %v4956, %v4975
      %v5000 = vadd.f32 %v4957, %v4976
      %v5001 = vadd.f32 %v4958, %v4977
      %v5002 = vadd.f32 %v4959, %v4974
      %v5003 = vadd.f32 %v4960, %v4975
      %v5004 = vadd.f32 %v4961, %v4976
      %v5005 = vadd.f32 %v4962, %v4977
      %v5006 = vadd.f32 %v4963, %v4974
      %v5007 = vadd.f32 %v4964, %v4975
      %v5008 = vadd.f32 %v4965, %v4976
      %v5009 = vadd.f32 %v4966, %v4977
      %v5010 = vadd.f32 %v4967, %v4974
      %v5011 = vadd.f32 %v4968, %v4975
      %v5012 = vadd.f32 %v4969, %v4976
      %v5013 = vadd.f32 %v4970, %v4977
      %v5014 = vmax.f32 %v4982, 0.0
      %v5015 = vmax.f32 %v4983, 0.0
      %v5016 = vmax.f32 %v4984, 0.0
      %v5017 = vmax.f32 %v4985, 0.0
      %v5018 = vmax.f32 %v4986, 0.0
      %v5019 = vmax.f32 %v4987, 0.0
      %v5020 = vmax.f32 %v4988, 0.0
      %v5021 = vmax.f32 %v4989, 0.0
      %v5022 = vmax.f32 %v4990, 0.0
      %v5023 = vmax.f32 %v4991, 0.0
      %v5024 = vmax.f32 %v4992, 0.0
      %v5025 = vmax.f32 %v4993, 0.0
      %v5026 = vmax.f32 %v4994, 0.0
      %v5027 = vmax.f32 %v4995, 0.0
      %v5028 = vmax.f32 %v4996, 0.0
      %v5029 = vmax.f32 %v4997, 0.0
      %v5030 = vmax.f32 %v4998, 0.0
      %v5031 = vmax.f32 %v4999, 0.0
      %v5032 = vmax.f32 %v5000, 0.0
      %v5033 = vmax.f32 %v5001, 0.0
      %v5034 = vmax.f32 %v5002, 0.0
      %v5035 = vmax.f32 %v5003, 0.0
      %v5036 = vmax.f32 %v5004, 0.0
      %v5037 = vmax.f32 %v5005, 0.0
      %v5038 = vmax.f32 %v5006, 0.0
      %v5039 = vmax.f32 %v5007, 0.0
      %v5040 = vmax.f32 %v5008, 0.0
      %v5041 = vmax.f32 %v5009, 0.0
      %v5042 = vmax.f32 %v5010, 0.0
      %v5043 = vmax.f32 %v5011, 0.0
      %v5044 = vmax.f32 %v5012, 0.0
      %v5045 = vmax.f32 %v5013, 0.0
      %vm5046 = vcmp.ge.s32.totalorder %v1368, 0
      %vm5047 = vcmp.ge.s32.totalorder %v1369, 0
      %vm5048 = vcmp.ge.s32.totalorder %v1370, 0
      %vm5049 = vcmp.ge.s32.totalorder %v1371, 0
      %vm5050 = vcmp.ge.s32.totalorder %v1372, 0
      %vm5051 = vcmp.ge.s32.totalorder %v1373, 0
      %vm5052 = vcmp.ge.s32.totalorder %v1374, 0
      %vm5053 = vcmp.ge.s32.totalorder %v1375, 0
      %vm5054 = vcmp.lt.s32.totalorder %v1368, 14
      %vm5055 = vcmp.lt.s32.totalorder %v1369, 14
      %vm5056 = vcmp.lt.s32.totalorder %v1370, 14
      %vm5057 = vcmp.lt.s32.totalorder %v1371, 14
      %vm5058 = vcmp.lt.s32.totalorder %v1372, 14
      %vm5059 = vcmp.lt.s32.totalorder %v1373, 14
      %vm5060 = vcmp.lt.s32.totalorder %v1374, 14
      %vm5061 = vcmp.lt.s32.totalorder %v1375, 14
      %vm5062 = vmand %vm5046, %vm5054
      %vm5063 = vmand %vm5047, %vm5055
      %vm5064 = vmand %vm5048, %vm5056
      %vm5065 = vmand %vm5049, %vm5057
      %vm5066 = vmand %vm5050, %vm5058
      %vm5067 = vmand %vm5051, %vm5059
      %vm5068 = vmand %vm5052, %vm5060
      %vm5069 = vmand %vm5053, %vm5061
      %v5070 = vsel %vm5062, %v5014, -inf
      %v5071 = vsel %vm5062, %v5015, -inf
      %v5072 = vsel %vm5062, %v5016, -inf
      %v5073 = vsel %vm5062, %v5017, -inf
      %v5074 = vsel %vm5063, %v5018, -inf
      %v5075 = vsel %vm5063, %v5019, -inf
      %v5076 = vsel %vm5063, %v5020, -inf
      %v5077 = vsel %vm5063, %v5021, -inf
      %v5078 = vsel %vm5064, %v5022, -inf
      %v5079 = vsel %vm5064, %v5023, -inf
      %v5080 = vsel %vm5064, %v5024, -inf
      %v5081 = vsel %vm5064, %v5025, -inf
      %v5082 = vsel %vm5065, %v5026, -inf
      %v5083 = vsel %vm5065, %v5027, -inf
      %v5084 = vsel %vm5065, %v5028, -inf
      %v5085 = vsel %vm5065, %v5029, -inf
      %v5086 = vsel %vm5066, %v5030, -inf
      %v5087 = vsel %vm5066, %v5031, -inf
      %v5088 = vsel %vm5066, %v5032, -inf
      %v5089 = vsel %vm5066, %v5033, -inf
      %v5090 = vsel %vm5067, %v5034, -inf
      %v5091 = vsel %vm5067, %v5035, -inf
      %v5092 = vsel %vm5067, %v5036, -inf
      %v5093 = vsel %vm5067, %v5037, -inf
      %v5094 = vsel %vm5068, %v5038, -inf
      %v5095 = vsel %vm5068, %v5039, -inf
      %v5096 = vsel %vm5068, %v5040, -inf
      %v5097 = vsel %vm5068, %v5041, -inf
      %v5098 = vsel %vm5069, %v5042, -inf
      %v5099 = vsel %vm5069, %v5043, -inf
      %v5100 = vsel %vm5069, %v5044, -inf
      %v5101 = vsel %vm5069, %v5045, -inf
      %v5102 = vmax.f32 %v5070, %v5074
      %v5103 = vmax.f32 %v5102, %v5078
      %v5104 = vmax.f32 %v5103, %v5082
      %v5105 = vmax.f32 %v5104, %v5086
      %v5106 = vmax.f32 %v5105, %v5090
      %v5107 = vmax.f32 %v5106, %v5094
      %v5108 = vmax.f32 %v5107, %v5098
      %v5109 = vrot.slane %v5108, 4
      %v5110 = vmax.f32 %v5108, %v5109
      %v5111 = vrot.slane %v5110, 2
      %v5112 = vmax.f32 %v5110, %v5111
      %v5113 = vrot.slane %v5112, 1
      %v5114 = vmax.f32 %v5112, %v5113
      %v5115 = vmax.f32 %v5071, %v5075
      %v5116 = vmax.f32 %v5115, %v5079
      %v5117 = vmax.f32 %v5116, %v5083
      %v5118 = vmax.f32 %v5117, %v5087
      %v5119 = vmax.f32 %v5118, %v5091
      %v5120 = vmax.f32 %v5119, %v5095
      %v5121 = vmax.f32 %v5120, %v5099
      %v5122 = vrot.slane %v5121, 4
      %v5123 = vmax.f32 %v5121, %v5122
      %v5124 = vrot.slane %v5123, 2
      %v5125 = vmax.f32 %v5123, %v5124
      %v5126 = vrot.slane %v5125, 1
      %v5127 = vmax.f32 %v5125, %v5126
      %v5128 = vmax.f32 %v5072, %v5076
      %v5129 = vmax.f32 %v5128, %v5080
      %v5130 = vmax.f32 %v5129, %v5084
      %v5131 = vmax.f32 %v5130, %v5088
      %v5132 = vmax.f32 %v5131, %v5092
      %v5133 = vmax.f32 %v5132, %v5096
      %v5134 = vmax.f32 %v5133, %v5100
      %v5135 = vrot.slane %v5134, 4
      %v5136 = vmax.f32 %v5134, %v5135
      %v5137 = vrot.slane %v5136, 2
      %v5138 = vmax.f32 %v5136, %v5137
      %v5139 = vrot.slane %v5138, 1
      %v5140 = vmax.f32 %v5138, %v5139
      %v5141 = vmax.f32 %v5073, %v5077
      %v5142 = vmax.f32 %v5141, %v5081
      %v5143 = vmax.f32 %v5142, %v5085
      %v5144 = vmax.f32 %v5143, %v5089
      %v5145 = vmax.f32 %v5144, %v5093
      %v5146 = vmax.f32 %v5145, %v5097
      %v5147 = vmax.f32 %v5146, %v5101
      %v5148 = vrot.slane %v5147, 4
      %v5149 = vmax.f32 %v5147, %v5148
      %v5150 = vrot.slane %v5149, 2
      %v5151 = vmax.f32 %v5149, %v5150
      %v5152 = vrot.slane %v5151, 1
      %v5153 = vmax.f32 %v5151, %v5152
      %vm5154 = vcmp.ge.s32.totalorder %v1368, 13
      %vm5155 = vcmp.ge.s32.totalorder %v1369, 13
      %vm5156 = vcmp.ge.s32.totalorder %v1370, 13
      %vm5157 = vcmp.ge.s32.totalorder %v1371, 13
      %vm5158 = vcmp.ge.s32.totalorder %v1372, 13
      %vm5159 = vcmp.ge.s32.totalorder %v1373, 13
      %vm5160 = vcmp.ge.s32.totalorder %v1374, 13
      %vm5161 = vcmp.ge.s32.totalorder %v1375, 13
      %vm5162 = vcmp.lt.s32.totalorder %v1368, 27
      %vm5163 = vcmp.lt.s32.totalorder %v1369, 27
      %vm5164 = vcmp.lt.s32.totalorder %v1370, 27
      %vm5165 = vcmp.lt.s32.totalorder %v1371, 27
      %vm5166 = vcmp.lt.s32.totalorder %v1372, 27
      %vm5167 = vcmp.lt.s32.totalorder %v1373, 27
      %vm5168 = vcmp.lt.s32.totalorder %v1374, 27
      %vm5169 = vcmp.lt.s32.totalorder %v1375, 27
      %vm5170 = vmand %vm5154, %vm5162
      %vm5171 = vmand %vm5155, %vm5163
      %vm5172 = vmand %vm5156, %vm5164
      %vm5173 = vmand %vm5157, %vm5165
      %vm5174 = vmand %vm5158, %vm5166
      %vm5175 = vmand %vm5159, %vm5167
      %vm5176 = vmand %vm5160, %vm5168
      %vm5177 = vmand %vm5161, %vm5169
      %v5178 = vsel %vm5170, %v5014, -inf
      %v5179 = vsel %vm5170, %v5015, -inf
      %v5180 = vsel %vm5170, %v5016, -inf
      %v5181 = vsel %vm5170, %v5017, -inf
      %v5182 = vsel %vm5171, %v5018, -inf
      %v5183 = vsel %vm5171, %v5019, -inf
      %v5184 = vsel %vm5171, %v5020, -inf
      %v5185 = vsel %vm5171, %v5021, -inf
      %v5186 = vsel %vm5172, %v5022, -inf
      %v5187 = vsel %vm5172, %v5023, -inf
      %v5188 = vsel %vm5172, %v5024, -inf
      %v5189 = vsel %vm5172, %v5025, -inf
      %v5190 = vsel %vm5173, %v5026, -inf
      %v5191 = vsel %vm5173, %v5027, -inf
      %v5192 = vsel %vm5173, %v5028, -inf
      %v5193 = vsel %vm5173, %v5029, -inf
      %v5194 = vsel %vm5174, %v5030, -inf
      %v5195 = vsel %vm5174, %v5031, -inf
      %v5196 = vsel %vm5174, %v5032, -inf
      %v5197 = vsel %vm5174, %v5033, -inf
      %v5198 = vsel %vm5175, %v5034, -inf
      %v5199 = vsel %vm5175, %v5035, -inf
      %v5200 = vsel %vm5175, %v5036, -inf
      %v5201 = vsel %vm5175, %v5037, -inf
      %v5202 = vsel %vm5176, %v5038, -inf
      %v5203 = vsel %vm5176, %v5039, -inf
      %v5204 = vsel %vm5176, %v5040, -inf
      %v5205 = vsel %vm5176, %v5041, -inf
      %v5206 = vsel %vm5177, %v5042, -inf
      %v5207 = vsel %vm5177, %v5043, -inf
      %v5208 = vsel %vm5177, %v5044, -inf
      %v5209 = vsel %vm5177, %v5045, -inf
      %v5210 = vmax.f32 %v5178, %v5182
      %v5211 = vmax.f32 %v5210, %v5186
      %v5212 = vmax.f32 %v5211, %v5190
      %v5213 = vmax.f32 %v5212, %v5194
      %v5214 = vmax.f32 %v5213, %v5198
      %v5215 = vmax.f32 %v5214, %v5202
      %v5216 = vmax.f32 %v5215, %v5206
      %v5217 = vrot.slane %v5216, 4
      %v5218 = vmax.f32 %v5216, %v5217
      %v5219 = vrot.slane %v5218, 2
      %v5220 = vmax.f32 %v5218, %v5219
      %v5221 = vrot.slane %v5220, 1
      %v5222 = vmax.f32 %v5220, %v5221
      %v5223 = vmax.f32 %v5179, %v5183
      %v5224 = vmax.f32 %v5223, %v5187
      %v5225 = vmax.f32 %v5224, %v5191
      %v5226 = vmax.f32 %v5225, %v5195
      %v5227 = vmax.f32 %v5226, %v5199
      %v5228 = vmax.f32 %v5227, %v5203
      %v5229 = vmax.f32 %v5228, %v5207
      %v5230 = vrot.slane %v5229, 4
      %v5231 = vmax.f32 %v5229, %v5230
      %v5232 = vrot.slane %v5231, 2
      %v5233 = vmax.f32 %v5231, %v5232
      %v5234 = vrot.slane %v5233, 1
      %v5235 = vmax.f32 %v5233, %v5234
      %v5236 = vmax.f32 %v5180, %v5184
      %v5237 = vmax.f32 %v5236, %v5188
      %v5238 = vmax.f32 %v5237, %v5192
      %v5239 = vmax.f32 %v5238, %v5196
      %v5240 = vmax.f32 %v5239, %v5200
      %v5241 = vmax.f32 %v5240, %v5204
      %v5242 = vmax.f32 %v5241, %v5208
      %v5243 = vrot.slane %v5242, 4
      %v5244 = vmax.f32 %v5242, %v5243
      %v5245 = vrot.slane %v5244, 2
      %v5246 = vmax.f32 %v5244, %v5245
      %v5247 = vrot.slane %v5246, 1
      %v5248 = vmax.f32 %v5246, %v5247
      %v5249 = vmax.f32 %v5181, %v5185
      %v5250 = vmax.f32 %v5249, %v5189
      %v5251 = vmax.f32 %v5250, %v5193
      %v5252 = vmax.f32 %v5251, %v5197
      %v5253 = vmax.f32 %v5252, %v5201
      %v5254 = vmax.f32 %v5253, %v5205
      %v5255 = vmax.f32 %v5254, %v5209
      %v5256 = vrot.slane %v5255, 4
      %v5257 = vmax.f32 %v5255, %v5256
      %v5258 = vrot.slane %v5257, 2
      %v5259 = vmax.f32 %v5257, %v5258
      %v5260 = vrot.slane %v5259, 1
      %v5261 = vmax.f32 %v5259, %v5260
      %vm5262 = vcmp.ge.s32.totalorder %v1368, 26
      %vm5263 = vcmp.ge.s32.totalorder %v1369, 26
      %vm5264 = vcmp.ge.s32.totalorder %v1370, 26
      %vm5265 = vcmp.ge.s32.totalorder %v1371, 26
      %vm5266 = vcmp.ge.s32.totalorder %v1372, 26
      %vm5267 = vcmp.ge.s32.totalorder %v1373, 26
      %vm5268 = vcmp.ge.s32.totalorder %v1374, 26
      %vm5269 = vcmp.ge.s32.totalorder %v1375, 26
      %vm5270 = vcmp.lt.s32.totalorder %v1368, 40
      %vm5271 = vcmp.lt.s32.totalorder %v1369, 40
      %vm5272 = vcmp.lt.s32.totalorder %v1370, 40
      %vm5273 = vcmp.lt.s32.totalorder %v1371, 40
      %vm5274 = vcmp.lt.s32.totalorder %v1372, 40
      %vm5275 = vcmp.lt.s32.totalorder %v1373, 40
      %vm5276 = vcmp.lt.s32.totalorder %v1374, 40
      %vm5277 = vcmp.lt.s32.totalorder %v1375, 40
      %vm5278 = vmand %vm5262, %vm5270
      %vm5279 = vmand %vm5263, %vm5271
      %vm5280 = vmand %vm5264, %vm5272
      %vm5281 = vmand %vm5265, %vm5273
      %vm5282 = vmand %vm5266, %vm5274
      %vm5283 = vmand %vm5267, %vm5275
      %vm5284 = vmand %vm5268, %vm5276
      %vm5285 = vmand %vm5269, %vm5277
      %v5286 = vsel %vm5278, %v5014, -inf
      %v5287 = vsel %vm5278, %v5015, -inf
      %v5288 = vsel %vm5278, %v5016, -inf
      %v5289 = vsel %vm5278, %v5017, -inf
      %v5290 = vsel %vm5279, %v5018, -inf
      %v5291 = vsel %vm5279, %v5019, -inf
      %v5292 = vsel %vm5279, %v5020, -inf
      %v5293 = vsel %vm5279, %v5021, -inf
      %v5294 = vsel %vm5280, %v5022, -inf
      %v5295 = vsel %vm5280, %v5023, -inf
      %v5296 = vsel %vm5280, %v5024, -inf
      %v5297 = vsel %vm5280, %v5025, -inf
      %v5298 = vsel %vm5281, %v5026, -inf
      %v5299 = vsel %vm5281, %v5027, -inf
      %v5300 = vsel %vm5281, %v5028, -inf
      %v5301 = vsel %vm5281, %v5029, -inf
      %v5302 = vsel %vm5282, %v5030, -inf
      %v5303 = vsel %vm5282, %v5031, -inf
      %v5304 = vsel %vm5282, %v5032, -inf
      %v5305 = vsel %vm5282, %v5033, -inf
      %v5306 = vsel %vm5283, %v5034, -inf
      %v5307 = vsel %vm5283, %v5035, -inf
      %v5308 = vsel %vm5283, %v5036, -inf
      %v5309 = vsel %vm5283, %v5037, -inf
      %v5310 = vsel %vm5284, %v5038, -inf
      %v5311 = vsel %vm5284, %v5039, -inf
      %v5312 = vsel %vm5284, %v5040, -inf
      %v5313 = vsel %vm5284, %v5041, -inf
      %v5314 = vsel %vm5285, %v5042, -inf
      %v5315 = vsel %vm5285, %v5043, -inf
      %v5316 = vsel %vm5285, %v5044, -inf
      %v5317 = vsel %vm5285, %v5045, -inf
      %v5318 = vmax.f32 %v5286, %v5290
      %v5319 = vmax.f32 %v5318, %v5294
      %v5320 = vmax.f32 %v5319, %v5298
      %v5321 = vmax.f32 %v5320, %v5302
      %v5322 = vmax.f32 %v5321, %v5306
      %v5323 = vmax.f32 %v5322, %v5310
      %v5324 = vmax.f32 %v5323, %v5314
      %v5325 = vrot.slane %v5324, 4
      %v5326 = vmax.f32 %v5324, %v5325
      %v5327 = vrot.slane %v5326, 2
      %v5328 = vmax.f32 %v5326, %v5327
      %v5329 = vrot.slane %v5328, 1
      %v5330 = vmax.f32 %v5328, %v5329
      %v5331 = vmax.f32 %v5287, %v5291
      %v5332 = vmax.f32 %v5331, %v5295
      %v5333 = vmax.f32 %v5332, %v5299
      %v5334 = vmax.f32 %v5333, %v5303
      %v5335 = vmax.f32 %v5334, %v5307
      %v5336 = vmax.f32 %v5335, %v5311
      %v5337 = vmax.f32 %v5336, %v5315
      %v5338 = vrot.slane %v5337, 4
      %v5339 = vmax.f32 %v5337, %v5338
      %v5340 = vrot.slane %v5339, 2
      %v5341 = vmax.f32 %v5339, %v5340
      %v5342 = vrot.slane %v5341, 1
      %v5343 = vmax.f32 %v5341, %v5342
      %v5344 = vmax.f32 %v5288, %v5292
      %v5345 = vmax.f32 %v5344, %v5296
      %v5346 = vmax.f32 %v5345, %v5300
      %v5347 = vmax.f32 %v5346, %v5304
      %v5348 = vmax.f32 %v5347, %v5308
      %v5349 = vmax.f32 %v5348, %v5312
      %v5350 = vmax.f32 %v5349, %v5316
      %v5351 = vrot.slane %v5350, 4
      %v5352 = vmax.f32 %v5350, %v5351
      %v5353 = vrot.slane %v5352, 2
      %v5354 = vmax.f32 %v5352, %v5353
      %v5355 = vrot.slane %v5354, 1
      %v5356 = vmax.f32 %v5354, %v5355
      %v5357 = vmax.f32 %v5289, %v5293
      %v5358 = vmax.f32 %v5357, %v5297
      %v5359 = vmax.f32 %v5358, %v5301
      %v5360 = vmax.f32 %v5359, %v5305
      %v5361 = vmax.f32 %v5360, %v5309
      %v5362 = vmax.f32 %v5361, %v5313
      %v5363 = vmax.f32 %v5362, %v5317
      %v5364 = vrot.slane %v5363, 4
      %v5365 = vmax.f32 %v5363, %v5364
      %v5366 = vrot.slane %v5365, 2
      %v5367 = vmax.f32 %v5365, %v5366
      %v5368 = vrot.slane %v5367, 1
      %v5369 = vmax.f32 %v5367, %v5368
      %vm5370 = vcmp.ge.s32.totalorder %v1368, 39
      %vm5371 = vcmp.ge.s32.totalorder %v1369, 39
      %vm5372 = vcmp.ge.s32.totalorder %v1370, 39
      %vm5373 = vcmp.ge.s32.totalorder %v1371, 39
      %vm5374 = vcmp.ge.s32.totalorder %v1372, 39
      %vm5375 = vcmp.ge.s32.totalorder %v1373, 39
      %vm5376 = vcmp.ge.s32.totalorder %v1374, 39
      %vm5377 = vcmp.ge.s32.totalorder %v1375, 39
      %vm5378 = vcmp.lt.s32.totalorder %v1368, 53
      %vm5379 = vcmp.lt.s32.totalorder %v1369, 53
      %vm5380 = vcmp.lt.s32.totalorder %v1370, 53
      %vm5381 = vcmp.lt.s32.totalorder %v1371, 53
      %vm5382 = vcmp.lt.s32.totalorder %v1372, 53
      %vm5383 = vcmp.lt.s32.totalorder %v1373, 53
      %vm5384 = vcmp.lt.s32.totalorder %v1374, 53
      %vm5385 = vcmp.lt.s32.totalorder %v1375, 53
      %vm5386 = vmand %vm5370, %vm5378
      %vm5387 = vmand %vm5371, %vm5379
      %vm5388 = vmand %vm5372, %vm5380
      %vm5389 = vmand %vm5373, %vm5381
      %vm5390 = vmand %vm5374, %vm5382
      %vm5391 = vmand %vm5375, %vm5383
      %vm5392 = vmand %vm5376, %vm5384
      %vm5393 = vmand %vm5377, %vm5385
      %v5394 = vsel %vm5386, %v5014, -inf
      %v5395 = vsel %vm5386, %v5015, -inf
      %v5396 = vsel %vm5386, %v5016, -inf
      %v5397 = vsel %vm5386, %v5017, -inf
      %v5398 = vsel %vm5387, %v5018, -inf
      %v5399 = vsel %vm5387, %v5019, -inf
      %v5400 = vsel %vm5387, %v5020, -inf
      %v5401 = vsel %vm5387, %v5021, -inf
      %v5402 = vsel %vm5388, %v5022, -inf
      %v5403 = vsel %vm5388, %v5023, -inf
      %v5404 = vsel %vm5388, %v5024, -inf
      %v5405 = vsel %vm5388, %v5025, -inf
      %v5406 = vsel %vm5389, %v5026, -inf
      %v5407 = vsel %vm5389, %v5027, -inf
      %v5408 = vsel %vm5389, %v5028, -inf
      %v5409 = vsel %vm5389, %v5029, -inf
      %v5410 = vsel %vm5390, %v5030, -inf
      %v5411 = vsel %vm5390, %v5031, -inf
      %v5412 = vsel %vm5390, %v5032, -inf
      %v5413 = vsel %vm5390, %v5033, -inf
      %v5414 = vsel %vm5391, %v5034, -inf
      %v5415 = vsel %vm5391, %v5035, -inf
      %v5416 = vsel %vm5391, %v5036, -inf
      %v5417 = vsel %vm5391, %v5037, -inf
      %v5418 = vsel %vm5392, %v5038, -inf
      %v5419 = vsel %vm5392, %v5039, -inf
      %v5420 = vsel %vm5392, %v5040, -inf
      %v5421 = vsel %vm5392, %v5041, -inf
      %v5422 = vsel %vm5393, %v5042, -inf
      %v5423 = vsel %vm5393, %v5043, -inf
      %v5424 = vsel %vm5393, %v5044, -inf
      %v5425 = vsel %vm5393, %v5045, -inf
      %v5426 = vmax.f32 %v5394, %v5398
      %v5427 = vmax.f32 %v5426, %v5402
      %v5428 = vmax.f32 %v5427, %v5406
      %v5429 = vmax.f32 %v5428, %v5410
      %v5430 = vmax.f32 %v5429, %v5414
      %v5431 = vmax.f32 %v5430, %v5418
      %v5432 = vmax.f32 %v5431, %v5422
      %v5433 = vrot.slane %v5432, 4
      %v5434 = vmax.f32 %v5432, %v5433
      %v5435 = vrot.slane %v5434, 2
      %v5436 = vmax.f32 %v5434, %v5435
      %v5437 = vrot.slane %v5436, 1
      %v5438 = vmax.f32 %v5436, %v5437
      %v5439 = vmax.f32 %v5395, %v5399
      %v5440 = vmax.f32 %v5439, %v5403
      %v5441 = vmax.f32 %v5440, %v5407
      %v5442 = vmax.f32 %v5441, %v5411
      %v5443 = vmax.f32 %v5442, %v5415
      %v5444 = vmax.f32 %v5443, %v5419
      %v5445 = vmax.f32 %v5444, %v5423
      %v5446 = vrot.slane %v5445, 4
      %v5447 = vmax.f32 %v5445, %v5446
      %v5448 = vrot.slane %v5447, 2
      %v5449 = vmax.f32 %v5447, %v5448
      %v5450 = vrot.slane %v5449, 1
      %v5451 = vmax.f32 %v5449, %v5450
      %v5452 = vmax.f32 %v5396, %v5400
      %v5453 = vmax.f32 %v5452, %v5404
      %v5454 = vmax.f32 %v5453, %v5408
      %v5455 = vmax.f32 %v5454, %v5412
      %v5456 = vmax.f32 %v5455, %v5416
      %v5457 = vmax.f32 %v5456, %v5420
      %v5458 = vmax.f32 %v5457, %v5424
      %v5459 = vrot.slane %v5458, 4
      %v5460 = vmax.f32 %v5458, %v5459
      %v5461 = vrot.slane %v5460, 2
      %v5462 = vmax.f32 %v5460, %v5461
      %v5463 = vrot.slane %v5462, 1
      %v5464 = vmax.f32 %v5462, %v5463
      %v5465 = vmax.f32 %v5397, %v5401
      %v5466 = vmax.f32 %v5465, %v5405
      %v5467 = vmax.f32 %v5466, %v5409
      %v5468 = vmax.f32 %v5467, %v5413
      %v5469 = vmax.f32 %v5468, %v5417
      %v5470 = vmax.f32 %v5469, %v5421
      %v5471 = vmax.f32 %v5470, %v5425
      %v5472 = vrot.slane %v5471, 4
      %v5473 = vmax.f32 %v5471, %v5472
      %v5474 = vrot.slane %v5473, 2
      %v5475 = vmax.f32 %v5473, %v5474
      %v5476 = vrot.slane %v5475, 1
      %v5477 = vmax.f32 %v5475, %v5476
      %vm5478 = vcmask 1040384
      %v5479 = vsel %vm5478, %v5114, %v5222
      %v5480 = vsel %vm5478, %v5127, %v5235
      %v5481 = vsel %vm5478, %v5140, %v5248
      %v5482 = vsel %vm5478, %v5153, %v5261
      %v5483 = vsel %vm1182, %v5479, %v5330
      %v5484 = vsel %vm1182, %v5480, %v5343
      %v5485 = vsel %vm1182, %v5481, %v5356
      %v5486 = vsel %vm1182, %v5482, %v5369
      %v5487 = vsel %vm1049, %v5483, %v5438
      %v5488 = vsel %vm1049, %v5484, %v5451
      %v5489 = vsel %vm1049, %v5485, %v5464
      %v5490 = vsel %vm1049, %v5486, %v5477
      %v5495 = vrot.slane %v5488, 4
      %v5496 = vrot.slane %v5490, 4
      %v5497 = vsel %vm916, %v5487, %v5495
      %v5498 = vsel %vm916, %v5489, %v5496
      %5501 = vst [vmem:[%s386] sm:$0xff] %v5497
      %5502 = vst [vmem:[%s386 + $0x8] sm:$0xff] %v5498
      %p5503 = scmp.lt.s32.totalorder %s22, 1
      %s5504 = scalar_select %p5503, %s22, 1
      %s5505 = smul.addr %s5504, 4
      %s5506 = smul.addr %s5505, 4
      %s5507 = scalar_lea.vmem %s11, %s5506
      // Predicated region
      $region65: #{feature_extractor_forward.1} parent=63 // pred_check
        %p5508 = pneg %p276
      $region66: #{feature_extractor_forward.1} parent=63 // pred_check_branch
        %5510 = sbr.rel (%p5508) target = $region68
      $region67: #{feature_extractor_forward.1} parent=63 // pred_region
        _
      $region68: #{feature_extractor_forward.1} parent=63 // pred_fallthru
        _
    $region64: #{feature_extractor_forward.1} parent=5 // pred_fallthru
      _
    %p5511 = scmp.le.s32.totalorder 2, %s17
    // Predicated region
    $region69: #{feature_extractor_forward.1} parent=5 // pred_check
      %p5512 = pneg %p5511
    $region70: #{feature_extractor_forward.1} parent=5 // pred_check_branch
      %5514 = sbr.rel (%p5512) target = $region72
    $region71: #{feature_extractor_forward.1} parent=5 // pred_region
      %s5515 = ssub.s32 %s17, 2
      // Predicated region
      $region73: #{feature_extractor_forward.1} parent=71 // pred_check
        %p5516 = pneg %p282
      $region74: #{feature_extractor_forward.1} parent=71 // pred_check_branch
        %5518 = sbr.rel (%p5516) target = $region76
      $region75: #{feature_extractor_forward.1} parent=71 // pred_region
        %p5519 = scmp.lt.s32.totalorder %s23, 1
        %s5520 = scalar_select %p5519, %s23, 1
        %s5521 = smul.addr %s5520, 4
        %s5522 = smul.addr %s5521, 4
        %s5523 = scalar_lea.vmem %s11, %s5522
      $region76: #{feature_extractor_forward.1} parent=71 // pred_fallthru
        _
    $region72: #{feature_extractor_forward.1} parent=5 // pred_fallthru
      _
  $region6: #{feature_extractor_forward.1} parent=0 // loop_footer
    %s21 = sadd.s32 1, %s17
  $region7: #{feature_extractor_forward.1} parent=0 // loop_footer_branch
    %16 = sbr.rel target = $region3
  $region8: #{feature_extractor_forward.1} parent=0 // loop_exit
    _

</llo_original>
